<compile_context>
chip_gen: v7x
topology: tpu7x:2x2x1
jax: 0.10.0
libtpu: 0.0.40
codegen_flags: <defaults>
</compile_context>

<pallas_src>
import jax
import jax.numpy as jnp
from jax.experimental import pallas as pl
from jax.experimental.pallas import tpu as pltpu


def _banded_weight(w, W, out_padded):
    """w: (3, 3, Ci, Co) HWIO -> (3, (W+2)*Ci, Wout*Co) block-banded matrices.

    Row index    = x_in_block * Ci + ci   (x_in_block in padded coords 0..W+1)
    Column index = x_out_block * Co + co  (padded coords if out_padded else 0..W-1)
    Columns belonging to padded output blocks (x=0, x=W+1) stay all-zero, so the
    conv output's horizontal halo is exactly zero by construction.
    """
    Ci, Co = int(w.shape[2]), int(w.shape[3])
    Wp = W + 2
    Wout = Wp if out_padded else W
    xs = jnp.arange(W)                              # valid output columns
    out_blk = xs + 1 if out_padded else xs          # their block index in layout
    mats = []
    for ky in range(3):
        banded = jnp.zeros((Wp, Wout, Ci, Co), jnp.float32)
        for kx in range(3):
            banded = banded.at[xs + kx, out_blk].set(w[ky, kx])
        mats.append(banded.transpose(0, 2, 1, 3).reshape(Wp * Ci, Wout * Co))
    return jnp.stack(mats).astype(jnp.bfloat16)


def fold_and_pack_params(params, H, W):
    """One-time prep: fold bias+BN (running stats) and build banded bf16 weights."""
    eps = 1e-5
    Cmid = params["w1"].shape[-1]
    Cout = params["w2"].shape[-1]
    Wp = W + 2

    s1 = params["bn1_g"] / jnp.sqrt(params["bn1_v"] + eps)
    t1 = (params["b1"] - params["bn1_m"]) * s1 + params["bn1_b"]
    s2 = params["bn2_g"] / jnp.sqrt(params["bn2_v"] + eps)
    t2 = (params["b2"] - params["bn2_m"]) * s2 + params["bn2_b"]

    # Per-column scale/shift vectors; conv1's padded halo columns get 0 scale
    # AND 0 shift so the intermediate's horizontal halo stays exactly 0.
    zc = jnp.zeros((Cmid,), jnp.float32)
    s1p = jnp.concatenate([zc, jnp.tile(s1, W), zc]).reshape(1, Wp * Cmid)
    t1p = jnp.concatenate([zc, jnp.tile(t1, W), zc]).reshape(1, Wp * Cmid)
    s2p = jnp.tile(s2, W).reshape(1, W * Cout)
    t2p = jnp.tile(t2, W).reshape(1, W * Cout)

    return dict(
        w1b=_banded_weight(params["w1"], W, out_padded=True),    # (3, Wp*Cin, Wp*Cmid)
        w2b=_banded_weight(params["w2"], W, out_padded=False),   # (3, Wp*Cmid, W*Cout)
        s1p=s1p.astype(jnp.float32), t1p=t1p.astype(jnp.float32),
        s2p=s2p.astype(jnp.float32), t2p=t2p.astype(jnp.float32),
    )


def conv_block_nested_forward(x_nchw, packed):
    """x_nchw: (B, Cin, H, W) float32.  Returns (B, Cout, H, W) float32."""
    B, Cin, H, W = x_nchw.shape
    Wp = W + 2
    Cmid = packed["w1b"].shape[2] // Wp
    Cout = packed["w2b"].shape[2] // W

    # NCHW -> padded channels-last rows: (B, H+2, (W+2)*Cin). Lane axis = W*C.
    xp = jnp.transpose(x_nchw, (0, 2, 3, 1))
    xp = jnp.pad(xp, ((0, 0), (1, 1), (1, 1), (0, 0)))
    xp = xp.reshape(B, H + 2, Wp * Cin)

    def kernel(x_ref, w1_ref, s1_ref, t1_ref, w2_ref, s2_ref, t2_ref, o_ref):
        def conv3x3(xpad, w_ref):
            # xpad: (H+2, K) f32 padded slab; w_ref: (3, K, N) bf16 banded taps.
            # Three K-deep matmuls (one per ky), accumulation stays in the MXU/f32.
            acc = jnp.dot(xpad[0:H].astype(jnp.bfloat16), w_ref[0],
                          preferred_element_type=jnp.float32)
            acc = acc + jnp.dot(xpad[1:H + 1].astype(jnp.bfloat16), w_ref[1],
                                preferred_element_type=jnp.float32)
            acc = acc + jnp.dot(xpad[2:H + 2].astype(jnp.bfloat16), w_ref[2],
                                preferred_element_type=jnp.float32)
            return acc

        # conv1 + folded bias/BN + ReLU (halo columns stay exactly 0: zero
        # weight columns, zero scale/shift).
        h1 = conv3x3(x_ref[...], w1_ref)                      # (H, Wp*Cmid)
        h1 = jnp.maximum(h1 * s1_ref[...] + t1_ref[...], 0.0)

        # conv2: intermediate never leaves VMEM; vertical halo via zero rows.
        zrow = jnp.zeros((1, Wp * Cmid), jnp.float32)
        h1p = jnp.concatenate([zrow, h1, zrow], axis=0)       # (H+2, Wp*Cmid)
        h2 = conv3x3(h1p, w2_ref)                             # (H, W*Cout)
        o_ref[...] = jnp.maximum(h2 * s2_ref[...] + t2_ref[...], 0.0
                                 ).astype(o_ref.dtype)

    out = pl.pallas_call(
        kernel,
        out_shape=jax.ShapeDtypeStruct((B, H, W * Cout), jnp.float32),
        grid=(B,),
        in_specs=[
            pl.BlockSpec((None, H + 2, Wp * Cin), lambda b: (b, 0, 0)),
            pl.BlockSpec((3, Wp * Cin, Wp * Cmid), lambda b: (0, 0, 0)),
            pl.BlockSpec((1, Wp * Cmid), lambda b: (0, 0)),
            pl.BlockSpec((1, Wp * Cmid), lambda b: (0, 0)),
            pl.BlockSpec((3, Wp * Cmid, W * Cout), lambda b: (0, 0, 0)),
            pl.BlockSpec((1, W * Cout), lambda b: (0, 0)),
            pl.BlockSpec((1, W * Cout), lambda b: (0, 0)),
        ],
        out_specs=pl.BlockSpec((None, H, W * Cout), lambda b: (b, 0, 0)),
        compiler_params=pltpu.CompilerParams(
            dimension_semantics=("parallel",),
            vmem_limit_bytes=32 * 1024 * 1024),
    )(xp, packed["w1b"], packed["s1p"], packed["t1p"],
      packed["w2b"], packed["s2p"], packed["t2p"])

    return out.reshape(B, H, W, Cout).transpose(0, 3, 1, 2)


def reference_forward(x_nchw, params):
    """Pure-JAX float32 reference (eval-mode BatchNorm)."""
    eps = 1e-5
    x = jnp.transpose(x_nchw, (0, 2, 3, 1))

    def conv(x, w):
        return jax.lax.conv_general_dilated(
            x, w, window_strides=(1, 1), padding="SAME",
            dimension_numbers=("NHWC", "HWIO", "NHWC"))

    y = conv(x, params["w1"]) + params["b1"]
    y = params["bn1_g"] * (y - params["bn1_m"]) / jnp.sqrt(params["bn1_v"] + eps) + params["bn1_b"]
    y = jnp.maximum(y, 0.0)
    y = conv(y, params["w2"]) + params["b2"]
    y = params["bn2_g"] * (y - params["bn2_m"]) / jnp.sqrt(params["bn2_v"] + eps) + params["bn2_b"]
    y = jnp.maximum(y, 0.0)
    return jnp.transpose(y, (0, 3, 1, 2))


if __name__ == "__main__":
    # conv_block_nested(in_ch=4, mid_ch=32, out_ch=32) on a (2, 4, 16, 16) input.
    B, Cin, H, W = 2, 4, 16, 16
    Cmid, Cout = 32, 32

    key = jax.random.PRNGKey(0)
    ks = jax.random.split(key, 13)
    x = jax.random.normal(ks[0], (B, Cin, H, W), jnp.float32)
    params = dict(
        w1=0.05 * jax.random.normal(ks[1], (3, 3, Cin, Cmid), jnp.float32),
        b1=0.05 * jax.random.normal(ks[2], (Cmid,), jnp.float32),
        bn1_g=1.0 + 0.1 * jax.random.normal(ks[3], (Cmid,), jnp.float32),
        bn1_b=0.1 * jax.random.normal(ks[4], (Cmid,), jnp.float32),
        bn1_m=0.1 * jax.random.normal(ks[5], (Cmid,), jnp.float32),
        bn1_v=jnp.abs(1.0 + 0.1 * jax.random.normal(ks[6], (Cmid,), jnp.float32)),
        w2=0.05 * jax.random.normal(ks[7], (3, 3, Cmid, Cout), jnp.float32),
        b2=0.05 * jax.random.normal(ks[8], (Cout,), jnp.float32),
        bn2_g=1.0 + 0.1 * jax.random.normal(ks[9], (Cout,), jnp.float32),
        bn2_b=0.1 * jax.random.normal(ks[10], (Cout,), jnp.float32),
        bn2_m=0.1 * jax.random.normal(ks[11], (Cout,), jnp.float32),
        bn2_v=jnp.abs(1.0 + 0.1 * jax.random.normal(ks[12], (Cout,), jnp.float32)),
    )

    # One-time weight packing (would be cached alongside the module's params).
    packed = fold_and_pack_params(params, H, W)

    fwd = jax.jit(conv_block_nested_forward)
    y = jax.block_until_ready(fwd(x, packed))
    assert y.shape == (B, Cout, H, W), y.shape

    y_ref = jax.block_until_ready(reference_forward(x, params))
    err = float(jnp.max(jnp.abs(y - y_ref)))
    assert err < 5e-2, f"max abs err vs reference: {err}"

    print("KERNEL_OK")
</pallas_src>

<mosaic_0001>
module attributes {stable_mosaic.version = 11 : i64} {
  func.func @kernel(%arg0: i32, %arg1: memref<1x18x72xf32, #tpu.memory_space<vmem>>, %arg2: memref<3x72x576xbf16, #tpu.memory_space<vmem>>, %arg3: memref<1x576xf32, #tpu.memory_space<vmem>>, %arg4: memref<1x576xf32, #tpu.memory_space<vmem>>, %arg5: memref<3x576x512xbf16, #tpu.memory_space<vmem>>, %arg6: memref<1x512xf32, #tpu.memory_space<vmem>>, %arg7: memref<1x512xf32, #tpu.memory_space<vmem>>, %arg8: memref<1x16x512xf32, #tpu.memory_space<vmem>>) attributes {dimension_semantics = [#tpu.dimension_semantics<parallel>], iteration_bounds = array<i64: 2>, scalar_prefetch = 0 : i64, scratch_operands = 0 : i64, tpu.core_type = #tpu.core_type<tc>, window_params = [{transform_indices = @transform_0, window_bounds = array<i64: 1, 18, 72>}, {pipeline_mode = #tpu.pipeline_mode<synchronous>, transform_indices = @transform_1, window_bounds = array<i64: 3, 72, 576>}, {pipeline_mode = #tpu.pipeline_mode<synchronous>, transform_indices = @transform_2, window_bounds = array<i64: 1, 576>}, {pipeline_mode = #tpu.pipeline_mode<synchronous>, transform_indices = @transform_3, window_bounds = array<i64: 1, 576>}, {pipeline_mode = #tpu.pipeline_mode<synchronous>, transform_indices = @transform_4, window_bounds = array<i64: 3, 576, 512>}, {pipeline_mode = #tpu.pipeline_mode<synchronous>, transform_indices = @transform_5, window_bounds = array<i64: 1, 512>}, {pipeline_mode = #tpu.pipeline_mode<synchronous>, transform_indices = @transform_6, window_bounds = array<i64: 1, 512>}, {transform_indices = @transform_7, window_bounds = array<i64: 1, 16, 512>}]} {
    %c0 = arith.constant 0 : index
    %c0_0 = arith.constant 0 : index
    %c0_1 = arith.constant 0 : index
    %0 = vector.load %arg1[%c0, %c0_0, %c0_1] : memref<1x18x72xf32, #tpu.memory_space<vmem>>, vector<1x18x72xf32>
    %1 = vector.shape_cast %0 : vector<1x18x72xf32> to vector<18x72xf32>
    %2 = vector.extract_strided_slice %1 {offsets = [0, 0], sizes = [16, 72], strides = [1, 1]} : vector<18x72xf32> to vector<16x72xf32>
    %3 = arith.truncf %2 : vector<16x72xf32> to vector<16x72xbf16>
    %c0_2 = arith.constant 0 : index
    %c0_3 = arith.constant 0 : index
    %c0_4 = arith.constant 0 : index
    %4 = vector.load %arg2[%c0_2, %c0_3, %c0_4] : memref<3x72x576xbf16, #tpu.memory_space<vmem>>, vector<1x72x576xbf16>
    %5 = vector.shape_cast %4 : vector<1x72x576xbf16> to vector<72x576xbf16>
    %cst = arith.constant dense<0.000000e+00> : vector<16x576xf32>
    %6 = tpu.matmul %3, %5, %cst {dimension_numbers = #tpu.dot_dimension_numbers<[1], [0], [0], [1], [0, 0, 1, 1], [], []>} : vector<16x72xbf16>, vector<72x576xbf16>, vector<16x576xf32> -> vector<16x576xf32>
    %7 = vector.extract_strided_slice %1 {offsets = [1, 0], sizes = [16, 72], strides = [1, 1]} : vector<18x72xf32> to vector<16x72xf32>
    %8 = arith.truncf %7 : vector<16x72xf32> to vector<16x72xbf16>
    %c1 = arith.constant 1 : index
    %c0_5 = arith.constant 0 : index
    %c0_6 = arith.constant 0 : index
    %9 = vector.load %arg2[%c1, %c0_5, %c0_6] : memref<3x72x576xbf16, #tpu.memory_space<vmem>>, vector<1x72x576xbf16>
    %10 = vector.shape_cast %9 : vector<1x72x576xbf16> to vector<72x576xbf16>
    %cst_7 = arith.constant dense<0.000000e+00> : vector<16x576xf32>
    %11 = tpu.matmul %8, %10, %cst_7 {dimension_numbers = #tpu.dot_dimension_numbers<[1], [0], [0], [1], [0, 0, 1, 1], [], []>} : vector<16x72xbf16>, vector<72x576xbf16>, vector<16x576xf32> -> vector<16x576xf32>
    %12 = arith.addf %6, %11 : vector<16x576xf32>
    %13 = vector.extract_strided_slice %1 {offsets = [2, 0], sizes = [16, 72], strides = [1, 1]} : vector<18x72xf32> to vector<16x72xf32>
    %14 = arith.truncf %13 : vector<16x72xf32> to vector<16x72xbf16>
    %c2 = arith.constant 2 : index
    %c0_8 = arith.constant 0 : index
    %c0_9 = arith.constant 0 : index
    %15 = vector.load %arg2[%c2, %c0_8, %c0_9] : memref<3x72x576xbf16, #tpu.memory_space<vmem>>, vector<1x72x576xbf16>
    %16 = vector.shape_cast %15 : vector<1x72x576xbf16> to vector<72x576xbf16>
    %cst_10 = arith.constant dense<0.000000e+00> : vector<16x576xf32>
    %17 = tpu.matmul %14, %16, %cst_10 {dimension_numbers = #tpu.dot_dimension_numbers<[1], [0], [0], [1], [0, 0, 1, 1], [], []>} : vector<16x72xbf16>, vector<72x576xbf16>, vector<16x576xf32> -> vector<16x576xf32>
    %18 = arith.addf %12, %17 : vector<16x576xf32>
    %c0_11 = arith.constant 0 : index
    %c0_12 = arith.constant 0 : index
    %19 = vector.load %arg3[%c0_11, %c0_12] : memref<1x576xf32, #tpu.memory_space<vmem>>, vector<1x576xf32>
    %20 = vector.broadcast %19 : vector<1x576xf32> to vector<16x576xf32>
    %21 = arith.mulf %18, %20 : vector<16x576xf32>
    %c0_13 = arith.constant 0 : index
    %c0_14 = arith.constant 0 : index
    %22 = vector.load %arg4[%c0_13, %c0_14] : memref<1x576xf32, #tpu.memory_space<vmem>>, vector<1x576xf32>
    %23 = vector.broadcast %22 : vector<1x576xf32> to vector<16x576xf32>
    %24 = arith.addf %21, %23 : vector<16x576xf32>
    %cst_15 = arith.constant 0.000000e+00 : f32
    %25 = vector.broadcast %cst_15 : f32 to vector<16x576xf32>
    %26 = arith.maximumf %24, %25 : vector<16x576xf32>
    %cst_16 = arith.constant 0.000000e+00 : f32
    %27 = vector.broadcast %cst_16 : f32 to vector<1x576xf32>
    %28 = tpu.concatenate %27, %26, %27 in 0 : vector<1x576xf32>, vector<16x576xf32>, vector<1x576xf32> -> vector<18x576xf32>
    %29 = vector.extract_strided_slice %28 {offsets = [0, 0], sizes = [16, 576], strides = [1, 1]} : vector<18x576xf32> to vector<16x576xf32>
    %30 = arith.truncf %29 : vector<16x576xf32> to vector<16x576xbf16>
    %c0_17 = arith.constant 0 : index
    %c0_18 = arith.constant 0 : index
    %c0_19 = arith.constant 0 : index
    %31 = vector.load %arg5[%c0_17, %c0_18, %c0_19] : memref<3x576x512xbf16, #tpu.memory_space<vmem>>, vector<1x576x512xbf16>
    %32 = vector.shape_cast %31 : vector<1x576x512xbf16> to vector<576x512xbf16>
    %cst_20 = arith.constant dense<0.000000e+00> : vector<16x512xf32>
    %33 = tpu.matmul %30, %32, %cst_20 {dimension_numbers = #tpu.dot_dimension_numbers<[1], [0], [0], [1], [0, 0, 1, 1], [], []>} : vector<16x576xbf16>, vector<576x512xbf16>, vector<16x512xf32> -> vector<16x512xf32>
    %34 = vector.extract_strided_slice %28 {offsets = [1, 0], sizes = [16, 576], strides = [1, 1]} : vector<18x576xf32> to vector<16x576xf32>
    %35 = arith.truncf %34 : vector<16x576xf32> to vector<16x576xbf16>
    %c1_21 = arith.constant 1 : index
    %c0_22 = arith.constant 0 : index
    %c0_23 = arith.constant 0 : index
    %36 = vector.load %arg5[%c1_21, %c0_22, %c0_23] : memref<3x576x512xbf16, #tpu.memory_space<vmem>>, vector<1x576x512xbf16>
    %37 = vector.shape_cast %36 : vector<1x576x512xbf16> to vector<576x512xbf16>
    %cst_24 = arith.constant dense<0.000000e+00> : vector<16x512xf32>
    %38 = tpu.matmul %35, %37, %cst_24 {dimension_numbers = #tpu.dot_dimension_numbers<[1], [0], [0], [1], [0, 0, 1, 1], [], []>} : vector<16x576xbf16>, vector<576x512xbf16>, vector<16x512xf32> -> vector<16x512xf32>
    %39 = arith.addf %33, %38 : vector<16x512xf32>
    %40 = vector.extract_strided_slice %28 {offsets = [2, 0], sizes = [16, 576], strides = [1, 1]} : vector<18x576xf32> to vector<16x576xf32>
    %41 = arith.truncf %40 : vector<16x576xf32> to vector<16x576xbf16>
    %c2_25 = arith.constant 2 : index
    %c0_26 = arith.constant 0 : index
    %c0_27 = arith.constant 0 : index
    %42 = vector.load %arg5[%c2_25, %c0_26, %c0_27] : memref<3x576x512xbf16, #tpu.memory_space<vmem>>, vector<1x576x512xbf16>
    %43 = vector.shape_cast %42 : vector<1x576x512xbf16> to vector<576x512xbf16>
    %cst_28 = arith.constant dense<0.000000e+00> : vector<16x512xf32>
    %44 = tpu.matmul %41, %43, %cst_28 {dimension_numbers = #tpu.dot_dimension_numbers<[1], [0], [0], [1], [0, 0, 1, 1], [], []>} : vector<16x576xbf16>, vector<576x512xbf16>, vector<16x512xf32> -> vector<16x512xf32>
    %45 = arith.addf %39, %44 : vector<16x512xf32>
    %c0_29 = arith.constant 0 : index
    %c0_30 = arith.constant 0 : index
    %46 = vector.load %arg6[%c0_29, %c0_30] : memref<1x512xf32, #tpu.memory_space<vmem>>, vector<1x512xf32>
    %47 = vector.broadcast %46 : vector<1x512xf32> to vector<16x512xf32>
    %48 = arith.mulf %45, %47 : vector<16x512xf32>
    %c0_31 = arith.constant 0 : index
    %c0_32 = arith.constant 0 : index
    %49 = vector.load %arg7[%c0_31, %c0_32] : memref<1x512xf32, #tpu.memory_space<vmem>>, vector<1x512xf32>
    %50 = vector.broadcast %49 : vector<1x512xf32> to vector<16x512xf32>
    %51 = arith.addf %48, %50 : vector<16x512xf32>
    %cst_33 = arith.constant 0.000000e+00 : f32
    %52 = vector.broadcast %cst_33 : f32 to vector<16x512xf32>
    %53 = arith.maximumf %51, %52 : vector<16x512xf32>
    %c0_34 = arith.constant 0 : index
    %c0_35 = arith.constant 0 : index
    %c0_36 = arith.constant 0 : index
    %54 = vector.load %arg8[%c0_34, %c0_35, %c0_36] : memref<1x16x512xf32, #tpu.memory_space<vmem>>, vector<1x16x512xf32>
    %55 = vector.shape_cast %54 : vector<1x16x512xf32> to vector<16x512xf32>
    %56 = vector.shape_cast %53 : vector<16x512xf32> to vector<1x16x512xf32>
    tpu.vector_store %arg8[%c0_34, %c0_35, %c0_36], %56 {strides = array<i32>} : memref<1x16x512xf32, #tpu.memory_space<vmem>>, vector<1x16x512xf32>,
    return
  }
  func.func @transform_0(%arg0: i32) -> (i32, i32, i32) {
    %c0_i32 = arith.constant 0 : i32
    %c0_i32_0 = arith.constant 0 : i32
    %c0_i32_1 = arith.constant 0 : i32
    return %arg0, %c0_i32, %c0_i32_0 : i32, i32, i32
  }
  func.func @transform_1(%arg0: i32) -> (i32, i32, i32) {
    %c0_i32 = arith.constant 0 : i32
    %c0_i32_0 = arith.constant 0 : i32
    %c0_i32_1 = arith.constant 0 : i32
    %c0_i32_2 = arith.constant 0 : i32
    return %c0_i32, %c0_i32_0, %c0_i32_1 : i32, i32, i32
  }
  func.func @transform_2(%arg0: i32) -> (i32, i32) {
    %c0_i32 = arith.constant 0 : i32
    %c0_i32_0 = arith.constant 0 : i32
    %c0_i32_1 = arith.constant 0 : i32
    return %c0_i32, %c0_i32_0 : i32, i32
  }
  func.func @transform_3(%arg0: i32) -> (i32, i32) {
    %c0_i32 = arith.constant 0 : i32
    %c0_i32_0 = arith.constant 0 : i32
    %c0_i32_1 = arith.constant 0 : i32
    return %c0_i32, %c0_i32_0 : i32, i32
  }
  func.func @transform_4(%arg0: i32) -> (i32, i32, i32) {
    %c0_i32 = arith.constant 0 : i32
    %c0_i32_0 = arith.constant 0 : i32
    %c0_i32_1 = arith.constant 0 : i32
    %c0_i32_2 = arith.constant 0 : i32
    return %c0_i32, %c0_i32_0, %c0_i32_1 : i32, i32, i32
  }
  func.func @transform_5(%arg0: i32) -> (i32, i32) {
    %c0_i32 = arith.constant 0 : i32
    %c0_i32_0 = arith.constant 0 : i32
    %c0_i32_1 = arith.constant 0 : i32
    return %c0_i32, %c0_i32_0 : i32, i32
  }
  func.func @transform_6(%arg0: i32) -> (i32, i32) {
    %c0_i32 = arith.constant 0 : i32
    %c0_i32_0 = arith.constant 0 : i32
    %c0_i32_1 = arith.constant 0 : i32
    return %c0_i32, %c0_i32_0 : i32, i32
  }
  func.func @transform_7(%arg0: i32) -> (i32, i32, i32) {
    %c0_i32 = arith.constant 0 : i32
    %c0_i32_0 = arith.constant 0 : i32
    %c0_i32_1 = arith.constant 0 : i32
    return %arg0, %c0_i32, %c0_i32_0 : i32, i32, i32
  }
}

</mosaic_0001>

<llo_original>
// kernel: conv_block_nested_forward.1
$region0: #{conv_block_nested_forward.1}
  #allocation0 [shape = 'u32[]', space=smem, size = 0x4, offset = 0x4, fixed_abs, tag = 'smem constant byte address 0x4 - core index']
  #allocation1 [shape = 'u32[144,128]{1,0:T(1,128)}', space=vmem, size = 0x12000, scoped, tag = 'internal scratch']
  %s0 = inlined_call_operand.vmem [shape: f32[2,18,72], index: 0, kind: input, shape index: {}]
  %s1 = inlined_call_operand.hbm [shape: bf16[3,72,576], index: 1, kind: input, shape index: {}]
  %s2 = inlined_call_operand.hbm [shape: f32[1,576], index: 2, kind: input, shape index: {}]
  %s3 = inlined_call_operand.hbm [shape: f32[1,576], index: 3, kind: input, shape index: {}]
  %s4 = inlined_call_operand.hbm [shape: bf16[3,576,512], index: 4, kind: input, shape index: {}]
  %s5 = inlined_call_operand.hbm [shape: f32[1,512], index: 5, kind: input, shape index: {}]
  %s6 = inlined_call_operand.hbm [shape: f32[1,512], index: 6, kind: input, shape index: {}]
  %s7 = inlined_call_operand.vmem [shape: f32[2,16,512], index: 7, kind: output, shape index: {}]
  %s8 = sld [smem:[#allocation0]]
  $region85: #{conv_block_nested_forward.1} parent=0
    _
  %s10 = ssub.s32 1, %s8
  %s11 = scalar_select 0, %s10, %s8
  $region1: #{conv_block_nested_forward.1} parent=0
    #allocation2 [shape = 'u8[276480]{0}', space=vmem, size = 0x43800, scoped, tag = 'input window, operand 1, single buffered']
    #allocation3 [shape = 's32[2]{0}', space=sflag, size = 0x8, scoped, tag = 'scoped memory for conv_block_nested_forward.1']
    #allocation4 [shape = 'u8[2560]{0}', space=vmem, size = 0xc00, scoped, tag = 'input window, operand 2, single buffered']
    #allocation5 [shape = 's32[1]{0}', space=sflag, size = 0x4, scoped, tag = 'scoped memory for conv_block_nested_forward.1']
    #allocation6 [shape = 'u8[2560]{0}', space=vmem, size = 0xc00, scoped, tag = 'input window, operand 3, single buffered']
    #allocation7 [shape = 'u8[1769472]{0}', space=vmem, size = 0x1b0000, scoped, tag = 'input window, operand 4, single buffered']
    #allocation8 [shape = 's32[1]{0}', space=sflag, size = 0x4, scoped, tag = 'scoped memory for conv_block_nested_forward.1']
    #allocation9 [shape = 'u8[2048]{0}', space=vmem, size = 0x800, scoped, tag = 'input window, operand 5, single buffered']
    #allocation10 [shape = 'u8[2048]{0}', space=vmem, size = 0x800, scoped, tag = 'input window, operand 6, single buffered']
    #allocation11 [shape = 's32[1]{0}', space=sflag, size = 0x4, scoped, tag = 'scoped memory for conv_block_nested_forward.1']
    %12 = vsyncpa [#allocation3], 0
    %13 = vsyncpa [#allocation5], 0
    %14 = vsyncpa [#allocation8], 0
    %15 = vsyncpa [#allocation11], 0
    loop: start=0, step=1, limit=4
    $region2: #{conv_block_nested_forward.1} parent=1 // loop_pre_header
      _
    $region3: #{conv_block_nested_forward.1} parent=1 // loop_header
      %s17 = sphi 0, %s21
      %p18 = scmp.ge.s32.totalorder %s17, 4
      %s27 = sphi 0, %s29
      %s30 = sphi 0, %s27
      %s31 = sphi 0, %s30
      %s47 = sphi 0, %s31
      %s51 = sphi 0, %s51
      %s53 = sphi 0, %s51
      %s54 = sphi 0, %s53
      %s68 = sphi 0, %s54
      %s72 = sphi 0, %s72
      %s74 = sphi 0, %s72
      %s75 = sphi 0, %s74
      %s89 = sphi 0, %s75
      %s93 = sphi 0, %s93
      %s95 = sphi 0, %s93
      %s96 = sphi 0, %s95
      %s110 = sphi 0, %s96
      %s114 = sphi 0, %s114
      %s116 = sphi 0, %s114
      %s117 = sphi 0, %s116
      %s131 = sphi 0, %s117
      %s135 = sphi 0, %s135
      %s137 = sphi 0, %s135
      %s138 = sphi 0, %s137
      %s152 = sphi 0, %s138
      %s156 = sphi 0, %s156
      %s158 = sphi 0, %s156
      %s159 = sphi 0, %s158
      %s173 = sphi 0, %s159
      %s179 = sphi 0, %s181
      %s182 = sphi 0, %s179
      %s183 = sphi 0, %s182
      %s199 = sphi 0, %s183
    $region4: #{conv_block_nested_forward.1} parent=1 // loop_header_branch
      %20 = sbr.rel (%p18) target = $region8
    $region5: #{conv_block_nested_forward.1} parent=1 // loop_body
      %s22 = ssub.s32 %s17, 1
      %s23 = ssub.s32 %s17, 2
      %s24 = sadd.s32 %s17, 1
      %s25 = ssub.s32 %s17, %s24
      %p26 = scmp.eq.s32.totalorder %s25, 0
      %s28 = sadd.s32 %s27, 1
      %s29 = scalar_select %p26, %s27, %s28
      %p32 = pneg %p26
      %p33 = scmp.eq.s32.totalorder %s17, 1
      %p34 = por %p32, %p33
      %p35 = scmp.ne.s32.totalorder %s27, %s30
      %p36 = scmp.eq.s32.totalorder %s17, 0
      %p37 = por %p35, %p36
      %p38 = scmp.ne.s32.totalorder %s27, %s30
      %p39 = scmp.eq.s32.totalorder %s22, 1
      %p40 = por %p38, %p39
      %p41 = scmp.ne.s32.totalorder %s30, %s31
      %p42 = scmp.eq.s32.totalorder %s22, 0
      %p43 = por %p41, %p42
      %p44 = scmp.ne.s32.totalorder %s30, %s31
      %p45 = scmp.eq.s32.totalorder %s23, 1
      %p46 = por %p44, %p45
      %p48 = scmp.ne.s32.totalorder %s31, %s47
      %p49 = scmp.eq.s32.totalorder %s23, 0
      %p50 = por %p48, %p49
      %s52 = sadd.s32 %s51, 1
      %p55 = scmp.eq.s32.totalorder %s17, 1
      %p56 = scmp.ne.s32.totalorder %s51, %s53
      %p57 = scmp.eq.s32.totalorder %s17, 0
      %p58 = por %p56, %p57
      %p59 = scmp.ne.s32.totalorder %s51, %s53
      %p60 = scmp.eq.s32.totalorder %s22, 1
      %p61 = por %p59, %p60
      %p62 = scmp.ne.s32.totalorder %s53, %s54
      %p63 = scmp.eq.s32.totalorder %s22, 0
      %p64 = por %p62, %p63
      %p65 = scmp.ne.s32.totalorder %s53, %s54
      %p66 = scmp.eq.s32.totalorder %s23, 1
      %p67 = por %p65, %p66
      %p69 = scmp.ne.s32.totalorder %s54, %s68
      %p70 = scmp.eq.s32.totalorder %s23, 0
      %p71 = por %p69, %p70
      %s73 = sadd.s32 %s72, 1
      %p76 = scmp.eq.s32.totalorder %s17, 1
      %p77 = scmp.ne.s32.totalorder %s72, %s74
      %p78 = scmp.eq.s32.totalorder %s17, 0
      %p79 = por %p77, %p78
      %p80 = scmp.ne.s32.totalorder %s72, %s74
      %p81 = scmp.eq.s32.totalorder %s22, 1
      %p82 = por %p80, %p81
      %p83 = scmp.ne.s32.totalorder %s74, %s75
      %p84 = scmp.eq.s32.totalorder %s22, 0
      %p85 = por %p83, %p84
      %p86 = scmp.ne.s32.totalorder %s74, %s75
      %p87 = scmp.eq.s32.totalorder %s23, 1
      %p88 = por %p86, %p87
      %p90 = scmp.ne.s32.totalorder %s75, %s89
      %p91 = scmp.eq.s32.totalorder %s23, 0
      %p92 = por %p90, %p91
      %s94 = sadd.s32 %s93, 1
      %p97 = scmp.eq.s32.totalorder %s17, 1
      %p98 = scmp.ne.s32.totalorder %s93, %s95
      %p99 = scmp.eq.s32.totalorder %s17, 0
      %p100 = por %p98, %p99
      %p101 = scmp.ne.s32.totalorder %s93, %s95
      %p102 = scmp.eq.s32.totalorder %s22, 1
      %p103 = por %p101, %p102
      %p104 = scmp.ne.s32.totalorder %s95, %s96
      %p105 = scmp.eq.s32.totalorder %s22, 0
      %p106 = por %p104, %p105
      %p107 = scmp.ne.s32.totalorder %s95, %s96
      %p108 = scmp.eq.s32.totalorder %s23, 1
      %p109 = por %p107, %p108
      %p111 = scmp.ne.s32.totalorder %s96, %s110
      %p112 = scmp.eq.s32.totalorder %s23, 0
      %p113 = por %p111, %p112
      %s115 = sadd.s32 %s114, 1
      %p118 = scmp.eq.s32.totalorder %s17, 1
      %p119 = scmp.ne.s32.totalorder %s114, %s116
      %p120 = scmp.eq.s32.totalorder %s17, 0
      %p121 = por %p119, %p120
      %p122 = scmp.ne.s32.totalorder %s114, %s116
      %p123 = scmp.eq.s32.totalorder %s22, 1
      %p124 = por %p122, %p123
      %p125 = scmp.ne.s32.totalorder %s116, %s117
      %p126 = scmp.eq.s32.totalorder %s22, 0
      %p127 = por %p125, %p126
      %p128 = scmp.ne.s32.totalorder %s116, %s117
      %p129 = scmp.eq.s32.totalorder %s23, 1
      %p130 = por %p128, %p129
      %p132 = scmp.ne.s32.totalorder %s117, %s131
      %p133 = scmp.eq.s32.totalorder %s23, 0
      %p134 = por %p132, %p133
      %s136 = sadd.s32 %s135, 1
      %p139 = scmp.eq.s32.totalorder %s17, 1
      %p140 = scmp.ne.s32.totalorder %s135, %s137
      %p141 = scmp.eq.s32.totalorder %s17, 0
      %p142 = por %p140, %p141
      %p143 = scmp.ne.s32.totalorder %s135, %s137
      %p144 = scmp.eq.s32.totalorder %s22, 1
      %p145 = por %p143, %p144
      %p146 = scmp.ne.s32.totalorder %s137, %s138
      %p147 = scmp.eq.s32.totalorder %s22, 0
      %p148 = por %p146, %p147
      %p149 = scmp.ne.s32.totalorder %s137, %s138
      %p150 = scmp.eq.s32.totalorder %s23, 1
      %p151 = por %p149, %p150
      %p153 = scmp.ne.s32.totalorder %s138, %s152
      %p154 = scmp.eq.s32.totalorder %s23, 0
      %p155 = por %p153, %p154
      %s157 = sadd.s32 %s156, 1
      %p160 = scmp.eq.s32.totalorder %s17, 1
      %p161 = scmp.ne.s32.totalorder %s156, %s158
      %p162 = scmp.eq.s32.totalorder %s17, 0
      %p163 = por %p161, %p162
      %p164 = scmp.ne.s32.totalorder %s156, %s158
      %p165 = scmp.eq.s32.totalorder %s22, 1
      %p166 = por %p164, %p165
      %p167 = scmp.ne.s32.totalorder %s158, %s159
      %p168 = scmp.eq.s32.totalorder %s22, 0
      %p169 = por %p167, %p168
      %p170 = scmp.ne.s32.totalorder %s158, %s159
      %p171 = scmp.eq.s32.totalorder %s23, 1
      %p172 = por %p170, %p171
      %p174 = scmp.ne.s32.totalorder %s159, %s173
      %p175 = scmp.eq.s32.totalorder %s23, 0
      %p176 = por %p174, %p175
      %s177 = ssub.s32 %s17, %s24
      %p178 = scmp.eq.s32.totalorder %s177, 0
      %s180 = sadd.s32 %s179, 1
      %s181 = scalar_select %p178, %s179, %s180
      %p184 = pneg %p178
      %p185 = scmp.eq.s32.totalorder %s17, 1
      %p186 = por %p184, %p185
      %p187 = scmp.ne.s32.totalorder %s179, %s182
      %p188 = scmp.eq.s32.totalorder %s17, 0
      %p189 = por %p187, %p188
      %p190 = scmp.ne.s32.totalorder %s179, %s182
      %p191 = scmp.eq.s32.totalorder %s22, 1
      %p192 = por %p190, %p191
      %p193 = scmp.ne.s32.totalorder %s182, %s183
      %p194 = scmp.eq.s32.totalorder %s22, 0
      %p195 = por %p193, %p194
      %p196 = scmp.ne.s32.totalorder %s182, %s183
      %p197 = scmp.eq.s32.totalorder %s23, 1
      %p198 = por %p196, %p197
      %p200 = scmp.ne.s32.totalorder %s183, %s199
      %p201 = scmp.eq.s32.totalorder %s23, 0
      %p202 = por %p200, %p201
      %p203 = scmp.le.s32.totalorder 1, %s17
      %p204 = scmp.lt.s32.totalorder %s17, 3
      %p205 = pnand %p203, %p204
      %p206 = pneg %p205
      // Predicated region
      $region9: #{conv_block_nested_forward.1} parent=5 // pred_check
        _
      $region10: #{conv_block_nested_forward.1} parent=5 // pred_check_branch
        %208 = sbr.rel (%p205) target = $region12
      $region11: #{conv_block_nested_forward.1} parent=5 // pred_region
        %s209 = ssub.s32 %s17, 1
        // Predicated region
        $region13: #{conv_block_nested_forward.1} parent=11 // pred_check
          %p210 = pneg %p64
        $region14: #{conv_block_nested_forward.1} parent=11 // pred_check_branch
          %212 = sbr.rel (%p210) target = $region16
        $region15: #{conv_block_nested_forward.1} parent=11 // pred_region
          %s214 = ssub.s32 8640, 8640
          %215 = vsyncadd [#allocation3], %s214
          %s216 = sshll.u32 [#allocation2], 4
          %s217 = int_to_ptr.vmem [resolvable:$true] %s216
          %222 = dma.hbm_to_vmem [thread:$0]  %s1, 8640, %s217, [#allocation3], 320, 320, 20
        $region16: #{conv_block_nested_forward.1} parent=11 // pred_fallthru
          _
        // Predicated region
        $region17: #{conv_block_nested_forward.1} parent=11 // pred_check
          %p223 = pneg %p85
        $region18: #{conv_block_nested_forward.1} parent=11 // pred_check_branch
          %225 = sbr.rel (%p223) target = $region20
        $region19: #{conv_block_nested_forward.1} parent=11 // pred_region
          %s227 = ssub.s32 80, 80
          %228 = vsyncadd [#allocation5], %s227
          %s230 = sshll.u32 [#allocation4], 4
          %s231 = int_to_ptr.vmem [resolvable:$true] %s230
          %233 = dma.hbm_to_vmem [thread:$0]  %s2, 80, %s231, [#allocation5]
        $region20: #{conv_block_nested_forward.1} parent=11 // pred_fallthru
          _
        // Predicated region
        $region21: #{conv_block_nested_forward.1} parent=11 // pred_check
          %p234 = pneg %p106
        $region22: #{conv_block_nested_forward.1} parent=11 // pred_check_branch
          %236 = sbr.rel (%p234) target = $region24
        $region23: #{conv_block_nested_forward.1} parent=11 // pred_region
          %s238 = ssub.s32 80, 80
          %239 = vsyncadd [#allocation5], %s238
          %s241 = sshll.u32 [#allocation6], 4
          %s242 = int_to_ptr.vmem [resolvable:$true] %s241
          %244 = dma.hbm_to_vmem [thread:$0]  %s3, 80, %s242, [#allocation5]
        $region24: #{conv_block_nested_forward.1} parent=11 // pred_fallthru
          _
        // Predicated region
        $region25: #{conv_block_nested_forward.1} parent=11 // pred_check
          %p245 = pneg %p127
        $region26: #{conv_block_nested_forward.1} parent=11 // pred_check_branch
          %247 = sbr.rel (%p245) target = $region28
        $region27: #{conv_block_nested_forward.1} parent=11 // pred_region
          %s249 = ssub.s32 55296, 55296
          %250 = vsyncadd [#allocation8], %s249
          %s251 = sshll.u32 [#allocation7], 4
          %s252 = int_to_ptr.vmem [resolvable:$true] %s251
          %257 = dma.hbm_to_vmem [thread:$0]  %s4, 55296, %s252, [#allocation8], 256, 256, 16
        $region28: #{conv_block_nested_forward.1} parent=11 // pred_fallthru
          _
        // Predicated region
        $region29: #{conv_block_nested_forward.1} parent=11 // pred_check
          %p258 = pneg %p148
        $region30: #{conv_block_nested_forward.1} parent=11 // pred_check_branch
          %260 = sbr.rel (%p258) target = $region32
        $region31: #{conv_block_nested_forward.1} parent=11 // pred_region
          %s262 = ssub.s32 64, 64
          %263 = vsyncadd [#allocation8], %s262
          %s265 = sshll.u32 [#allocation9], 4
          %s266 = int_to_ptr.vmem [resolvable:$true] %s265
          %268 = dma.hbm_to_vmem [thread:$0]  %s5, 64, %s266, [#allocation8]
        $region32: #{conv_block_nested_forward.1} parent=11 // pred_fallthru
          _
        // Predicated region
        $region33: #{conv_block_nested_forward.1} parent=11 // pred_check
          %p269 = pneg %p169
        $region34: #{conv_block_nested_forward.1} parent=11 // pred_check_branch
          %271 = sbr.rel (%p269) target = $region36
        $region35: #{conv_block_nested_forward.1} parent=11 // pred_region
          %s273 = ssub.s32 64, 64
          %274 = vsyncadd [#allocation11], %s273
          %s276 = sshll.u32 [#allocation10], 4
          %s277 = int_to_ptr.vmem [resolvable:$true] %s276
          %279 = dma.hbm_to_vmem [thread:$0]  %s6, 64, %s277, [#allocation11]
        $region36: #{conv_block_nested_forward.1} parent=11 // pred_fallthru
          _
      $region12: #{conv_block_nested_forward.1} parent=5 // pred_fallthru
        _
      %p280 = scmp.lt.s32.totalorder %s17, 2
      // Predicated region
      $region37: #{conv_block_nested_forward.1} parent=5 // pred_check
        %p281 = pneg %p280
      $region38: #{conv_block_nested_forward.1} parent=5 // pred_check_branch
        %283 = sbr.rel (%p281) target = $region40
      $region39: #{conv_block_nested_forward.1} parent=5 // pred_region
        // Predicated region
        $region41: #{conv_block_nested_forward.1} parent=39 // pred_check
          %p284 = pneg %p37
        $region42: #{conv_block_nested_forward.1} parent=39 // pred_check_branch
          %286 = sbr.rel (%p284) target = $region44
        $region43: #{conv_block_nested_forward.1} parent=39 // pred_region
          %p287 = scmp.lt.s32.totalorder %s17, 1
          %s288 = scalar_select %p287, %s17, 1
          %s289 = smul.addr %s288, 3
          %s290 = smul.addr %s289, 8
          %s291 = scalar_lea.vmem %s0, %s290
        $region44: #{conv_block_nested_forward.1} parent=39 // pred_fallthru
          _
      $region40: #{conv_block_nested_forward.1} parent=5 // pred_fallthru
        _
      %p292 = scmp.le.s32.totalorder 1, %s17
      %p293 = scmp.lt.s32.totalorder %s17, 3
      %p294 = pnand %p292, %p293
      %p295 = pneg %p294
      // Predicated region
      $region45: #{conv_block_nested_forward.1} parent=5 // pred_check
        _
      $region46: #{conv_block_nested_forward.1} parent=5 // pred_check_branch
        %297 = sbr.rel (%p294) target = $region48
      $region47: #{conv_block_nested_forward.1} parent=5 // pred_region
        %s298 = ssub.s32 %s17, 1
        // Predicated region
        $region49: #{conv_block_nested_forward.1} parent=47 // pred_check
          %p299 = pneg %p64
        $region50: #{conv_block_nested_forward.1} parent=47 // pred_check_branch
          %301 = sbr.rel (%p299) target = $region52
        $region51: #{conv_block_nested_forward.1} parent=47 // pred_region
          %302 = dma.done [#allocation3], 8640
        $region52: #{conv_block_nested_forward.1} parent=47 // pred_fallthru
          _
        // Predicated region
        $region53: #{conv_block_nested_forward.1} parent=47 // pred_check
          %p303 = pneg %p85
        $region54: #{conv_block_nested_forward.1} parent=47 // pred_check_branch
          %305 = sbr.rel (%p303) target = $region56
        $region55: #{conv_block_nested_forward.1} parent=47 // pred_region
          %306 = dma.done [#allocation5], 80
        $region56: #{conv_block_nested_forward.1} parent=47 // pred_fallthru
          _
        // Predicated region
        $region57: #{conv_block_nested_forward.1} parent=47 // pred_check
          %p307 = pneg %p106
        $region58: #{conv_block_nested_forward.1} parent=47 // pred_check_branch
          %309 = sbr.rel (%p307) target = $region60
        $region59: #{conv_block_nested_forward.1} parent=47 // pred_region
          %310 = dma.done [#allocation5], 80
        $region60: #{conv_block_nested_forward.1} parent=47 // pred_fallthru
          _
        // Predicated region
        $region61: #{conv_block_nested_forward.1} parent=47 // pred_check
          %p311 = pneg %p127
        $region62: #{conv_block_nested_forward.1} parent=47 // pred_check_branch
          %313 = sbr.rel (%p311) target = $region64
        $region63: #{conv_block_nested_forward.1} parent=47 // pred_region
          %314 = dma.done [#allocation8], 55296
        $region64: #{conv_block_nested_forward.1} parent=47 // pred_fallthru
          _
        // Predicated region
        $region65: #{conv_block_nested_forward.1} parent=47 // pred_check
          %p315 = pneg %p148
        $region66: #{conv_block_nested_forward.1} parent=47 // pred_check_branch
          %317 = sbr.rel (%p315) target = $region68
        $region67: #{conv_block_nested_forward.1} parent=47 // pred_region
          %318 = dma.done [#allocation8], 64
        $region68: #{conv_block_nested_forward.1} parent=47 // pred_fallthru
          _
        // Predicated region
        $region69: #{conv_block_nested_forward.1} parent=47 // pred_check
          %p319 = pneg %p169
        $region70: #{conv_block_nested_forward.1} parent=47 // pred_check_branch
          %321 = sbr.rel (%p319) target = $region72
        $region71: #{conv_block_nested_forward.1} parent=47 // pred_region
          %322 = dma.done [#allocation11], 64
        $region72: #{conv_block_nested_forward.1} parent=47 // pred_fallthru
          _
        %p323 = scmp.lt.s32.totalorder %s22, 1
        %s324 = scalar_select %p323, %s22, 1
        %s325 = smul.addr %s324, 3
        %s326 = smul.addr %s325, 8
        %s327 = scalar_lea.vmem %s0, %s326
        %p328 = pneg %p43
        %p329 = pneg %p40
        %p330 = pneg %p64
        %p331 = pneg %p61
        %p332 = pneg %p85
        %p333 = pneg %p82
        %p334 = pneg %p106
        %p335 = pneg %p103
        %p336 = pneg %p127
        %p337 = pneg %p124
        %p338 = pneg %p148
        %p339 = pneg %p145
        %p340 = pneg %p169
        %p341 = pneg %p166
        %p342 = pneg %p195
        %p343 = pneg %p192
        %p344 = scmp.lt.s32.totalorder %s22, 1
        %s345 = scalar_select %p344, %s22, 1
        %s346 = smul.addr %s345, 8
        %s347 = smul.addr %s346, 8
        %s348 = scalar_lea.vmem %s7, %s347
        %p349 = scmp.lt.s32.totalorder %s22, 1
        %s350 = scalar_select %p349, %s22, 1
        %s351 = smul.addr %s350, 3
        %s352 = smul.addr %s351, 8
        %s353 = scalar_lea.vmem %s0, %s352
        %p354 = scmp.lt.s32.totalorder %s22, 1
        %s355 = scalar_select %p354, %s22, 1
        %s356 = smul.addr %s355, 8
        %s357 = smul.addr %s356, 8
        %s358 = scalar_lea.vmem %s7, %s357
        %v360 = vld [vmem:[%s353] sm:$0xff]
        %v361 = vld [vmem:[%s353 + $0x8] sm:$0xff]
        %v362 = vld [vmem:[%s353 + $0x10] sm:$0x3]
        %v363 = vpack.c.bf16 %v361, %v360
        %v364 = vld [vmem:[#allocation2] sm:$0xff]
        %v365 = vld [vmem:[#allocation2 + $0x8] sm:$0xff]
        %v366 = vld [vmem:[#allocation2 + $0x10] sm:$0xf]
        %v367 = vld [vmem:[#allocation2 + $0x14] sm:$0xff]
        %v368 = vld [vmem:[#allocation2 + $0x1c] sm:$0xff]
        %v369 = vld [vmem:[#allocation2 + $0x24] sm:$0xf]
        %v370 = vld [vmem:[#allocation2 + $0x28] sm:$0xff]
        %v371 = vld [vmem:[#allocation2 + $0x30] sm:$0xff]
        %v372 = vld [vmem:[#allocation2 + $0x38] sm:$0xf]
        %v373 = vld [vmem:[#allocation2 + $0x3c] sm:$0xff]
        %v374 = vld [vmem:[#allocation2 + $0x44] sm:$0xff]
        %v375 = vld [vmem:[#allocation2 + $0x4c] sm:$0xf]
        %v376 = vld [vmem:[#allocation2 + $0x50] sm:$0xff]
        %v377 = vld [vmem:[#allocation2 + $0x58] sm:$0xff]
        %v378 = vld [vmem:[#allocation2 + $0x60] sm:$0xf]
        %v379 = vld [vmem:[#allocation2 + $0x64] sm:$0xff]
        %v380 = vld [vmem:[#allocation2 + $0x6c] sm:$0xff]
        %v381 = vld [vmem:[#allocation2 + $0x74] sm:$0xf]
        %v382 = vld [vmem:[#allocation2 + $0x78] sm:$0xff]
        %v383 = vld [vmem:[#allocation2 + $0x80] sm:$0xff]
        %v384 = vld [vmem:[#allocation2 + $0x88] sm:$0xf]
        %v385 = vld [vmem:[#allocation2 + $0x8c] sm:$0xff]
        %v386 = vld [vmem:[#allocation2 + $0x94] sm:$0xff]
        %v387 = vld [vmem:[#allocation2 + $0x9c] sm:$0xf]
        %v388 = vld [vmem:[#allocation2 + $0xa0] sm:$0xff]
        %v389 = vld [vmem:[#allocation2 + $0xa8] sm:$0xff]
        %v390 = vld [vmem:[#allocation2 + $0xb0] sm:$0xf]
        %v391 = vpack.c.bf16 %v362, %v362
        %s392 = scalar_lea.vmem [#allocation2], 180
        %v393 = vld [vmem:[%s392] sm:$0xff]
        %v394 = vld [vmem:[%s392 + $0x8] sm:$0xff]
        %v395 = vld [vmem:[%s392 + $0x10] sm:$0xf]
        %v396 = vld [vmem:[%s392 + $0x14] sm:$0xff]
        %v397 = vld [vmem:[%s392 + $0x1c] sm:$0xff]
        %v398 = vld [vmem:[%s392 + $0x24] sm:$0xf]
        %v399 = vld [vmem:[%s392 + $0x28] sm:$0xff]
        %v400 = vld [vmem:[%s392 + $0x30] sm:$0xff]
        %v401 = vld [vmem:[%s392 + $0x38] sm:$0xf]
        %v402 = vld [vmem:[%s392 + $0x3c] sm:$0xff]
        %v403 = vld [vmem:[%s392 + $0x44] sm:$0xff]
        %v404 = vld [vmem:[%s392 + $0x4c] sm:$0xf]
        %v405 = vld [vmem:[%s392 + $0x50] sm:$0xff]
        %v406 = vld [vmem:[%s392 + $0x58] sm:$0xff]
        %v407 = vld [vmem:[%s392 + $0x60] sm:$0xf]
        %v408 = vld [vmem:[%s392 + $0x64] sm:$0xff]
        %v409 = vld [vmem:[%s392 + $0x6c] sm:$0xff]
        %v410 = vld [vmem:[%s392 + $0x74] sm:$0xf]
        %v411 = vld [vmem:[%s392 + $0x78] sm:$0xff]
        %v412 = vld [vmem:[%s392 + $0x80] sm:$0xff]
        %v413 = vld [vmem:[%s392 + $0x88] sm:$0xf]
        %v414 = vld [vmem:[%s392 + $0x8c] sm:$0xff]
        %v415 = vld [vmem:[%s392 + $0x94] sm:$0xff]
        %v416 = vld [vmem:[%s392 + $0x9c] sm:$0xf]
        %v417 = vld [vmem:[%s392 + $0xa0] sm:$0xff]
        %v418 = vld [vmem:[%s392 + $0xa8] sm:$0xff]
        %v419 = vld [vmem:[%s392 + $0xb0] sm:$0xf]
        %vm420 = vsmask.f32 7424
        %v422 = vshrl.u32 %v363, 16
        %v424 = vshll.u32 %v363, 16
        %v426 = vrot.slane %v424, 1
        %v427 = vor.u32 %v422, %v426
        %v429 = vshll.u32 %v391, 16
        %v431 = vrot.slane %v429, 1
        %v432 = vsel %vm420, %v427, %v431
        %v460 = vunpack.c.l.b16 %v393
        %v461 = vunpack.c.h.b16 %v393
        %v462 = vunpack.c.l.b16 %v394
        %v463 = vunpack.c.h.b16 %v394
        %v464 = vunpack.c.l.b16 %v395
        %v465 = vunpack.c.l.b16 %v396
        %v466 = vunpack.c.h.b16 %v396
        %v467 = vunpack.c.l.b16 %v397
        %v468 = vunpack.c.h.b16 %v397
        %v469 = vunpack.c.l.b16 %v398
        %v470 = vunpack.c.l.b16 %v399
        %v471 = vunpack.c.h.b16 %v399
        %v472 = vunpack.c.l.b16 %v400
        %v473 = vunpack.c.h.b16 %v400
        %v474 = vunpack.c.l.b16 %v401
        %v475 = vunpack.c.l.b16 %v402
        %v476 = vunpack.c.h.b16 %v402
        %v477 = vunpack.c.l.b16 %v403
        %v478 = vunpack.c.h.b16 %v403
        %v479 = vunpack.c.l.b16 %v404
        %v480 = vunpack.c.l.b16 %v405
        %v481 = vunpack.c.h.b16 %v405
        %v482 = vunpack.c.l.b16 %v406
        %v483 = vunpack.c.h.b16 %v406
        %v484 = vunpack.c.l.b16 %v407
        %v485 = vunpack.c.l.b16 %v408
        %v486 = vunpack.c.h.b16 %v408
        %v487 = vunpack.c.l.b16 %v409
        %v488 = vunpack.c.h.b16 %v409
        %v489 = vunpack.c.l.b16 %v410
        %v490 = vunpack.c.l.b16 %v411
        %v491 = vunpack.c.h.b16 %v411
        %v492 = vunpack.c.l.b16 %v412
        %v493 = vunpack.c.h.b16 %v412
        %v494 = vunpack.c.l.b16 %v413
        %v495 = vunpack.c.l.b16 %v414
        %v496 = vunpack.c.h.b16 %v414
        %v497 = vunpack.c.l.b16 %v415
        %v498 = vunpack.c.h.b16 %v415
        %v499 = vunpack.c.l.b16 %v416
        %v500 = vunpack.c.l.b16 %v417
        %v501 = vunpack.c.h.b16 %v417
        %v502 = vunpack.c.l.b16 %v418
        %v503 = vunpack.c.h.b16 %v418
        %v504 = vunpack.c.l.b16 %v419
        %v505 = vpack.c.b16 %v465, %v460
        %v506 = vpack.c.b16 %v466, %v461
        %v507 = vpack.c.b16 %v467, %v462
        %v508 = vpack.c.b16 %v468, %v463
        %v509 = vpack.c.b16 %v469, %v464
        %v510 = vpack.c.b16 %v475, %v470
        %v511 = vpack.c.b16 %v476, %v471
        %v512 = vpack.c.b16 %v477, %v472
        %v513 = vpack.c.b16 %v478, %v473
        %v514 = vpack.c.b16 %v479, %v474
        %v515 = vpack.c.b16 %v485, %v480
        %v516 = vpack.c.b16 %v486, %v481
        %v517 = vpack.c.b16 %v487, %v482
        %v518 = vpack.c.b16 %v488, %v483
        %v519 = vpack.c.b16 %v489, %v484
        %v520 = vpack.c.b16 %v495, %v490
        %v521 = vpack.c.b16 %v496, %v491
        %v522 = vpack.c.b16 %v497, %v492
        %v523 = vpack.c.b16 %v498, %v493
        %v524 = vpack.c.b16 %v499, %v494
        %v525 = vpack.c.b16 %v500, %v500
        %v526 = vpack.c.b16 %v501, %v501
        %v527 = vpack.c.b16 %v502, %v502
        %v528 = vpack.c.b16 %v503, %v503
        %v529 = vpack.c.b16 %v504, %v504
        %vm550 = vcmask 588800
        %v552 = vsel %vm550, %v432, 0
        %vm554 = vcmask 1043456
        %v556 = vsel %vm554, %v525, 0
        %v559 = vsel %vm554, %v526, 0
        %v562 = vsel %vm554, %v527, 0
        %v565 = vsel %vm554, %v528, 0
        %v568 = vsel %vm554, %v529, 0
        %570 = vmatprep.subr.bf16.mxu0 %v506
        %571 = vmatpush1.bf16.msra.mxu0 %v505
        %572 = vmatprep.subr.bf16.mxu0 %v511
        %573 = vmatpush1.bf16.msra.mxu0 %v510
        %574 = vmatprep.subr.bf16.mxu0 %v516
        %575 = vmatpush1.bf16.msra.mxu0 %v515
        %576 = vmatprep.subr.bf16.mxu0 %v521
        %577 = vmatpush1.bf16.msra.mxu0 %v520
        %578 = vmatprep.subr.bf16.mxu0 %v559
        %579 = vmatpush1.bf16.msra.mxu0 %v556
        %580 = vmatprep.subr.bf16.mxu0 0
        %581 = vmatpush1.bf16.msra.mxu0 0
        %582 = vmatprep.subr.bf16.mxu0 0
        %583 = vmatpush1.bf16.msra.mxu0 0
        %584 = vmatprep.subr.bf16.mxu0 0
        %585 = vmatpush1.bf16.msra.mxu0 0
        %586 = vmatprep.subr.bf16.mxu0 0
        %587 = vmatpush1.bf16.msra.mxu0 0
        %588 = vmatprep.subr.bf16.mxu0 0
        %589 = vmatpush1.bf16.msra.mxu0 0
        %590 = vmatprep.subr.bf16.mxu0 0
        %591 = vmatpush1.bf16.msra.mxu0 0
        %592 = vmatprep.subr.bf16.mxu0 0
        %593 = vmatpush1.bf16.msra.mxu0 0
        %594 = vmatprep.subr.bf16.mxu0 0
        %595 = vmatpush1.bf16.msra.mxu0 0
        %596 = vmatprep.subr.bf16.mxu0 0
        %597 = vmatpush1.bf16.msra.mxu0 0
        %598 = vmatprep.subr.bf16.mxu0 0
        %599 = vmatpush1.bf16.msra.mxu0 0
        %600 = vmatprep.subr.bf16.mxu0 0
        %601 = vmatpush1.bf16.msra.mxu0 0
        %602 = vmatprep.mubr.bf16.mxu0 0
        %603 = vmatmul.mubr.bf16.gmra.mrb[0].mxu0 %v552
        %v604 = vpop.f32.mrb[0].mxu0
        %v605 = vadd.f32 0.0, %v604
        %v606 = vpop.f32.mrb[0].mxu0
        %v607 = vadd.f32 0.0, %v606
        %v608 = vpop.f32.mrb[0].mxu0
        %v609 = vadd.f32 0.0, %v608
        %v610 = vpop.f32.mrb[0].mxu0
        %v611 = vadd.f32 0.0, %v610
        %612 = vdwg.mxu0
        %613 = vmatprep.subr.bf16.mxu0 %v508
        %614 = vmatpush1.bf16.msra.mxu0 %v507
        %615 = vmatprep.subr.bf16.mxu0 %v513
        %616 = vmatpush1.bf16.msra.mxu0 %v512
        %617 = vmatprep.subr.bf16.mxu0 %v518
        %618 = vmatpush1.bf16.msra.mxu0 %v517
        %619 = vmatprep.subr.bf16.mxu0 %v523
        %620 = vmatpush1.bf16.msra.mxu0 %v522
        %621 = vmatprep.subr.bf16.mxu0 %v565
        %622 = vmatpush1.bf16.msra.mxu0 %v562
        %623 = vmatprep.subr.bf16.mxu0 0
        %624 = vmatpush1.bf16.msra.mxu0 0
        %625 = vmatprep.subr.bf16.mxu0 0
        %626 = vmatpush1.bf16.msra.mxu0 0
        %627 = vmatprep.subr.bf16.mxu0 0
        %628 = vmatpush1.bf16.msra.mxu0 0
        %629 = vmatprep.subr.bf16.mxu0 0
        %630 = vmatpush1.bf16.msra.mxu0 0
        %631 = vmatprep.subr.bf16.mxu0 0
        %632 = vmatpush1.bf16.msra.mxu0 0
        %633 = vmatprep.subr.bf16.mxu0 0
        %634 = vmatpush1.bf16.msra.mxu0 0
        %635 = vmatprep.subr.bf16.mxu0 0
        %636 = vmatpush1.bf16.msra.mxu0 0
        %637 = vmatprep.subr.bf16.mxu0 0
        %638 = vmatpush1.bf16.msra.mxu0 0
        %639 = vmatprep.subr.bf16.mxu0 0
        %640 = vmatpush1.bf16.msra.mxu0 0
        %641 = vmatprep.subr.bf16.mxu0 0
        %642 = vmatpush1.bf16.msra.mxu0 0
        %643 = vmatprep.subr.bf16.mxu0 0
        %644 = vmatpush1.bf16.msra.mxu0 0
        %645 = vmatprep.mubr.bf16.mxu0 0
        %646 = vmatmul.mubr.bf16.gmra.mrb[0].mxu0 %v552
        %v647 = vpop.f32.mrb[0].mxu0
        %v648 = vadd.f32 0.0, %v647
        %v649 = vpop.f32.mrb[0].mxu0
        %v650 = vadd.f32 0.0, %v649
        %v651 = vpop.f32.mrb[0].mxu0
        %v652 = vadd.f32 0.0, %v651
        %v653 = vpop.f32.mrb[0].mxu0
        %v654 = vadd.f32 0.0, %v653
        %655 = vdwg.mxu0
        %656 = vmatprep.subr.bf16.mxu0 0
        %657 = vmatpush1.bf16.msra.mxu0 %v509
        %658 = vmatprep.subr.bf16.mxu0 0
        %659 = vmatpush1.bf16.msra.mxu0 %v514
        %660 = vmatprep.subr.bf16.mxu0 0
        %661 = vmatpush1.bf16.msra.mxu0 %v519
        %662 = vmatprep.subr.bf16.mxu0 0
        %663 = vmatpush1.bf16.msra.mxu0 %v524
        %664 = vmatprep.subr.bf16.mxu0 0
        %665 = vmatpush1.bf16.msra.mxu0 %v568
        %666 = vmatprep.subr.bf16.mxu0 0
        %667 = vmatpush1.bf16.msra.mxu0 0
        %668 = vmatprep.subr.bf16.mxu0 0
        %669 = vmatpush1.bf16.msra.mxu0 0
        %670 = vmatprep.subr.bf16.mxu0 0
        %671 = vmatpush1.bf16.msra.mxu0 0
        %672 = vmatprep.subr.bf16.mxu0 0
        %673 = vmatpush1.bf16.msra.mxu0 0
        %674 = vmatprep.subr.bf16.mxu0 0
        %675 = vmatpush1.bf16.msra.mxu0 0
        %676 = vmatprep.subr.bf16.mxu0 0
        %677 = vmatpush1.bf16.msra.mxu0 0
        %678 = vmatprep.subr.bf16.mxu0 0
        %679 = vmatpush1.bf16.msra.mxu0 0
        %680 = vmatprep.subr.bf16.mxu0 0
        %681 = vmatpush1.bf16.msra.mxu0 0
        %682 = vmatprep.subr.bf16.mxu0 0
        %683 = vmatpush1.bf16.msra.mxu0 0
        %684 = vmatprep.subr.bf16.mxu0 0
        %685 = vmatpush1.bf16.msra.mxu0 0
        %686 = vmatprep.subr.bf16.mxu0 0
        %687 = vmatpush1.bf16.msra.mxu0 0
        %688 = vmatprep.mubr.bf16.mxu0 0
        %689 = vmatmul.mubr.bf16.gmra.mrb[0].mxu0 %v552
        %v690 = vpop.f32.mrb[0].mxu0
        %v691 = vadd.f32 0.0, %v690
        %v692 = vpop.f32.mrb[0].mxu0
        %v693 = vpop.f32.mrb[0].mxu0
        %v694 = vadd.f32 0.0, %v693
        %v695 = vpop.f32.mrb[0].mxu0
        %696 = vdwg.mxu0
        %v724 = vunpack.c.l.b16 %v364
        %v725 = vunpack.c.h.b16 %v364
        %v726 = vunpack.c.l.b16 %v365
        %v727 = vunpack.c.h.b16 %v365
        %v728 = vunpack.c.l.b16 %v366
        %v729 = vunpack.c.l.b16 %v367
        %v730 = vunpack.c.h.b16 %v367
        %v731 = vunpack.c.l.b16 %v368
        %v732 = vunpack.c.h.b16 %v368
        %v733 = vunpack.c.l.b16 %v369
        %v734 = vunpack.c.l.b16 %v370
        %v735 = vunpack.c.h.b16 %v370
        %v736 = vunpack.c.l.b16 %v371
        %v737 = vunpack.c.h.b16 %v371
        %v738 = vunpack.c.l.b16 %v372
        %v739 = vunpack.c.l.b16 %v373
        %v740 = vunpack.c.h.b16 %v373
        %v741 = vunpack.c.l.b16 %v374
        %v742 = vunpack.c.h.b16 %v374
        %v743 = vunpack.c.l.b16 %v375
        %v744 = vunpack.c.l.b16 %v376
        %v745 = vunpack.c.h.b16 %v376
        %v746 = vunpack.c.l.b16 %v377
        %v747 = vunpack.c.h.b16 %v377
        %v748 = vunpack.c.l.b16 %v378
        %v749 = vunpack.c.l.b16 %v379
        %v750 = vunpack.c.h.b16 %v379
        %v751 = vunpack.c.l.b16 %v380
        %v752 = vunpack.c.h.b16 %v380
        %v753 = vunpack.c.l.b16 %v381
        %v754 = vunpack.c.l.b16 %v382
        %v755 = vunpack.c.h.b16 %v382
        %v756 = vunpack.c.l.b16 %v383
        %v757 = vunpack.c.h.b16 %v383
        %v758 = vunpack.c.l.b16 %v384
        %v759 = vunpack.c.l.b16 %v385
        %v760 = vunpack.c.h.b16 %v385
        %v761 = vunpack.c.l.b16 %v386
        %v762 = vunpack.c.h.b16 %v386
        %v763 = vunpack.c.l.b16 %v387
        %v764 = vunpack.c.l.b16 %v388
        %v765 = vunpack.c.h.b16 %v388
        %v766 = vunpack.c.l.b16 %v389
        %v767 = vunpack.c.h.b16 %v389
        %v768 = vunpack.c.l.b16 %v390
        %v769 = vpack.c.b16 %v729, %v724
        %v770 = vpack.c.b16 %v730, %v725
        %v771 = vpack.c.b16 %v731, %v726
        %v772 = vpack.c.b16 %v732, %v727
        %v773 = vpack.c.b16 %v733, %v728
        %v774 = vpack.c.b16 %v739, %v734
        %v775 = vpack.c.b16 %v740, %v735
        %v776 = vpack.c.b16 %v741, %v736
        %v777 = vpack.c.b16 %v742, %v737
        %v778 = vpack.c.b16 %v743, %v738
        %v779 = vpack.c.b16 %v749, %v744
        %v780 = vpack.c.b16 %v750, %v745
        %v781 = vpack.c.b16 %v751, %v746
        %v782 = vpack.c.b16 %v752, %v747
        %v783 = vpack.c.b16 %v753, %v748
        %v784 = vpack.c.b16 %v759, %v754
        %v785 = vpack.c.b16 %v760, %v755
        %v786 = vpack.c.b16 %v761, %v756
        %v787 = vpack.c.b16 %v762, %v757
        %v788 = vpack.c.b16 %v763, %v758
        %v789 = vpack.c.b16 %v764, %v764
        %v790 = vpack.c.b16 %v765, %v765
        %v791 = vpack.c.b16 %v766, %v766
        %v792 = vpack.c.b16 %v767, %v767
        %v793 = vpack.c.b16 %v768, %v768
        %v814 = vsel %vm550, %v363, 0
        %v817 = vsel %vm554, %v789, 0
        %v820 = vsel %vm554, %v790, 0
        %v823 = vsel %vm554, %v791, 0
        %v826 = vsel %vm554, %v792, 0
        %v829 = vsel %vm554, %v793, 0
        %831 = vmatprep.subr.bf16.mxu0 %v770
        %832 = vmatpush1.bf16.msra.mxu0 %v769
        %833 = vmatprep.subr.bf16.mxu0 %v775
        %834 = vmatpush1.bf16.msra.mxu0 %v774
        %835 = vmatprep.subr.bf16.mxu0 %v780
        %836 = vmatpush1.bf16.msra.mxu0 %v779
        %837 = vmatprep.subr.bf16.mxu0 %v785
        %838 = vmatpush1.bf16.msra.mxu0 %v784
        %839 = vmatprep.subr.bf16.mxu0 %v820
        %840 = vmatpush1.bf16.msra.mxu0 %v817
        %841 = vmatprep.subr.bf16.mxu0 0
        %842 = vmatpush1.bf16.msra.mxu0 0
        %843 = vmatprep.subr.bf16.mxu0 0
        %844 = vmatpush1.bf16.msra.mxu0 0
        %845 = vmatprep.subr.bf16.mxu0 0
        %846 = vmatpush1.bf16.msra.mxu0 0
        %847 = vmatprep.subr.bf16.mxu0 0
        %848 = vmatpush1.bf16.msra.mxu0 0
        %849 = vmatprep.subr.bf16.mxu0 0
        %850 = vmatpush1.bf16.msra.mxu0 0
        %851 = vmatprep.subr.bf16.mxu0 0
        %852 = vmatpush1.bf16.msra.mxu0 0
        %853 = vmatprep.subr.bf16.mxu0 0
        %854 = vmatpush1.bf16.msra.mxu0 0
        %855 = vmatprep.subr.bf16.mxu0 0
        %856 = vmatpush1.bf16.msra.mxu0 0
        %857 = vmatprep.subr.bf16.mxu0 0
        %858 = vmatpush1.bf16.msra.mxu0 0
        %859 = vmatprep.subr.bf16.mxu0 0
        %860 = vmatpush1.bf16.msra.mxu0 0
        %861 = vmatprep.subr.bf16.mxu0 0
        %862 = vmatpush1.bf16.msra.mxu0 0
        %863 = vmatprep.mubr.bf16.mxu0 0
        %864 = vmatmul.mubr.bf16.gmra.mrb[0].mxu0 %v814
        %v865 = vpop.f32.mrb[0].mxu0
        %v866 = vadd.f32 %v605, %v865
        %v867 = vpop.f32.mrb[0].mxu0
        %v868 = vadd.f32 %v607, %v867
        %v869 = vpop.f32.mrb[0].mxu0
        %v870 = vadd.f32 %v609, %v869
        %v871 = vpop.f32.mrb[0].mxu0
        %v872 = vadd.f32 %v611, %v871
        %873 = vdwg.mxu0
        %874 = vmatprep.subr.bf16.mxu0 %v772
        %875 = vmatpush1.bf16.msra.mxu0 %v771
        %876 = vmatprep.subr.bf16.mxu0 %v777
        %877 = vmatpush1.bf16.msra.mxu0 %v776
        %878 = vmatprep.subr.bf16.mxu0 %v782
        %879 = vmatpush1.bf16.msra.mxu0 %v781
        %880 = vmatprep.subr.bf16.mxu0 %v787
        %881 = vmatpush1.bf16.msra.mxu0 %v786
        %882 = vmatprep.subr.bf16.mxu0 %v826
        %883 = vmatpush1.bf16.msra.mxu0 %v823
        %884 = vmatprep.subr.bf16.mxu0 0
        %885 = vmatpush1.bf16.msra.mxu0 0
        %886 = vmatprep.subr.bf16.mxu0 0
        %887 = vmatpush1.bf16.msra.mxu0 0
        %888 = vmatprep.subr.bf16.mxu0 0
        %889 = vmatpush1.bf16.msra.mxu0 0
        %890 = vmatprep.subr.bf16.mxu0 0
        %891 = vmatpush1.bf16.msra.mxu0 0
        %892 = vmatprep.subr.bf16.mxu0 0
        %893 = vmatpush1.bf16.msra.mxu0 0
        %894 = vmatprep.subr.bf16.mxu0 0
        %895 = vmatpush1.bf16.msra.mxu0 0
        %896 = vmatprep.subr.bf16.mxu0 0
        %897 = vmatpush1.bf16.msra.mxu0 0
        %898 = vmatprep.subr.bf16.mxu0 0
        %899 = vmatpush1.bf16.msra.mxu0 0
        %900 = vmatprep.subr.bf16.mxu0 0
        %901 = vmatpush1.bf16.msra.mxu0 0
        %902 = vmatprep.subr.bf16.mxu0 0
        %903 = vmatpush1.bf16.msra.mxu0 0
        %904 = vmatprep.subr.bf16.mxu0 0
        %905 = vmatpush1.bf16.msra.mxu0 0
        %906 = vmatprep.mubr.bf16.mxu0 0
        %907 = vmatmul.mubr.bf16.gmra.mrb[0].mxu0 %v814
        %v908 = vpop.f32.mrb[0].mxu0
        %v909 = vadd.f32 %v648, %v908
        %v910 = vpop.f32.mrb[0].mxu0
        %v911 = vadd.f32 %v650, %v910
        %v912 = vpop.f32.mrb[0].mxu0
        %v913 = vadd.f32 %v652, %v912
        %v914 = vpop.f32.mrb[0].mxu0
        %v915 = vadd.f32 %v654, %v914
        %916 = vdwg.mxu0
        %917 = vmatprep.subr.bf16.mxu0 0
        %918 = vmatpush1.bf16.msra.mxu0 %v773
        %919 = vmatprep.subr.bf16.mxu0 0
        %920 = vmatpush1.bf16.msra.mxu0 %v778
        %921 = vmatprep.subr.bf16.mxu0 0
        %922 = vmatpush1.bf16.msra.mxu0 %v783
        %923 = vmatprep.subr.bf16.mxu0 0
        %924 = vmatpush1.bf16.msra.mxu0 %v788
        %925 = vmatprep.subr.bf16.mxu0 0
        %926 = vmatpush1.bf16.msra.mxu0 %v829
        %927 = vmatprep.subr.bf16.mxu0 0
        %928 = vmatpush1.bf16.msra.mxu0 0
        %929 = vmatprep.subr.bf16.mxu0 0
        %930 = vmatpush1.bf16.msra.mxu0 0
        %931 = vmatprep.subr.bf16.mxu0 0
        %932 = vmatpush1.bf16.msra.mxu0 0
        %933 = vmatprep.subr.bf16.mxu0 0
        %934 = vmatpush1.bf16.msra.mxu0 0
        %935 = vmatprep.subr.bf16.mxu0 0
        %936 = vmatpush1.bf16.msra.mxu0 0
        %937 = vmatprep.subr.bf16.mxu0 0
        %938 = vmatpush1.bf16.msra.mxu0 0
        %939 = vmatprep.subr.bf16.mxu0 0
        %940 = vmatpush1.bf16.msra.mxu0 0
        %941 = vmatprep.subr.bf16.mxu0 0
        %942 = vmatpush1.bf16.msra.mxu0 0
        %943 = vmatprep.subr.bf16.mxu0 0
        %944 = vmatpush1.bf16.msra.mxu0 0
        %945 = vmatprep.subr.bf16.mxu0 0
        %946 = vmatpush1.bf16.msra.mxu0 0
        %947 = vmatprep.subr.bf16.mxu0 0
        %948 = vmatpush1.bf16.msra.mxu0 0
        %949 = vmatprep.mubr.bf16.mxu0 0
        %950 = vmatmul.mubr.bf16.gmra.mrb[0].mxu0 %v814
        %v951 = vpop.f32.mrb[0].mxu0
        %v952 = vadd.f32 %v691, %v951
        %v953 = vpop.f32.mrb[0].mxu0
        %v954 = vpop.f32.mrb[0].mxu0
        %v955 = vadd.f32 %v694, %v954
        %v956 = vpop.f32.mrb[0].mxu0
        %957 = vdwg.mxu0
        %s958 = scalar_lea.vmem [#allocation2], 360
        %v959 = vld [vmem:[%s958] sm:$0xff]
        %v960 = vld [vmem:[%s958 + $0x8] sm:$0xff]
        %v961 = vld [vmem:[%s958 + $0x10] sm:$0xf]
        %v962 = vld [vmem:[%s958 + $0x14] sm:$0xff]
        %v963 = vld [vmem:[%s958 + $0x1c] sm:$0xff]
        %v964 = vld [vmem:[%s958 + $0x24] sm:$0xf]
        %v965 = vld [vmem:[%s958 + $0x28] sm:$0xff]
        %v966 = vld [vmem:[%s958 + $0x30] sm:$0xff]
        %v967 = vld [vmem:[%s958 + $0x38] sm:$0xf]
        %v968 = vld [vmem:[%s958 + $0x3c] sm:$0xff]
        %v969 = vld [vmem:[%s958 + $0x44] sm:$0xff]
        %v970 = vld [vmem:[%s958 + $0x4c] sm:$0xf]
        %v971 = vld [vmem:[%s958 + $0x50] sm:$0xff]
        %v972 = vld [vmem:[%s958 + $0x58] sm:$0xff]
        %v973 = vld [vmem:[%s958 + $0x60] sm:$0xf]
        %v974 = vld [vmem:[%s958 + $0x64] sm:$0xff]
        %v975 = vld [vmem:[%s958 + $0x6c] sm:$0xff]
        %v976 = vld [vmem:[%s958 + $0x74] sm:$0xf]
        %v977 = vld [vmem:[%s958 + $0x78] sm:$0xff]
        %v978 = vld [vmem:[%s958 + $0x80] sm:$0xff]
        %v979 = vld [vmem:[%s958 + $0x88] sm:$0xf]
        %v980 = vld [vmem:[%s958 + $0x8c] sm:$0xff]
        %v981 = vld [vmem:[%s958 + $0x94] sm:$0xff]
        %v982 = vld [vmem:[%s958 + $0x9c] sm:$0xf]
        %v983 = vld [vmem:[%s958 + $0xa0] sm:$0xff]
        %v984 = vld [vmem:[%s958 + $0xa8] sm:$0xff]
        %v985 = vld [vmem:[%s958 + $0xb0] sm:$0xf]
        %vm988 = vcmask 1046528
        %v989 = vrot.slane %v363, 1
        %v990 = vrot.slane %v391, 1
        %v991 = vsel %vm988, %v989, %v990
        %v1019 = vunpack.c.l.b16 %v959
        %v1020 = vunpack.c.h.b16 %v959
        %v1021 = vunpack.c.l.b16 %v960
        %v1022 = vunpack.c.h.b16 %v960
        %v1023 = vunpack.c.l.b16 %v961
        %v1024 = vunpack.c.l.b16 %v962
        %v1025 = vunpack.c.h.b16 %v962
        %v1026 = vunpack.c.l.b16 %v963
        %v1027 = vunpack.c.h.b16 %v963
        %v1028 = vunpack.c.l.b16 %v964
        %v1029 = vunpack.c.l.b16 %v965
        %v1030 = vunpack.c.h.b16 %v965
        %v1031 = vunpack.c.l.b16 %v966
        %v1032 = vunpack.c.h.b16 %v966
        %v1033 = vunpack.c.l.b16 %v967
        %v1034 = vunpack.c.l.b16 %v968
        %v1035 = vunpack.c.h.b16 %v968
        %v1036 = vunpack.c.l.b16 %v969
        %v1037 = vunpack.c.h.b16 %v969
        %v1038 = vunpack.c.l.b16 %v970
        %v1039 = vunpack.c.l.b16 %v971
        %v1040 = vunpack.c.h.b16 %v971
        %v1041 = vunpack.c.l.b16 %v972
        %v1042 = vunpack.c.h.b16 %v972
        %v1043 = vunpack.c.l.b16 %v973
        %v1044 = vunpack.c.l.b16 %v974
        %v1045 = vunpack.c.h.b16 %v974
        %v1046 = vunpack.c.l.b16 %v975
        %v1047 = vunpack.c.h.b16 %v975
        %v1048 = vunpack.c.l.b16 %v976
        %v1049 = vunpack.c.l.b16 %v977
        %v1050 = vunpack.c.h.b16 %v977
        %v1051 = vunpack.c.l.b16 %v978
        %v1052 = vunpack.c.h.b16 %v978
        %v1053 = vunpack.c.l.b16 %v979
        %v1054 = vunpack.c.l.b16 %v980
        %v1055 = vunpack.c.h.b16 %v980
        %v1056 = vunpack.c.l.b16 %v981
        %v1057 = vunpack.c.h.b16 %v981
        %v1058 = vunpack.c.l.b16 %v982
        %v1059 = vunpack.c.l.b16 %v983
        %v1060 = vunpack.c.h.b16 %v983
        %v1061 = vunpack.c.l.b16 %v984
        %v1062 = vunpack.c.h.b16 %v984
        %v1063 = vunpack.c.l.b16 %v985
        %v1064 = vpack.c.b16 %v1024, %v1019
        %v1065 = vpack.c.b16 %v1025, %v1020
        %v1066 = vpack.c.b16 %v1026, %v1021
        %v1067 = vpack.c.b16 %v1027, %v1022
        %v1068 = vpack.c.b16 %v1028, %v1023
        %v1069 = vpack.c.b16 %v1034, %v1029
        %v1070 = vpack.c.b16 %v1035, %v1030
        %v1071 = vpack.c.b16 %v1036, %v1031
        %v1072 = vpack.c.b16 %v1037, %v1032
        %v1073 = vpack.c.b16 %v1038, %v1033
        %v1074 = vpack.c.b16 %v1044, %v1039
        %v1075 = vpack.c.b16 %v1045, %v1040
        %v1076 = vpack.c.b16 %v1046, %v1041
        %v1077 = vpack.c.b16 %v1047, %v1042
        %v1078 = vpack.c.b16 %v1048, %v1043
        %v1079 = vpack.c.b16 %v1054, %v1049
        %v1080 = vpack.c.b16 %v1055, %v1050
        %v1081 = vpack.c.b16 %v1056, %v1051
        %v1082 = vpack.c.b16 %v1057, %v1052
        %v1083 = vpack.c.b16 %v1058, %v1053
        %v1084 = vpack.c.b16 %v1059, %v1059
        %v1085 = vpack.c.b16 %v1060, %v1060
        %v1086 = vpack.c.b16 %v1061, %v1061
        %v1087 = vpack.c.b16 %v1062, %v1062
        %v1088 = vpack.c.b16 %v1063, %v1063
        %v1110 = vsel %vm550, %v991, 0
        %v1113 = vsel %vm554, %v1084, 0
        %v1116 = vsel %vm554, %v1085, 0
        %v1119 = vsel %vm554, %v1086, 0
        %v1122 = vsel %vm554, %v1087, 0
        %v1125 = vsel %vm554, %v1088, 0
        %1127 = vmatprep.subr.bf16.mxu0 %v1065
        %1128 = vmatpush1.bf16.msra.mxu0 %v1064
        %1129 = vmatprep.subr.bf16.mxu0 %v1070
        %1130 = vmatpush1.bf16.msra.mxu0 %v1069
        %1131 = vmatprep.subr.bf16.mxu0 %v1075
        %1132 = vmatpush1.bf16.msra.mxu0 %v1074
        %1133 = vmatprep.subr.bf16.mxu0 %v1080
        %1134 = vmatpush1.bf16.msra.mxu0 %v1079
        %1135 = vmatprep.subr.bf16.mxu0 %v1116
        %1136 = vmatpush1.bf16.msra.mxu0 %v1113
        %1137 = vmatprep.subr.bf16.mxu0 0
        %1138 = vmatpush1.bf16.msra.mxu0 0
        %1139 = vmatprep.subr.bf16.mxu0 0
        %1140 = vmatpush1.bf16.msra.mxu0 0
        %1141 = vmatprep.subr.bf16.mxu0 0
        %1142 = vmatpush1.bf16.msra.mxu0 0
        %1143 = vmatprep.subr.bf16.mxu0 0
        %1144 = vmatpush1.bf16.msra.mxu0 0
        %1145 = vmatprep.subr.bf16.mxu0 0
        %1146 = vmatpush1.bf16.msra.mxu0 0
        %1147 = vmatprep.subr.bf16.mxu0 0
        %1148 = vmatpush1.bf16.msra.mxu0 0
        %1149 = vmatprep.subr.bf16.mxu0 0
        %1150 = vmatpush1.bf16.msra.mxu0 0
        %1151 = vmatprep.subr.bf16.mxu0 0
        %1152 = vmatpush1.bf16.msra.mxu0 0
        %1153 = vmatprep.subr.bf16.mxu0 0
        %1154 = vmatpush1.bf16.msra.mxu0 0
        %1155 = vmatprep.subr.bf16.mxu0 0
        %1156 = vmatpush1.bf16.msra.mxu0 0
        %1157 = vmatprep.subr.bf16.mxu0 0
        %1158 = vmatpush1.bf16.msra.mxu0 0
        %1159 = vmatprep.mubr.bf16.mxu0 0
        %1160 = vmatmul.mubr.bf16.gmra.mrb[0].mxu0 %v1110
        %v1161 = vpop.f32.mrb[0].mxu0
        %v1162 = vadd.f32 0.0, %v1161
        %v1163 = vpop.f32.mrb[0].mxu0
        %v1164 = vadd.f32 0.0, %v1163
        %v1165 = vpop.f32.mrb[0].mxu0
        %v1166 = vadd.f32 0.0, %v1165
        %v1167 = vpop.f32.mrb[0].mxu0
        %v1168 = vadd.f32 0.0, %v1167
        %1169 = vdwg.mxu0
        %1170 = vmatprep.subr.bf16.mxu0 %v1067
        %1171 = vmatpush1.bf16.msra.mxu0 %v1066
        %1172 = vmatprep.subr.bf16.mxu0 %v1072
        %1173 = vmatpush1.bf16.msra.mxu0 %v1071
        %1174 = vmatprep.subr.bf16.mxu0 %v1077
        %1175 = vmatpush1.bf16.msra.mxu0 %v1076
        %1176 = vmatprep.subr.bf16.mxu0 %v1082
        %1177 = vmatpush1.bf16.msra.mxu0 %v1081
        %1178 = vmatprep.subr.bf16.mxu0 %v1122
        %1179 = vmatpush1.bf16.msra.mxu0 %v1119
        %1180 = vmatprep.subr.bf16.mxu0 0
        %1181 = vmatpush1.bf16.msra.mxu0 0
        %1182 = vmatprep.subr.bf16.mxu0 0
        %1183 = vmatpush1.bf16.msra.mxu0 0
        %1184 = vmatprep.subr.bf16.mxu0 0
        %1185 = vmatpush1.bf16.msra.mxu0 0
        %1186 = vmatprep.subr.bf16.mxu0 0
        %1187 = vmatpush1.bf16.msra.mxu0 0
        %1188 = vmatprep.subr.bf16.mxu0 0
        %1189 = vmatpush1.bf16.msra.mxu0 0
        %1190 = vmatprep.subr.bf16.mxu0 0
        %1191 = vmatpush1.bf16.msra.mxu0 0
        %1192 = vmatprep.subr.bf16.mxu0 0
        %1193 = vmatpush1.bf16.msra.mxu0 0
        %1194 = vmatprep.subr.bf16.mxu0 0
        %1195 = vmatpush1.bf16.msra.mxu0 0
        %1196 = vmatprep.subr.bf16.mxu0 0
        %1197 = vmatpush1.bf16.msra.mxu0 0
        %1198 = vmatprep.subr.bf16.mxu0 0
        %1199 = vmatpush1.bf16.msra.mxu0 0
        %1200 = vmatprep.subr.bf16.mxu0 0
        %1201 = vmatpush1.bf16.msra.mxu0 0
        %1202 = vmatprep.mubr.bf16.mxu0 0
        %1203 = vmatmul.mubr.bf16.gmra.mrb[0].mxu0 %v1110
        %v1204 = vpop.f32.mrb[0].mxu0
        %v1205 = vadd.f32 0.0, %v1204
        %v1206 = vpop.f32.mrb[0].mxu0
        %v1207 = vadd.f32 0.0, %v1206
        %v1208 = vpop.f32.mrb[0].mxu0
        %v1209 = vadd.f32 0.0, %v1208
        %v1210 = vpop.f32.mrb[0].mxu0
        %v1211 = vadd.f32 0.0, %v1210
        %1212 = vdwg.mxu0
        %1213 = vmatprep.subr.bf16.mxu0 0
        %1214 = vmatpush1.bf16.msra.mxu0 %v1068
        %1215 = vmatprep.subr.bf16.mxu0 0
        %1216 = vmatpush1.bf16.msra.mxu0 %v1073
        %1217 = vmatprep.subr.bf16.mxu0 0
        %1218 = vmatpush1.bf16.msra.mxu0 %v1078
        %1219 = vmatprep.subr.bf16.mxu0 0
        %1220 = vmatpush1.bf16.msra.mxu0 %v1083
        %1221 = vmatprep.subr.bf16.mxu0 0
        %1222 = vmatpush1.bf16.msra.mxu0 %v1125
        %1223 = vmatprep.subr.bf16.mxu0 0
        %1224 = vmatpush1.bf16.msra.mxu0 0
        %1225 = vmatprep.subr.bf16.mxu0 0
        %1226 = vmatpush1.bf16.msra.mxu0 0
        %1227 = vmatprep.subr.bf16.mxu0 0
        %1228 = vmatpush1.bf16.msra.mxu0 0
        %1229 = vmatprep.subr.bf16.mxu0 0
        %1230 = vmatpush1.bf16.msra.mxu0 0
        %1231 = vmatprep.subr.bf16.mxu0 0
        %1232 = vmatpush1.bf16.msra.mxu0 0
        %1233 = vmatprep.subr.bf16.mxu0 0
        %1234 = vmatpush1.bf16.msra.mxu0 0
        %1235 = vmatprep.subr.bf16.mxu0 0
        %1236 = vmatpush1.bf16.msra.mxu0 0
        %1237 = vmatprep.subr.bf16.mxu0 0
        %1238 = vmatpush1.bf16.msra.mxu0 0
        %1239 = vmatprep.subr.bf16.mxu0 0
        %1240 = vmatpush1.bf16.msra.mxu0 0
        %1241 = vmatprep.subr.bf16.mxu0 0
        %1242 = vmatpush1.bf16.msra.mxu0 0
        %1243 = vmatprep.subr.bf16.mxu0 0
        %1244 = vmatpush1.bf16.msra.mxu0 0
        %1245 = vmatprep.mubr.bf16.mxu0 0
        %1246 = vmatmul.mubr.bf16.gmra.mrb[0].mxu0 %v1110
        %v1247 = vpop.f32.mrb[0].mxu0
        %v1248 = vadd.f32 0.0, %v1247
        %v1249 = vpop.f32.mrb[0].mxu0
        %v1250 = vpop.f32.mrb[0].mxu0
        %v1251 = vadd.f32 0.0, %v1250
        %v1252 = vpop.f32.mrb[0].mxu0
        %1253 = vdwg.mxu0
        %v1254 = vadd.f32 %v866, %v1162
        %v1255 = vadd.f32 %v868, %v1164
        %v1256 = vadd.f32 %v909, %v1205
        %v1257 = vadd.f32 %v911, %v1207
        %v1258 = vadd.f32 %v952, %v1248
        %v1259 = vadd.f32 %v870, %v1166
        %v1260 = vadd.f32 %v872, %v1168
        %v1261 = vadd.f32 %v913, %v1209
        %v1262 = vadd.f32 %v915, %v1211
        %v1263 = vadd.f32 %v955, %v1251
        %v1264 = vld [vmem:[#allocation4] sm:$0x1f]
        %v1266 = vlaneseq
        %v1267 = vshrl.u32 %v1266, 7
        %v1268 = vsub.s32 0, %v1267
        %v1269 = vrot.slane %v1264, %v1268
        %v1270 = vlaneseq
        %v1271 = vshrl.u32 %v1270, 7
        %v1272 = vsub.s32 1, %v1271
        %v1273 = vrot.slane %v1264, %v1272
        %v1274 = vlaneseq
        %v1275 = vshrl.u32 %v1274, 7
        %v1276 = vsub.s32 2, %v1275
        %v1277 = vrot.slane %v1264, %v1276
        %v1278 = vlaneseq
        %v1279 = vshrl.u32 %v1278, 7
        %v1280 = vsub.s32 3, %v1279
        %v1281 = vrot.slane %v1264, %v1280
        %v1282 = vlaneseq
        %v1283 = vshrl.u32 %v1282, 7
        %v1284 = vsub.s32 4, %v1283
        %v1285 = vrot.slane %v1264, %v1284
        %v1291 = vmul.f32 %v1254, %v1269
        %v1292 = vmul.f32 %v1255, %v1273
        %v1293 = vmul.f32 %v1256, %v1277
        %v1294 = vmul.f32 %v1257, %v1281
        %v1295 = vmul.f32 %v1258, %v1285
        %v1296 = vmul.f32 %v1259, %v1269
        %v1297 = vmul.f32 %v1260, %v1273
        %v1298 = vmul.f32 %v1261, %v1277
        %v1299 = vmul.f32 %v1262, %v1281
        %v1300 = vmul.f32 %v1263, %v1285
        %v1301 = vld [vmem:[#allocation6] sm:$0x1f]
        %v1303 = vlaneseq
        %v1304 = vshrl.u32 %v1303, 7
        %v1305 = vsub.s32 0, %v1304
        %v1306 = vrot.slane %v1301, %v1305
        %v1307 = vlaneseq
        %v1308 = vshrl.u32 %v1307, 7
        %v1309 = vsub.s32 1, %v1308
        %v1310 = vrot.slane %v1301, %v1309
        %v1311 = vlaneseq
        %v1312 = vshrl.u32 %v1311, 7
        %v1313 = vsub.s32 2, %v1312
        %v1314 = vrot.slane %v1301, %v1313
        %v1315 = vlaneseq
        %v1316 = vshrl.u32 %v1315, 7
        %v1317 = vsub.s32 3, %v1316
        %v1318 = vrot.slane %v1301, %v1317
        %v1319 = vlaneseq
        %v1320 = vshrl.u32 %v1319, 7
        %v1321 = vsub.s32 4, %v1320
        %v1322 = vrot.slane %v1301, %v1321
        %v1328 = vadd.f32 %v1291, %v1306
        %v1329 = vadd.f32 %v1292, %v1310
        %v1330 = vadd.f32 %v1293, %v1314
        %v1331 = vadd.f32 %v1294, %v1318
        %v1332 = vadd.f32 %v1295, %v1322
        %v1333 = vadd.f32 %v1296, %v1306
        %v1334 = vadd.f32 %v1297, %v1310
        %v1335 = vadd.f32 %v1298, %v1314
        %v1336 = vadd.f32 %v1299, %v1318
        %v1337 = vadd.f32 %v1300, %v1322
        %v1338 = vmax.f32 %v1328, 0.0
        %v1339 = vmax.f32 %v1329, 0.0
        %v1340 = vmax.f32 %v1330, 0.0
        %v1341 = vmax.f32 %v1331, 0.0
        %v1342 = vmax.f32 %v1332, 0.0
        %v1343 = vmax.f32 %v1333, 0.0
        %v1344 = vmax.f32 %v1334, 0.0
        %v1345 = vmax.f32 %v1335, 0.0
        %v1346 = vmax.f32 %v1336, 0.0
        %v1347 = vmax.f32 %v1337, 0.0
        %vm1358 = vcmask 1040384
        %v1359 = vrot.slane %v1338, 7
        %v1360 = vrot.slane %v1339, 7
        %v1361 = vrot.slane %v1340, 7
        %v1362 = vrot.slane %v1341, 7
        %v1363 = vrot.slane %v1342, 7
        %v1364 = vrot.slane %v1343, 7
        %v1365 = vsel %vm1358, %v1359, %v1364
        %v1366 = vrot.slane %v1344, 7
        %v1367 = vsel %vm1358, %v1360, %v1366
        %v1368 = vrot.slane %v1345, 7
        %v1369 = vsel %vm1358, %v1361, %v1368
        %v1370 = vrot.slane %v1346, 7
        %v1371 = vsel %vm1358, %v1362, %v1370
        %v1372 = vrot.slane %v1347, 7
        %v1373 = vsel %vm1358, %v1363, %v1372
        %v1389 = vsel %vm1358, 0.0, %v1359
        %v1390 = vsel %vm1358, 0.0, %v1360
        %v1391 = vsel %vm1358, 0.0, %v1361
        %v1392 = vsel %vm1358, 0.0, %v1362
        %v1393 = vsel %vm1358, 0.0, %v1363
        %v1394 = vsel %vm1358, %v1364, 0.0
        %v1395 = vsel %vm1358, %v1366, 0.0
        %v1396 = vsel %vm1358, %v1368, 0.0
        %v1397 = vsel %vm1358, %v1370, 0.0
        %v1398 = vsel %vm1358, %v1372, 0.0
        %v1399 = vpack.c.bf16 %v1365, %v1389
        %v1400 = vpack.c.bf16 %v1367, %v1390
        %v1401 = vpack.c.bf16 %v1369, %v1391
        %v1402 = vpack.c.bf16 %v1371, %v1392
        %v1403 = vpack.c.bf16 %v1373, %v1393
        %v1404 = vld [vmem:[#allocation7] sm:$0xff]
        %v1405 = vld [vmem:[#allocation7 + $0x8] sm:$0xff]
        %v1406 = vld [vmem:[#allocation7 + $0x10] sm:$0xff]
        %v1407 = vld [vmem:[#allocation7 + $0x18] sm:$0xff]
        %v1408 = vld [vmem:[#allocation7 + $0x20] sm:$0xff]
        %v1409 = vld [vmem:[#allocation7 + $0x28] sm:$0xff]
        %v1410 = vld [vmem:[#allocation7 + $0x30] sm:$0xff]
        %v1411 = vld [vmem:[#allocation7 + $0x38] sm:$0xff]
        %v1412 = vld [vmem:[#allocation7 + $0x40] sm:$0xff]
        %v1413 = vld [vmem:[#allocation7 + $0x48] sm:$0xff]
        %v1414 = vld [vmem:[#allocation7 + $0x50] sm:$0xff]
        %v1415 = vld [vmem:[#allocation7 + $0x58] sm:$0xff]
        %v1416 = vld [vmem:[#allocation7 + $0x60] sm:$0xff]
        %v1417 = vld [vmem:[#allocation7 + $0x68] sm:$0xff]
        %v1418 = vld [vmem:[#allocation7 + $0x70] sm:$0xff]
        %v1419 = vld [vmem:[#allocation7 + $0x78] sm:$0xff]
        %v1420 = vld [vmem:[#allocation7 + $0x80] sm:$0xff]
        %v1421 = vld [vmem:[#allocation7 + $0x88] sm:$0xff]
        %v1422 = vld [vmem:[#allocation7 + $0x90] sm:$0xff]
        %v1423 = vld [vmem:[#allocation7 + $0x98] sm:$0xff]
        %v1424 = vld [vmem:[#allocation7 + $0xa0] sm:$0xff]
        %v1425 = vld [vmem:[#allocation7 + $0xa8] sm:$0xff]
        %v1426 = vld [vmem:[#allocation7 + $0xb0] sm:$0xff]
        %v1427 = vld [vmem:[#allocation7 + $0xb8] sm:$0xff]
        %v1428 = vld [vmem:[#allocation7 + $0xc0] sm:$0xff]
        %v1429 = vld [vmem:[#allocation7 + $0xc8] sm:$0xff]
        %v1430 = vld [vmem:[#allocation7 + $0xd0] sm:$0xff]
        %v1431 = vld [vmem:[#allocation7 + $0xd8] sm:$0xff]
        %v1432 = vld [vmem:[#allocation7 + $0xe0] sm:$0xff]
        %v1433 = vld [vmem:[#allocation7 + $0xe8] sm:$0xff]
        %v1434 = vld [vmem:[#allocation7 + $0xf0] sm:$0xff]
        %v1435 = vld [vmem:[#allocation7 + $0xf8] sm:$0xff]
        %v1436 = vld [vmem:[#allocation7 + $0x100] sm:$0xff]
        %v1437 = vld [vmem:[#allocation7 + $0x108] sm:$0xff]
        %v1438 = vld [vmem:[#allocation7 + $0x110] sm:$0xff]
        %v1439 = vld [vmem:[#allocation7 + $0x118] sm:$0xff]
        %v1440 = vld [vmem:[#allocation7 + $0x120] sm:$0xff]
        %v1441 = vld [vmem:[#allocation7 + $0x128] sm:$0xff]
        %v1442 = vld [vmem:[#allocation7 + $0x130] sm:$0xff]
        %v1443 = vld [vmem:[#allocation7 + $0x138] sm:$0xff]
        %v1444 = vld [vmem:[#allocation7 + $0x140] sm:$0xff]
        %v1445 = vld [vmem:[#allocation7 + $0x148] sm:$0xff]
        %v1446 = vld [vmem:[#allocation7 + $0x150] sm:$0xff]
        %v1447 = vld [vmem:[#allocation7 + $0x158] sm:$0xff]
        %v1448 = vld [vmem:[#allocation7 + $0x160] sm:$0xff]
        %v1449 = vld [vmem:[#allocation7 + $0x168] sm:$0xff]
        %v1450 = vld [vmem:[#allocation7 + $0x170] sm:$0xff]
        %v1451 = vld [vmem:[#allocation7 + $0x178] sm:$0xff]
        %v1452 = vld [vmem:[#allocation7 + $0x180] sm:$0xff]
        %v1453 = vld [vmem:[#allocation7 + $0x188] sm:$0xff]
        %v1454 = vld [vmem:[#allocation7 + $0x190] sm:$0xff]
        %v1455 = vld [vmem:[#allocation7 + $0x198] sm:$0xff]
        %v1456 = vld [vmem:[#allocation7 + $0x1a0] sm:$0xff]
        %v1457 = vld [vmem:[#allocation7 + $0x1a8] sm:$0xff]
        %v1458 = vld [vmem:[#allocation7 + $0x1b0] sm:$0xff]
        %v1459 = vld [vmem:[#allocation7 + $0x1b8] sm:$0xff]
        %v1460 = vld [vmem:[#allocation7 + $0x1c0] sm:$0xff]
        %v1461 = vld [vmem:[#allocation7 + $0x1c8] sm:$0xff]
        %v1462 = vld [vmem:[#allocation7 + $0x1d0] sm:$0xff]
        %v1463 = vld [vmem:[#allocation7 + $0x1d8] sm:$0xff]
        %v1464 = vld [vmem:[#allocation7 + $0x1e0] sm:$0xff]
        %v1465 = vld [vmem:[#allocation7 + $0x1e8] sm:$0xff]
        %v1466 = vld [vmem:[#allocation7 + $0x1f0] sm:$0xff]
        %v1467 = vld [vmem:[#allocation7 + $0x1f8] sm:$0xff]
        %v1468 = vld [vmem:[#allocation7 + $0x200] sm:$0xff]
        %v1469 = vld [vmem:[#allocation7 + $0x208] sm:$0xff]
        %v1470 = vld [vmem:[#allocation7 + $0x210] sm:$0xff]
        %v1471 = vld [vmem:[#allocation7 + $0x218] sm:$0xff]
        %v1472 = vld [vmem:[#allocation7 + $0x220] sm:$0xff]
        %v1473 = vld [vmem:[#allocation7 + $0x228] sm:$0xff]
        %v1474 = vld [vmem:[#allocation7 + $0x230] sm:$0xff]
        %v1475 = vld [vmem:[#allocation7 + $0x238] sm:$0xff]
        %v1476 = vld [vmem:[#allocation7 + $0x240] sm:$0xff]
        %v1477 = vld [vmem:[#allocation7 + $0x248] sm:$0xff]
        %v1478 = vld [vmem:[#allocation7 + $0x250] sm:$0xff]
        %v1479 = vld [vmem:[#allocation7 + $0x258] sm:$0xff]
        %v1480 = vld [vmem:[#allocation7 + $0x260] sm:$0xff]
        %v1481 = vld [vmem:[#allocation7 + $0x268] sm:$0xff]
        %v1482 = vld [vmem:[#allocation7 + $0x270] sm:$0xff]
        %v1483 = vld [vmem:[#allocation7 + $0x278] sm:$0xff]
        %v1484 = vld [vmem:[#allocation7 + $0x280] sm:$0xff]
        %v1485 = vld [vmem:[#allocation7 + $0x288] sm:$0xff]
        %v1486 = vld [vmem:[#allocation7 + $0x290] sm:$0xff]
        %v1487 = vld [vmem:[#allocation7 + $0x298] sm:$0xff]
        %v1488 = vld [vmem:[#allocation7 + $0x2a0] sm:$0xff]
        %v1489 = vld [vmem:[#allocation7 + $0x2a8] sm:$0xff]
        %v1490 = vld [vmem:[#allocation7 + $0x2b0] sm:$0xff]
        %v1491 = vld [vmem:[#allocation7 + $0x2b8] sm:$0xff]
        %v1492 = vld [vmem:[#allocation7 + $0x2c0] sm:$0xff]
        %v1493 = vld [vmem:[#allocation7 + $0x2c8] sm:$0xff]
        %v1494 = vld [vmem:[#allocation7 + $0x2d0] sm:$0xff]
        %v1495 = vld [vmem:[#allocation7 + $0x2d8] sm:$0xff]
        %v1496 = vld [vmem:[#allocation7 + $0x2e0] sm:$0xff]
        %v1497 = vld [vmem:[#allocation7 + $0x2e8] sm:$0xff]
        %v1498 = vld [vmem:[#allocation7 + $0x2f0] sm:$0xff]
        %v1499 = vld [vmem:[#allocation7 + $0x2f8] sm:$0xff]
        %v1500 = vld [vmem:[#allocation7 + $0x300] sm:$0xff]
        %v1501 = vld [vmem:[#allocation7 + $0x308] sm:$0xff]
        %v1502 = vld [vmem:[#allocation7 + $0x310] sm:$0xff]
        %v1503 = vld [vmem:[#allocation7 + $0x318] sm:$0xff]
        %v1504 = vld [vmem:[#allocation7 + $0x320] sm:$0xff]
        %v1505 = vld [vmem:[#allocation7 + $0x328] sm:$0xff]
        %v1506 = vld [vmem:[#allocation7 + $0x330] sm:$0xff]
        %v1507 = vld [vmem:[#allocation7 + $0x338] sm:$0xff]
        %v1508 = vld [vmem:[#allocation7 + $0x340] sm:$0xff]
        %v1509 = vld [vmem:[#allocation7 + $0x348] sm:$0xff]
        %v1510 = vld [vmem:[#allocation7 + $0x350] sm:$0xff]
        %v1511 = vld [vmem:[#allocation7 + $0x358] sm:$0xff]
        %v1512 = vld [vmem:[#allocation7 + $0x360] sm:$0xff]
        %v1513 = vld [vmem:[#allocation7 + $0x368] sm:$0xff]
        %v1514 = vld [vmem:[#allocation7 + $0x370] sm:$0xff]
        %v1515 = vld [vmem:[#allocation7 + $0x378] sm:$0xff]
        %v1516 = vld [vmem:[#allocation7 + $0x380] sm:$0xff]
        %v1517 = vld [vmem:[#allocation7 + $0x388] sm:$0xff]
        %v1518 = vld [vmem:[#allocation7 + $0x390] sm:$0xff]
        %v1519 = vld [vmem:[#allocation7 + $0x398] sm:$0xff]
        %v1520 = vld [vmem:[#allocation7 + $0x3a0] sm:$0xff]
        %v1521 = vld [vmem:[#allocation7 + $0x3a8] sm:$0xff]
        %v1522 = vld [vmem:[#allocation7 + $0x3b0] sm:$0xff]
        %v1523 = vld [vmem:[#allocation7 + $0x3b8] sm:$0xff]
        %v1524 = vld [vmem:[#allocation7 + $0x3c0] sm:$0xff]
        %v1525 = vld [vmem:[#allocation7 + $0x3c8] sm:$0xff]
        %v1526 = vld [vmem:[#allocation7 + $0x3d0] sm:$0xff]
        %v1527 = vld [vmem:[#allocation7 + $0x3d8] sm:$0xff]
        %v1528 = vld [vmem:[#allocation7 + $0x3e0] sm:$0xff]
        %v1529 = vld [vmem:[#allocation7 + $0x3e8] sm:$0xff]
        %v1530 = vld [vmem:[#allocation7 + $0x3f0] sm:$0xff]
        %v1531 = vld [vmem:[#allocation7 + $0x3f8] sm:$0xff]
        %v1532 = vld [vmem:[#allocation7 + $0x400] sm:$0xff]
        %v1533 = vld [vmem:[#allocation7 + $0x408] sm:$0xff]
        %v1534 = vld [vmem:[#allocation7 + $0x410] sm:$0xff]
        %v1535 = vld [vmem:[#allocation7 + $0x418] sm:$0xff]
        %v1536 = vld [vmem:[#allocation7 + $0x420] sm:$0xff]
        %v1537 = vld [vmem:[#allocation7 + $0x428] sm:$0xff]
        %v1538 = vld [vmem:[#allocation7 + $0x430] sm:$0xff]
        %v1539 = vld [vmem:[#allocation7 + $0x438] sm:$0xff]
        %v1540 = vld [vmem:[#allocation7 + $0x440] sm:$0xff]
        %v1541 = vld [vmem:[#allocation7 + $0x448] sm:$0xff]
        %v1542 = vld [vmem:[#allocation7 + $0x450] sm:$0xff]
        %v1543 = vld [vmem:[#allocation7 + $0x458] sm:$0xff]
        %v1544 = vld [vmem:[#allocation7 + $0x460] sm:$0xff]
        %v1545 = vld [vmem:[#allocation7 + $0x468] sm:$0xff]
        %v1546 = vld [vmem:[#allocation7 + $0x470] sm:$0xff]
        %v1547 = vld [vmem:[#allocation7 + $0x478] sm:$0xff]
        %v1548 = vpack.c.bf16 %v1394, %v1394
        %v1549 = vpack.c.bf16 %v1395, %v1395
        %v1550 = vpack.c.bf16 %v1396, %v1396
        %v1551 = vpack.c.bf16 %v1397, %v1397
        %v1552 = vpack.c.bf16 %v1398, %v1398
        %s1553 = scalar_lea.vmem [#allocation7], 1152
        %v1554 = vld [vmem:[%s1553] sm:$0xff]
        %v1555 = vld [vmem:[%s1553 + $0x8] sm:$0xff]
        %v1556 = vld [vmem:[%s1553 + $0x10] sm:$0xff]
        %v1557 = vld [vmem:[%s1553 + $0x18] sm:$0xff]
        %v1558 = vld [vmem:[%s1553 + $0x20] sm:$0xff]
        %v1559 = vld [vmem:[%s1553 + $0x28] sm:$0xff]
        %v1560 = vld [vmem:[%s1553 + $0x30] sm:$0xff]
        %v1561 = vld [vmem:[%s1553 + $0x38] sm:$0xff]
        %v1562 = vld [vmem:[%s1553 + $0x40] sm:$0xff]
        %v1563 = vld [vmem:[%s1553 + $0x48] sm:$0xff]
        %v1564 = vld [vmem:[%s1553 + $0x50] sm:$0xff]
        %v1565 = vld [vmem:[%s1553 + $0x58] sm:$0xff]
        %v1566 = vld [vmem:[%s1553 + $0x60] sm:$0xff]
        %v1567 = vld [vmem:[%s1553 + $0x68] sm:$0xff]
        %v1568 = vld [vmem:[%s1553 + $0x70] sm:$0xff]
        %v1569 = vld [vmem:[%s1553 + $0x78] sm:$0xff]
        %v1570 = vld [vmem:[%s1553 + $0x80] sm:$0xff]
        %v1571 = vld [vmem:[%s1553 + $0x88] sm:$0xff]
        %v1572 = vld [vmem:[%s1553 + $0x90] sm:$0xff]
        %v1573 = vld [vmem:[%s1553 + $0x98] sm:$0xff]
        %v1574 = vld [vmem:[%s1553 + $0xa0] sm:$0xff]
        %v1575 = vld [vmem:[%s1553 + $0xa8] sm:$0xff]
        %v1576 = vld [vmem:[%s1553 + $0xb0] sm:$0xff]
        %v1577 = vld [vmem:[%s1553 + $0xb8] sm:$0xff]
        %v1578 = vld [vmem:[%s1553 + $0xc0] sm:$0xff]
        %v1579 = vld [vmem:[%s1553 + $0xc8] sm:$0xff]
        %v1580 = vld [vmem:[%s1553 + $0xd0] sm:$0xff]
        %v1581 = vld [vmem:[%s1553 + $0xd8] sm:$0xff]
        %v1582 = vld [vmem:[%s1553 + $0xe0] sm:$0xff]
        %v1583 = vld [vmem:[%s1553 + $0xe8] sm:$0xff]
        %v1584 = vld [vmem:[%s1553 + $0xf0] sm:$0xff]
        %v1585 = vld [vmem:[%s1553 + $0xf8] sm:$0xff]
        %v1586 = vld [vmem:[%s1553 + $0x100] sm:$0xff]
        %v1587 = vld [vmem:[%s1553 + $0x108] sm:$0xff]
        %v1588 = vld [vmem:[%s1553 + $0x110] sm:$0xff]
        %v1589 = vld [vmem:[%s1553 + $0x118] sm:$0xff]
        %v1590 = vld [vmem:[%s1553 + $0x120] sm:$0xff]
        %v1591 = vld [vmem:[%s1553 + $0x128] sm:$0xff]
        %v1592 = vld [vmem:[%s1553 + $0x130] sm:$0xff]
        %v1593 = vld [vmem:[%s1553 + $0x138] sm:$0xff]
        %v1594 = vld [vmem:[%s1553 + $0x140] sm:$0xff]
        %v1595 = vld [vmem:[%s1553 + $0x148] sm:$0xff]
        %v1596 = vld [vmem:[%s1553 + $0x150] sm:$0xff]
        %v1597 = vld [vmem:[%s1553 + $0x158] sm:$0xff]
        %v1598 = vld [vmem:[%s1553 + $0x160] sm:$0xff]
        %v1599 = vld [vmem:[%s1553 + $0x168] sm:$0xff]
        %v1600 = vld [vmem:[%s1553 + $0x170] sm:$0xff]
        %v1601 = vld [vmem:[%s1553 + $0x178] sm:$0xff]
        %v1602 = vld [vmem:[%s1553 + $0x180] sm:$0xff]
        %v1603 = vld [vmem:[%s1553 + $0x188] sm:$0xff]
        %v1604 = vld [vmem:[%s1553 + $0x190] sm:$0xff]
        %v1605 = vld [vmem:[%s1553 + $0x198] sm:$0xff]
        %v1606 = vld [vmem:[%s1553 + $0x1a0] sm:$0xff]
        %v1607 = vld [vmem:[%s1553 + $0x1a8] sm:$0xff]
        %v1608 = vld [vmem:[%s1553 + $0x1b0] sm:$0xff]
        %v1609 = vld [vmem:[%s1553 + $0x1b8] sm:$0xff]
        %v1610 = vld [vmem:[%s1553 + $0x1c0] sm:$0xff]
        %v1611 = vld [vmem:[%s1553 + $0x1c8] sm:$0xff]
        %v1612 = vld [vmem:[%s1553 + $0x1d0] sm:$0xff]
        %v1613 = vld [vmem:[%s1553 + $0x1d8] sm:$0xff]
        %v1614 = vld [vmem:[%s1553 + $0x1e0] sm:$0xff]
        %v1615 = vld [vmem:[%s1553 + $0x1e8] sm:$0xff]
        %v1616 = vld [vmem:[%s1553 + $0x1f0] sm:$0xff]
        %v1617 = vld [vmem:[%s1553 + $0x1f8] sm:$0xff]
        %v1618 = vld [vmem:[%s1553 + $0x200] sm:$0xff]
        %v1619 = vld [vmem:[%s1553 + $0x208] sm:$0xff]
        %v1620 = vld [vmem:[%s1553 + $0x210] sm:$0xff]
        %v1621 = vld [vmem:[%s1553 + $0x218] sm:$0xff]
        %v1622 = vld [vmem:[%s1553 + $0x220] sm:$0xff]
        %v1623 = vld [vmem:[%s1553 + $0x228] sm:$0xff]
        %v1624 = vld [vmem:[%s1553 + $0x230] sm:$0xff]
        %v1625 = vld [vmem:[%s1553 + $0x238] sm:$0xff]
        %v1626 = vld [vmem:[%s1553 + $0x240] sm:$0xff]
        %v1627 = vld [vmem:[%s1553 + $0x248] sm:$0xff]
        %v1628 = vld [vmem:[%s1553 + $0x250] sm:$0xff]
        %v1629 = vld [vmem:[%s1553 + $0x258] sm:$0xff]
        %v1630 = vld [vmem:[%s1553 + $0x260] sm:$0xff]
        %v1631 = vld [vmem:[%s1553 + $0x268] sm:$0xff]
        %v1632 = vld [vmem:[%s1553 + $0x270] sm:$0xff]
        %v1633 = vld [vmem:[%s1553 + $0x278] sm:$0xff]
        %v1634 = vld [vmem:[%s1553 + $0x280] sm:$0xff]
        %v1635 = vld [vmem:[%s1553 + $0x288] sm:$0xff]
        %v1636 = vld [vmem:[%s1553 + $0x290] sm:$0xff]
        %v1637 = vld [vmem:[%s1553 + $0x298] sm:$0xff]
        %v1638 = vld [vmem:[%s1553 + $0x2a0] sm:$0xff]
        %v1639 = vld [vmem:[%s1553 + $0x2a8] sm:$0xff]
        %v1640 = vld [vmem:[%s1553 + $0x2b0] sm:$0xff]
        %v1641 = vld [vmem:[%s1553 + $0x2b8] sm:$0xff]
        %v1642 = vld [vmem:[%s1553 + $0x2c0] sm:$0xff]
        %v1643 = vld [vmem:[%s1553 + $0x2c8] sm:$0xff]
        %v1644 = vld [vmem:[%s1553 + $0x2d0] sm:$0xff]
        %v1645 = vld [vmem:[%s1553 + $0x2d8] sm:$0xff]
        %v1646 = vld [vmem:[%s1553 + $0x2e0] sm:$0xff]
        %v1647 = vld [vmem:[%s1553 + $0x2e8] sm:$0xff]
        %v1648 = vld [vmem:[%s1553 + $0x2f0] sm:$0xff]
        %v1649 = vld [vmem:[%s1553 + $0x2f8] sm:$0xff]
        %v1650 = vld [vmem:[%s1553 + $0x300] sm:$0xff]
        %v1651 = vld [vmem:[%s1553 + $0x308] sm:$0xff]
        %v1652 = vld [vmem:[%s1553 + $0x310] sm:$0xff]
        %v1653 = vld [vmem:[%s1553 + $0x318] sm:$0xff]
        %v1654 = vld [vmem:[%s1553 + $0x320] sm:$0xff]
        %v1655 = vld [vmem:[%s1553 + $0x328] sm:$0xff]
        %v1656 = vld [vmem:[%s1553 + $0x330] sm:$0xff]
        %v1657 = vld [vmem:[%s1553 + $0x338] sm:$0xff]
        %v1658 = vld [vmem:[%s1553 + $0x340] sm:$0xff]
        %v1659 = vld [vmem:[%s1553 + $0x348] sm:$0xff]
        %v1660 = vld [vmem:[%s1553 + $0x350] sm:$0xff]
        %v1661 = vld [vmem:[%s1553 + $0x358] sm:$0xff]
        %v1662 = vld [vmem:[%s1553 + $0x360] sm:$0xff]
        %v1663 = vld [vmem:[%s1553 + $0x368] sm:$0xff]
        %v1664 = vld [vmem:[%s1553 + $0x370] sm:$0xff]
        %v1665 = vld [vmem:[%s1553 + $0x378] sm:$0xff]
        %v1666 = vld [vmem:[%s1553 + $0x380] sm:$0xff]
        %v1667 = vld [vmem:[%s1553 + $0x388] sm:$0xff]
        %v1668 = vld [vmem:[%s1553 + $0x390] sm:$0xff]
        %v1669 = vld [vmem:[%s1553 + $0x398] sm:$0xff]
        %v1670 = vld [vmem:[%s1553 + $0x3a0] sm:$0xff]
        %v1671 = vld [vmem:[%s1553 + $0x3a8] sm:$0xff]
        %v1672 = vld [vmem:[%s1553 + $0x3b0] sm:$0xff]
        %v1673 = vld [vmem:[%s1553 + $0x3b8] sm:$0xff]
        %v1674 = vld [vmem:[%s1553 + $0x3c0] sm:$0xff]
        %v1675 = vld [vmem:[%s1553 + $0x3c8] sm:$0xff]
        %v1676 = vld [vmem:[%s1553 + $0x3d0] sm:$0xff]
        %v1677 = vld [vmem:[%s1553 + $0x3d8] sm:$0xff]
        %v1678 = vld [vmem:[%s1553 + $0x3e0] sm:$0xff]
        %v1679 = vld [vmem:[%s1553 + $0x3e8] sm:$0xff]
        %v1680 = vld [vmem:[%s1553 + $0x3f0] sm:$0xff]
        %v1681 = vld [vmem:[%s1553 + $0x3f8] sm:$0xff]
        %v1682 = vld [vmem:[%s1553 + $0x400] sm:$0xff]
        %v1683 = vld [vmem:[%s1553 + $0x408] sm:$0xff]
        %v1684 = vld [vmem:[%s1553 + $0x410] sm:$0xff]
        %v1685 = vld [vmem:[%s1553 + $0x418] sm:$0xff]
        %v1686 = vld [vmem:[%s1553 + $0x420] sm:$0xff]
        %v1687 = vld [vmem:[%s1553 + $0x428] sm:$0xff]
        %v1688 = vld [vmem:[%s1553 + $0x430] sm:$0xff]
        %v1689 = vld [vmem:[%s1553 + $0x438] sm:$0xff]
        %v1690 = vld [vmem:[%s1553 + $0x440] sm:$0xff]
        %v1691 = vld [vmem:[%s1553 + $0x448] sm:$0xff]
        %v1692 = vld [vmem:[%s1553 + $0x450] sm:$0xff]
        %v1693 = vld [vmem:[%s1553 + $0x458] sm:$0xff]
        %v1694 = vld [vmem:[%s1553 + $0x460] sm:$0xff]
        %v1695 = vld [vmem:[%s1553 + $0x468] sm:$0xff]
        %v1696 = vld [vmem:[%s1553 + $0x470] sm:$0xff]
        %v1697 = vld [vmem:[%s1553 + $0x478] sm:$0xff]
        %v1699 = vshrl.u32 %v1399, 16
        %v1701 = vshll.u32 %v1399, 16
        %v1703 = vrot.slane %v1701, 1
        %v1704 = vor.u32 %v1699, %v1703
        %v1706 = vshll.u32 %v1548, 16
        %v1708 = vrot.slane %v1706, 1
        %v1709 = vsel %vm420, %v1704, %v1708
        %v1711 = vshrl.u32 %v1400, 16
        %v1713 = vshll.u32 %v1400, 16
        %v1715 = vrot.slane %v1713, 1
        %v1716 = vor.u32 %v1711, %v1715
        %v1718 = vshll.u32 %v1549, 16
        %v1720 = vrot.slane %v1718, 1
        %v1721 = vsel %vm420, %v1716, %v1720
        %v1723 = vshrl.u32 %v1401, 16
        %v1725 = vshll.u32 %v1401, 16
        %v1727 = vrot.slane %v1725, 1
        %v1728 = vor.u32 %v1723, %v1727
        %v1730 = vshll.u32 %v1550, 16
        %v1732 = vrot.slane %v1730, 1
        %v1733 = vsel %vm420, %v1728, %v1732
        %v1735 = vshrl.u32 %v1402, 16
        %v1737 = vshll.u32 %v1402, 16
        %v1739 = vrot.slane %v1737, 1
        %v1740 = vor.u32 %v1735, %v1739
        %v1742 = vshll.u32 %v1551, 16
        %v1744 = vrot.slane %v1742, 1
        %v1745 = vsel %vm420, %v1740, %v1744
        %v1747 = vshrl.u32 %v1403, 16
        %v1749 = vshll.u32 %v1403, 16
        %v1751 = vrot.slane %v1749, 1
        %v1752 = vor.u32 %v1747, %v1751
        %v1754 = vshll.u32 %v1552, 16
        %v1756 = vrot.slane %v1754, 1
        %v1757 = vsel %vm420, %v1752, %v1756
        %v1906 = vunpack.c.l.b16 %v1554
        %v1907 = vunpack.c.h.b16 %v1554
        %v1908 = vunpack.c.l.b16 %v1555
        %v1909 = vunpack.c.h.b16 %v1555
        %v1910 = vunpack.c.l.b16 %v1556
        %v1911 = vunpack.c.h.b16 %v1556
        %v1912 = vunpack.c.l.b16 %v1557
        %v1913 = vunpack.c.h.b16 %v1557
        %v1914 = vunpack.c.l.b16 %v1558
        %v1915 = vunpack.c.h.b16 %v1558
        %v1916 = vunpack.c.l.b16 %v1559
        %v1917 = vunpack.c.h.b16 %v1559
        %v1918 = vunpack.c.l.b16 %v1560
        %v1919 = vunpack.c.h.b16 %v1560
        %v1920 = vunpack.c.l.b16 %v1561
        %v1921 = vunpack.c.h.b16 %v1561
        %v1922 = vunpack.c.l.b16 %v1562
        %v1923 = vunpack.c.h.b16 %v1562
        %v1924 = vunpack.c.l.b16 %v1563
        %v1925 = vunpack.c.h.b16 %v1563
        %v1926 = vunpack.c.l.b16 %v1564
        %v1927 = vunpack.c.h.b16 %v1564
        %v1928 = vunpack.c.l.b16 %v1565
        %v1929 = vunpack.c.h.b16 %v1565
        %v1930 = vunpack.c.l.b16 %v1566
        %v1931 = vunpack.c.h.b16 %v1566
        %v1932 = vunpack.c.l.b16 %v1567
        %v1933 = vunpack.c.h.b16 %v1567
        %v1934 = vunpack.c.l.b16 %v1568
        %v1935 = vunpack.c.h.b16 %v1568
        %v1936 = vunpack.c.l.b16 %v1569
        %v1937 = vunpack.c.h.b16 %v1569
        %v1938 = vunpack.c.l.b16 %v1570
        %v1939 = vunpack.c.h.b16 %v1570
        %v1940 = vunpack.c.l.b16 %v1571
        %v1941 = vunpack.c.h.b16 %v1571
        %v1942 = vunpack.c.l.b16 %v1572
        %v1943 = vunpack.c.h.b16 %v1572
        %v1944 = vunpack.c.l.b16 %v1573
        %v1945 = vunpack.c.h.b16 %v1573
        %v1946 = vunpack.c.l.b16 %v1574
        %v1947 = vunpack.c.h.b16 %v1574
        %v1948 = vunpack.c.l.b16 %v1575
        %v1949 = vunpack.c.h.b16 %v1575
        %v1950 = vunpack.c.l.b16 %v1576
        %v1951 = vunpack.c.h.b16 %v1576
        %v1952 = vunpack.c.l.b16 %v1577
        %v1953 = vunpack.c.h.b16 %v1577
        %v1954 = vunpack.c.l.b16 %v1578
        %v1955 = vunpack.c.h.b16 %v1578
        %v1956 = vunpack.c.l.b16 %v1579
        %v1957 = vunpack.c.h.b16 %v1579
        %v1958 = vunpack.c.l.b16 %v1580
        %v1959 = vunpack.c.h.b16 %v1580
        %v1960 = vunpack.c.l.b16 %v1581
        %v1961 = vunpack.c.h.b16 %v1581
        %v1962 = vunpack.c.l.b16 %v1582
        %v1963 = vunpack.c.h.b16 %v1582
        %v1964 = vunpack.c.l.b16 %v1583
        %v1965 = vunpack.c.h.b16 %v1583
        %v1966 = vunpack.c.l.b16 %v1584
        %v1967 = vunpack.c.h.b16 %v1584
        %v1968 = vunpack.c.l.b16 %v1585
        %v1969 = vunpack.c.h.b16 %v1585
        %v1970 = vunpack.c.l.b16 %v1586
        %v1971 = vunpack.c.h.b16 %v1586
        %v1972 = vunpack.c.l.b16 %v1587
        %v1973 = vunpack.c.h.b16 %v1587
        %v1974 = vunpack.c.l.b16 %v1588
        %v1975 = vunpack.c.h.b16 %v1588
        %v1976 = vunpack.c.l.b16 %v1589
        %v1977 = vunpack.c.h.b16 %v1589
        %v1978 = vunpack.c.l.b16 %v1590
        %v1979 = vunpack.c.h.b16 %v1590
        %v1980 = vunpack.c.l.b16 %v1591
        %v1981 = vunpack.c.h.b16 %v1591
        %v1982 = vunpack.c.l.b16 %v1592
        %v1983 = vunpack.c.h.b16 %v1592
        %v1984 = vunpack.c.l.b16 %v1593
        %v1985 = vunpack.c.h.b16 %v1593
        %v1986 = vunpack.c.l.b16 %v1594
        %v1987 = vunpack.c.h.b16 %v1594
        %v1988 = vunpack.c.l.b16 %v1595
        %v1989 = vunpack.c.h.b16 %v1595
        %v1990 = vunpack.c.l.b16 %v1596
        %v1991 = vunpack.c.h.b16 %v1596
        %v1992 = vunpack.c.l.b16 %v1597
        %v1993 = vunpack.c.h.b16 %v1597
        %v1994 = vunpack.c.l.b16 %v1598
        %v1995 = vunpack.c.h.b16 %v1598
        %v1996 = vunpack.c.l.b16 %v1599
        %v1997 = vunpack.c.h.b16 %v1599
        %v1998 = vunpack.c.l.b16 %v1600
        %v1999 = vunpack.c.h.b16 %v1600
        %v2000 = vunpack.c.l.b16 %v1601
        %v2001 = vunpack.c.h.b16 %v1601
        %v2002 = vunpack.c.l.b16 %v1602
        %v2003 = vunpack.c.h.b16 %v1602
        %v2004 = vunpack.c.l.b16 %v1603
        %v2005 = vunpack.c.h.b16 %v1603
        %v2006 = vunpack.c.l.b16 %v1604
        %v2007 = vunpack.c.h.b16 %v1604
        %v2008 = vunpack.c.l.b16 %v1605
        %v2009 = vunpack.c.h.b16 %v1605
        %v2010 = vunpack.c.l.b16 %v1606
        %v2011 = vunpack.c.h.b16 %v1606
        %v2012 = vunpack.c.l.b16 %v1607
        %v2013 = vunpack.c.h.b16 %v1607
        %v2014 = vunpack.c.l.b16 %v1608
        %v2015 = vunpack.c.h.b16 %v1608
        %v2016 = vunpack.c.l.b16 %v1609
        %v2017 = vunpack.c.h.b16 %v1609
        %v2018 = vunpack.c.l.b16 %v1610
        %v2019 = vunpack.c.h.b16 %v1610
        %v2020 = vunpack.c.l.b16 %v1611
        %v2021 = vunpack.c.h.b16 %v1611
        %v2022 = vunpack.c.l.b16 %v1612
        %v2023 = vunpack.c.h.b16 %v1612
        %v2024 = vunpack.c.l.b16 %v1613
        %v2025 = vunpack.c.h.b16 %v1613
        %v2026 = vunpack.c.l.b16 %v1614
        %v2027 = vunpack.c.h.b16 %v1614
        %v2028 = vunpack.c.l.b16 %v1615
        %v2029 = vunpack.c.h.b16 %v1615
        %v2030 = vunpack.c.l.b16 %v1616
        %v2031 = vunpack.c.h.b16 %v1616
        %v2032 = vunpack.c.l.b16 %v1617
        %v2033 = vunpack.c.h.b16 %v1617
        %v2034 = vunpack.c.l.b16 %v1618
        %v2035 = vunpack.c.h.b16 %v1618
        %v2036 = vunpack.c.l.b16 %v1619
        %v2037 = vunpack.c.h.b16 %v1619
        %v2038 = vunpack.c.l.b16 %v1620
        %v2039 = vunpack.c.h.b16 %v1620
        %v2040 = vunpack.c.l.b16 %v1621
        %v2041 = vunpack.c.h.b16 %v1621
        %v2042 = vunpack.c.l.b16 %v1622
        %v2043 = vunpack.c.h.b16 %v1622
        %v2044 = vunpack.c.l.b16 %v1623
        %v2045 = vunpack.c.h.b16 %v1623
        %v2046 = vunpack.c.l.b16 %v1624
        %v2047 = vunpack.c.h.b16 %v1624
        %v2048 = vunpack.c.l.b16 %v1625
        %v2049 = vunpack.c.h.b16 %v1625
        %v2050 = vunpack.c.l.b16 %v1626
        %v2051 = vunpack.c.h.b16 %v1626
        %v2052 = vunpack.c.l.b16 %v1627
        %v2053 = vunpack.c.h.b16 %v1627
        %v2054 = vunpack.c.l.b16 %v1628
        %v2055 = vunpack.c.h.b16 %v1628
        %v2056 = vunpack.c.l.b16 %v1629
        %v2057 = vunpack.c.h.b16 %v1629
        %v2058 = vunpack.c.l.b16 %v1630
        %v2059 = vunpack.c.h.b16 %v1630
        %v2060 = vunpack.c.l.b16 %v1631
        %v2061 = vunpack.c.h.b16 %v1631
        %v2062 = vunpack.c.l.b16 %v1632
        %v2063 = vunpack.c.h.b16 %v1632
        %v2064 = vunpack.c.l.b16 %v1633
        %v2065 = vunpack.c.h.b16 %v1633
        %v2066 = vunpack.c.l.b16 %v1634
        %v2067 = vunpack.c.h.b16 %v1634
        %v2068 = vunpack.c.l.b16 %v1635
        %v2069 = vunpack.c.h.b16 %v1635
        %v2070 = vunpack.c.l.b16 %v1636
        %v2071 = vunpack.c.h.b16 %v1636
        %v2072 = vunpack.c.l.b16 %v1637
        %v2073 = vunpack.c.h.b16 %v1637
        %v2074 = vunpack.c.l.b16 %v1638
        %v2075 = vunpack.c.h.b16 %v1638
        %v2076 = vunpack.c.l.b16 %v1639
        %v2077 = vunpack.c.h.b16 %v1639
        %v2078 = vunpack.c.l.b16 %v1640
        %v2079 = vunpack.c.h.b16 %v1640
        %v2080 = vunpack.c.l.b16 %v1641
        %v2081 = vunpack.c.h.b16 %v1641
        %v2082 = vunpack.c.l.b16 %v1642
        %v2083 = vunpack.c.h.b16 %v1642
        %v2084 = vunpack.c.l.b16 %v1643
        %v2085 = vunpack.c.h.b16 %v1643
        %v2086 = vunpack.c.l.b16 %v1644
        %v2087 = vunpack.c.h.b16 %v1644
        %v2088 = vunpack.c.l.b16 %v1645
        %v2089 = vunpack.c.h.b16 %v1645
        %v2090 = vunpack.c.l.b16 %v1646
        %v2091 = vunpack.c.h.b16 %v1646
        %v2092 = vunpack.c.l.b16 %v1647
        %v2093 = vunpack.c.h.b16 %v1647
        %v2094 = vunpack.c.l.b16 %v1648
        %v2095 = vunpack.c.h.b16 %v1648
        %v2096 = vunpack.c.l.b16 %v1649
        %v2097 = vunpack.c.h.b16 %v1649
        %v2098 = vunpack.c.l.b16 %v1650
        %v2099 = vunpack.c.h.b16 %v1650
        %v2100 = vunpack.c.l.b16 %v1651
        %v2101 = vunpack.c.h.b16 %v1651
        %v2102 = vunpack.c.l.b16 %v1652
        %v2103 = vunpack.c.h.b16 %v1652
        %v2104 = vunpack.c.l.b16 %v1653
        %v2105 = vunpack.c.h.b16 %v1653
        %v2106 = vunpack.c.l.b16 %v1654
        %v2107 = vunpack.c.h.b16 %v1654
        %v2108 = vunpack.c.l.b16 %v1655
        %v2109 = vunpack.c.h.b16 %v1655
        %v2110 = vunpack.c.l.b16 %v1656
        %v2111 = vunpack.c.h.b16 %v1656
        %v2112 = vunpack.c.l.b16 %v1657
        %v2113 = vunpack.c.h.b16 %v1657
        %v2114 = vunpack.c.l.b16 %v1658
        %v2115 = vunpack.c.h.b16 %v1658
        %v2116 = vunpack.c.l.b16 %v1659
        %v2117 = vunpack.c.h.b16 %v1659
        %v2118 = vunpack.c.l.b16 %v1660
        %v2119 = vunpack.c.h.b16 %v1660
        %v2120 = vunpack.c.l.b16 %v1661
        %v2121 = vunpack.c.h.b16 %v1661
        %v2122 = vunpack.c.l.b16 %v1662
        %v2123 = vunpack.c.h.b16 %v1662
        %v2124 = vunpack.c.l.b16 %v1663
        %v2125 = vunpack.c.h.b16 %v1663
        %v2126 = vunpack.c.l.b16 %v1664
        %v2127 = vunpack.c.h.b16 %v1664
        %v2128 = vunpack.c.l.b16 %v1665
        %v2129 = vunpack.c.h.b16 %v1665
        %v2130 = vunpack.c.l.b16 %v1666
        %v2131 = vunpack.c.h.b16 %v1666
        %v2132 = vunpack.c.l.b16 %v1667
        %v2133 = vunpack.c.h.b16 %v1667
        %v2134 = vunpack.c.l.b16 %v1668
        %v2135 = vunpack.c.h.b16 %v1668
        %v2136 = vunpack.c.l.b16 %v1669
        %v2137 = vunpack.c.h.b16 %v1669
        %v2138 = vunpack.c.l.b16 %v1670
        %v2139 = vunpack.c.h.b16 %v1670
        %v2140 = vunpack.c.l.b16 %v1671
        %v2141 = vunpack.c.h.b16 %v1671
        %v2142 = vunpack.c.l.b16 %v1672
        %v2143 = vunpack.c.h.b16 %v1672
        %v2144 = vunpack.c.l.b16 %v1673
        %v2145 = vunpack.c.h.b16 %v1673
        %v2146 = vunpack.c.l.b16 %v1674
        %v2147 = vunpack.c.h.b16 %v1674
        %v2148 = vunpack.c.l.b16 %v1675
        %v2149 = vunpack.c.h.b16 %v1675
        %v2150 = vunpack.c.l.b16 %v1676
        %v2151 = vunpack.c.h.b16 %v1676
        %v2152 = vunpack.c.l.b16 %v1677
        %v2153 = vunpack.c.h.b16 %v1677
        %v2154 = vunpack.c.l.b16 %v1678
        %v2155 = vunpack.c.h.b16 %v1678
        %v2156 = vunpack.c.l.b16 %v1679
        %v2157 = vunpack.c.h.b16 %v1679
        %v2158 = vunpack.c.l.b16 %v1680
        %v2159 = vunpack.c.h.b16 %v1680
        %v2160 = vunpack.c.l.b16 %v1681
        %v2161 = vunpack.c.h.b16 %v1681
        %v2162 = vunpack.c.l.b16 %v1682
        %v2163 = vunpack.c.h.b16 %v1682
        %v2164 = vunpack.c.l.b16 %v1683
        %v2165 = vunpack.c.h.b16 %v1683
        %v2166 = vunpack.c.l.b16 %v1684
        %v2167 = vunpack.c.h.b16 %v1684
        %v2168 = vunpack.c.l.b16 %v1685
        %v2169 = vunpack.c.h.b16 %v1685
        %v2170 = vunpack.c.l.b16 %v1686
        %v2171 = vunpack.c.h.b16 %v1686
        %v2172 = vunpack.c.l.b16 %v1687
        %v2173 = vunpack.c.h.b16 %v1687
        %v2174 = vunpack.c.l.b16 %v1688
        %v2175 = vunpack.c.h.b16 %v1688
        %v2176 = vunpack.c.l.b16 %v1689
        %v2177 = vunpack.c.h.b16 %v1689
        %v2178 = vunpack.c.l.b16 %v1690
        %v2179 = vunpack.c.h.b16 %v1690
        %v2180 = vunpack.c.l.b16 %v1691
        %v2181 = vunpack.c.h.b16 %v1691
        %v2182 = vunpack.c.l.b16 %v1692
        %v2183 = vunpack.c.h.b16 %v1692
        %v2184 = vunpack.c.l.b16 %v1693
        %v2185 = vunpack.c.h.b16 %v1693
        %v2186 = vunpack.c.l.b16 %v1694
        %v2187 = vunpack.c.h.b16 %v1694
        %v2188 = vunpack.c.l.b16 %v1695
        %v2189 = vunpack.c.h.b16 %v1695
        %v2190 = vunpack.c.l.b16 %v1696
        %v2191 = vunpack.c.h.b16 %v1696
        %v2192 = vunpack.c.l.b16 %v1697
        %v2193 = vunpack.c.h.b16 %v1697
        %v2194 = vpack.c.b16 %v1910, %v1906
        %v2195 = vpack.c.b16 %v1911, %v1907
        %v2196 = vpack.c.b16 %v1912, %v1908
        %v2197 = vpack.c.b16 %v1913, %v1909
        %v2198 = vpack.c.b16 %v1918, %v1914
        %v2199 = vpack.c.b16 %v1919, %v1915
        %v2200 = vpack.c.b16 %v1920, %v1916
        %v2201 = vpack.c.b16 %v1921, %v1917
        %v2202 = vpack.c.b16 %v1926, %v1922
        %v2203 = vpack.c.b16 %v1927, %v1923
        %v2204 = vpack.c.b16 %v1928, %v1924
        %v2205 = vpack.c.b16 %v1929, %v1925
        %v2206 = vpack.c.b16 %v1934, %v1930
        %v2207 = vpack.c.b16 %v1935, %v1931
        %v2208 = vpack.c.b16 %v1936, %v1932
        %v2209 = vpack.c.b16 %v1937, %v1933
        %v2210 = vpack.c.b16 %v1942, %v1938
        %v2211 = vpack.c.b16 %v1943, %v1939
        %v2212 = vpack.c.b16 %v1944, %v1940
        %v2213 = vpack.c.b16 %v1945, %v1941
        %v2214 = vpack.c.b16 %v1950, %v1946
        %v2215 = vpack.c.b16 %v1951, %v1947
        %v2216 = vpack.c.b16 %v1952, %v1948
        %v2217 = vpack.c.b16 %v1953, %v1949
        %v2218 = vpack.c.b16 %v1958, %v1954
        %v2219 = vpack.c.b16 %v1959, %v1955
        %v2220 = vpack.c.b16 %v1960, %v1956
        %v2221 = vpack.c.b16 %v1961, %v1957
        %v2222 = vpack.c.b16 %v1966, %v1962
        %v2223 = vpack.c.b16 %v1967, %v1963
        %v2224 = vpack.c.b16 %v1968, %v1964
        %v2225 = vpack.c.b16 %v1969, %v1965
        %v2226 = vpack.c.b16 %v1974, %v1970
        %v2227 = vpack.c.b16 %v1975, %v1971
        %v2228 = vpack.c.b16 %v1976, %v1972
        %v2229 = vpack.c.b16 %v1977, %v1973
        %v2230 = vpack.c.b16 %v1982, %v1978
        %v2231 = vpack.c.b16 %v1983, %v1979
        %v2232 = vpack.c.b16 %v1984, %v1980
        %v2233 = vpack.c.b16 %v1985, %v1981
        %v2234 = vpack.c.b16 %v1990, %v1986
        %v2235 = vpack.c.b16 %v1991, %v1987
        %v2236 = vpack.c.b16 %v1992, %v1988
        %v2237 = vpack.c.b16 %v1993, %v1989
        %v2238 = vpack.c.b16 %v1998, %v1994
        %v2239 = vpack.c.b16 %v1999, %v1995
        %v2240 = vpack.c.b16 %v2000, %v1996
        %v2241 = vpack.c.b16 %v2001, %v1997
        %v2242 = vpack.c.b16 %v2006, %v2002
        %v2243 = vpack.c.b16 %v2007, %v2003
        %v2244 = vpack.c.b16 %v2008, %v2004
        %v2245 = vpack.c.b16 %v2009, %v2005
        %v2246 = vpack.c.b16 %v2014, %v2010
        %v2247 = vpack.c.b16 %v2015, %v2011
        %v2248 = vpack.c.b16 %v2016, %v2012
        %v2249 = vpack.c.b16 %v2017, %v2013
        %v2250 = vpack.c.b16 %v2022, %v2018
        %v2251 = vpack.c.b16 %v2023, %v2019
        %v2252 = vpack.c.b16 %v2024, %v2020
        %v2253 = vpack.c.b16 %v2025, %v2021
        %v2254 = vpack.c.b16 %v2030, %v2026
        %v2255 = vpack.c.b16 %v2031, %v2027
        %v2256 = vpack.c.b16 %v2032, %v2028
        %v2257 = vpack.c.b16 %v2033, %v2029
        %v2258 = vpack.c.b16 %v2038, %v2034
        %v2259 = vpack.c.b16 %v2039, %v2035
        %v2260 = vpack.c.b16 %v2040, %v2036
        %v2261 = vpack.c.b16 %v2041, %v2037
        %v2262 = vpack.c.b16 %v2046, %v2042
        %v2263 = vpack.c.b16 %v2047, %v2043
        %v2264 = vpack.c.b16 %v2048, %v2044
        %v2265 = vpack.c.b16 %v2049, %v2045
        %v2266 = vpack.c.b16 %v2054, %v2050
        %v2267 = vpack.c.b16 %v2055, %v2051
        %v2268 = vpack.c.b16 %v2056, %v2052
        %v2269 = vpack.c.b16 %v2057, %v2053
        %v2270 = vpack.c.b16 %v2062, %v2058
        %v2271 = vpack.c.b16 %v2063, %v2059
        %v2272 = vpack.c.b16 %v2064, %v2060
        %v2273 = vpack.c.b16 %v2065, %v2061
        %v2274 = vpack.c.b16 %v2070, %v2066
        %v2275 = vpack.c.b16 %v2071, %v2067
        %v2276 = vpack.c.b16 %v2072, %v2068
        %v2277 = vpack.c.b16 %v2073, %v2069
        %v2278 = vpack.c.b16 %v2078, %v2074
        %v2279 = vpack.c.b16 %v2079, %v2075
        %v2280 = vpack.c.b16 %v2080, %v2076
        %v2281 = vpack.c.b16 %v2081, %v2077
        %v2282 = vpack.c.b16 %v2086, %v2082
        %v2283 = vpack.c.b16 %v2087, %v2083
        %v2284 = vpack.c.b16 %v2088, %v2084
        %v2285 = vpack.c.b16 %v2089, %v2085
        %v2286 = vpack.c.b16 %v2094, %v2090
        %v2287 = vpack.c.b16 %v2095, %v2091
        %v2288 = vpack.c.b16 %v2096, %v2092
        %v2289 = vpack.c.b16 %v2097, %v2093
        %v2290 = vpack.c.b16 %v2102, %v2098
        %v2291 = vpack.c.b16 %v2103, %v2099
        %v2292 = vpack.c.b16 %v2104, %v2100
        %v2293 = vpack.c.b16 %v2105, %v2101
        %v2294 = vpack.c.b16 %v2110, %v2106
        %v2295 = vpack.c.b16 %v2111, %v2107
        %v2296 = vpack.c.b16 %v2112, %v2108
        %v2297 = vpack.c.b16 %v2113, %v2109
        %v2298 = vpack.c.b16 %v2118, %v2114
        %v2299 = vpack.c.b16 %v2119, %v2115
        %v2300 = vpack.c.b16 %v2120, %v2116
        %v2301 = vpack.c.b16 %v2121, %v2117
        %v2302 = vpack.c.b16 %v2126, %v2122
        %v2303 = vpack.c.b16 %v2127, %v2123
        %v2304 = vpack.c.b16 %v2128, %v2124
        %v2305 = vpack.c.b16 %v2129, %v2125
        %v2306 = vpack.c.b16 %v2134, %v2130
        %v2307 = vpack.c.b16 %v2135, %v2131
        %v2308 = vpack.c.b16 %v2136, %v2132
        %v2309 = vpack.c.b16 %v2137, %v2133
        %v2310 = vpack.c.b16 %v2142, %v2138
        %v2311 = vpack.c.b16 %v2143, %v2139
        %v2312 = vpack.c.b16 %v2144, %v2140
        %v2313 = vpack.c.b16 %v2145, %v2141
        %v2314 = vpack.c.b16 %v2150, %v2146
        %v2315 = vpack.c.b16 %v2151, %v2147
        %v2316 = vpack.c.b16 %v2152, %v2148
        %v2317 = vpack.c.b16 %v2153, %v2149
        %v2318 = vpack.c.b16 %v2158, %v2154
        %v2319 = vpack.c.b16 %v2159, %v2155
        %v2320 = vpack.c.b16 %v2160, %v2156
        %v2321 = vpack.c.b16 %v2161, %v2157
        %v2322 = vpack.c.b16 %v2166, %v2162
        %v2323 = vpack.c.b16 %v2167, %v2163
        %v2324 = vpack.c.b16 %v2168, %v2164
        %v2325 = vpack.c.b16 %v2169, %v2165
        %v2326 = vpack.c.b16 %v2174, %v2170
        %v2327 = vpack.c.b16 %v2175, %v2171
        %v2328 = vpack.c.b16 %v2176, %v2172
        %v2329 = vpack.c.b16 %v2177, %v2173
        %v2330 = vpack.c.b16 %v2182, %v2178
        %v2331 = vpack.c.b16 %v2183, %v2179
        %v2332 = vpack.c.b16 %v2184, %v2180
        %v2333 = vpack.c.b16 %v2185, %v2181
        %v2334 = vpack.c.b16 %v2190, %v2186
        %v2335 = vpack.c.b16 %v2191, %v2187
        %v2336 = vpack.c.b16 %v2192, %v2188
        %v2337 = vpack.c.b16 %v2193, %v2189
        %vm2482 = vcmask 523264
        %v2484 = vsel %vm2482, %v1757, 0
        %2486 = vmatprep.subr.bf16.mxu0 %v2195
        %2487 = vmatpush1.bf16.msra.mxu0 %v2194
        %2488 = vmatprep.subr.bf16.mxu0 %v2199
        %2489 = vmatpush1.bf16.msra.mxu0 %v2198
        %2490 = vmatprep.subr.bf16.mxu0 %v2203
        %2491 = vmatpush1.bf16.msra.mxu0 %v2202
        %2492 = vmatprep.subr.bf16.mxu0 %v2207
        %2493 = vmatpush1.bf16.msra.mxu0 %v2206
        %2494 = vmatprep.subr.bf16.mxu0 %v2211
        %2495 = vmatpush1.bf16.msra.mxu0 %v2210
        %2496 = vmatprep.subr.bf16.mxu0 %v2215
        %2497 = vmatpush1.bf16.msra.mxu0 %v2214
        %2498 = vmatprep.subr.bf16.mxu0 %v2219
        %2499 = vmatpush1.bf16.msra.mxu0 %v2218
        %2500 = vmatprep.subr.bf16.mxu0 %v2223
        %2501 = vmatpush1.bf16.msra.mxu0 %v2222
        %2502 = vmatprep.subr.bf16.mxu0 %v2227
        %2503 = vmatpush1.bf16.msra.mxu0 %v2226
        %2504 = vmatprep.subr.bf16.mxu0 %v2231
        %2505 = vmatpush1.bf16.msra.mxu0 %v2230
        %2506 = vmatprep.subr.bf16.mxu0 %v2235
        %2507 = vmatpush1.bf16.msra.mxu0 %v2234
        %2508 = vmatprep.subr.bf16.mxu0 %v2239
        %2509 = vmatpush1.bf16.msra.mxu0 %v2238
        %2510 = vmatprep.subr.bf16.mxu0 %v2243
        %2511 = vmatpush1.bf16.msra.mxu0 %v2242
        %2512 = vmatprep.subr.bf16.mxu0 %v2247
        %2513 = vmatpush1.bf16.msra.mxu0 %v2246
        %2514 = vmatprep.subr.bf16.mxu0 %v2251
        %2515 = vmatpush1.bf16.msra.mxu0 %v2250
        %2516 = vmatprep.subr.bf16.mxu0 %v2255
        %2517 = vmatpush1.bf16.msra.mxu0 %v2254
        %2518 = vmatprep.mubr.bf16.mxu0 %v1721
        %2519 = vmatmul.mubr.bf16.gmra.mrb[0].mxu0 %v1709
        %v2520 = vpop.f32.mrb[0].mxu0
        %v2521 = vadd.f32 0.0, %v2520
        %v2522 = vpop.f32.mrb[0].mxu0
        %v2523 = vadd.f32 0.0, %v2522
        %v2524 = vpop.f32.mrb[0].mxu0
        %v2525 = vadd.f32 0.0, %v2524
        %v2526 = vpop.f32.mrb[0].mxu0
        %v2527 = vadd.f32 0.0, %v2526
        %2528 = vdwg.mxu0
        %2529 = vmatprep.subr.bf16.mxu0 %v2259
        %2530 = vmatpush1.bf16.msra.mxu0 %v2258
        %2531 = vmatprep.subr.bf16.mxu0 %v2263
        %2532 = vmatpush1.bf16.msra.mxu0 %v2262
        %2533 = vmatprep.subr.bf16.mxu0 %v2267
        %2534 = vmatpush1.bf16.msra.mxu0 %v2266
        %2535 = vmatprep.subr.bf16.mxu0 %v2271
        %2536 = vmatpush1.bf16.msra.mxu0 %v2270
        %2537 = vmatprep.subr.bf16.mxu0 %v2275
        %2538 = vmatpush1.bf16.msra.mxu0 %v2274
        %2539 = vmatprep.subr.bf16.mxu0 %v2279
        %2540 = vmatpush1.bf16.msra.mxu0 %v2278
        %2541 = vmatprep.subr.bf16.mxu0 %v2283
        %2542 = vmatpush1.bf16.msra.mxu0 %v2282
        %2543 = vmatprep.subr.bf16.mxu0 %v2287
        %2544 = vmatpush1.bf16.msra.mxu0 %v2286
        %2545 = vmatprep.subr.bf16.mxu0 %v2291
        %2546 = vmatpush1.bf16.msra.mxu0 %v2290
        %2547 = vmatprep.subr.bf16.mxu0 %v2295
        %2548 = vmatpush1.bf16.msra.mxu0 %v2294
        %2549 = vmatprep.subr.bf16.mxu0 %v2299
        %2550 = vmatpush1.bf16.msra.mxu0 %v2298
        %2551 = vmatprep.subr.bf16.mxu0 %v2303
        %2552 = vmatpush1.bf16.msra.mxu0 %v2302
        %2553 = vmatprep.subr.bf16.mxu0 %v2307
        %2554 = vmatpush1.bf16.msra.mxu0 %v2306
        %2555 = vmatprep.subr.bf16.mxu0 %v2311
        %2556 = vmatpush1.bf16.msra.mxu0 %v2310
        %2557 = vmatprep.subr.bf16.mxu0 %v2315
        %2558 = vmatpush1.bf16.msra.mxu0 %v2314
        %2559 = vmatprep.subr.bf16.mxu0 %v2319
        %2560 = vmatpush1.bf16.msra.mxu0 %v2318
        %2561 = vmatprep.mubr.bf16.mxu0 %v1745
        %2562 = vmatmul.mubr.bf16.gmra.mrb[0].mxu0 %v1733
        %v2563 = vpop.f32.mrb[0].mxu0
        %v2564 = vadd.f32 %v2521, %v2563
        %v2565 = vpop.f32.mrb[0].mxu0
        %v2566 = vadd.f32 %v2523, %v2565
        %v2567 = vpop.f32.mrb[0].mxu0
        %v2568 = vadd.f32 %v2525, %v2567
        %v2569 = vpop.f32.mrb[0].mxu0
        %v2570 = vadd.f32 %v2527, %v2569
        %2571 = vdwg.mxu0
        %2572 = vmatprep.subr.bf16.mxu0 %v2323
        %2573 = vmatpush1.bf16.msra.mxu0 %v2322
        %2574 = vmatprep.subr.bf16.mxu0 %v2327
        %2575 = vmatpush1.bf16.msra.mxu0 %v2326
        %2576 = vmatprep.subr.bf16.mxu0 %v2331
        %2577 = vmatpush1.bf16.msra.mxu0 %v2330
        %2578 = vmatprep.subr.bf16.mxu0 %v2335
        %2579 = vmatpush1.bf16.msra.mxu0 %v2334
        %2580 = vmatprep.subr.bf16.mxu0 0
        %2581 = vmatpush1.bf16.msra.mxu0 0
        %2582 = vmatprep.subr.bf16.mxu0 0
        %2583 = vmatpush1.bf16.msra.mxu0 0
        %2584 = vmatprep.subr.bf16.mxu0 0
        %2585 = vmatpush1.bf16.msra.mxu0 0
        %2586 = vmatprep.subr.bf16.mxu0 0
        %2587 = vmatpush1.bf16.msra.mxu0 0
        %2588 = vmatprep.subr.bf16.mxu0 0
        %2589 = vmatpush1.bf16.msra.mxu0 0
        %2590 = vmatprep.subr.bf16.mxu0 0
        %2591 = vmatpush1.bf16.msra.mxu0 0
        %2592 = vmatprep.subr.bf16.mxu0 0
        %2593 = vmatpush1.bf16.msra.mxu0 0
        %2594 = vmatprep.subr.bf16.mxu0 0
        %2595 = vmatpush1.bf16.msra.mxu0 0
        %2596 = vmatprep.subr.bf16.mxu0 0
        %2597 = vmatpush1.bf16.msra.mxu0 0
        %2598 = vmatprep.subr.bf16.mxu0 0
        %2599 = vmatpush1.bf16.msra.mxu0 0
        %2600 = vmatprep.subr.bf16.mxu0 0
        %2601 = vmatpush1.bf16.msra.mxu0 0
        %2602 = vmatprep.subr.bf16.mxu0 0
        %2603 = vmatpush1.bf16.msra.mxu0 0
        %2604 = vmatprep.mubr.bf16.mxu0 0
        %2605 = vmatmul.mubr.bf16.gmra.mrb[0].mxu0 %v2484
        %v2606 = vpop.f32.mrb[0].mxu0
        %v2607 = vadd.f32 %v2564, %v2606
        %v2608 = vpop.f32.mrb[0].mxu0
        %v2609 = vadd.f32 %v2566, %v2608
        %v2610 = vpop.f32.mrb[0].mxu0
        %v2611 = vadd.f32 %v2568, %v2610
        %v2612 = vpop.f32.mrb[0].mxu0
        %v2613 = vadd.f32 %v2570, %v2612
        %2614 = vdwg.mxu0
        %2615 = vmatprep.subr.bf16.mxu0 %v2197
        %2616 = vmatpush1.bf16.msra.mxu0 %v2196
        %2617 = vmatprep.subr.bf16.mxu0 %v2201
        %2618 = vmatpush1.bf16.msra.mxu0 %v2200
        %2619 = vmatprep.subr.bf16.mxu0 %v2205
        %2620 = vmatpush1.bf16.msra.mxu0 %v2204
        %2621 = vmatprep.subr.bf16.mxu0 %v2209
        %2622 = vmatpush1.bf16.msra.mxu0 %v2208
        %2623 = vmatprep.subr.bf16.mxu0 %v2213
        %2624 = vmatpush1.bf16.msra.mxu0 %v2212
        %2625 = vmatprep.subr.bf16.mxu0 %v2217
        %2626 = vmatpush1.bf16.msra.mxu0 %v2216
        %2627 = vmatprep.subr.bf16.mxu0 %v2221
        %2628 = vmatpush1.bf16.msra.mxu0 %v2220
        %2629 = vmatprep.subr.bf16.mxu0 %v2225
        %2630 = vmatpush1.bf16.msra.mxu0 %v2224
        %2631 = vmatprep.subr.bf16.mxu0 %v2229
        %2632 = vmatpush1.bf16.msra.mxu0 %v2228
        %2633 = vmatprep.subr.bf16.mxu0 %v2233
        %2634 = vmatpush1.bf16.msra.mxu0 %v2232
        %2635 = vmatprep.subr.bf16.mxu0 %v2237
        %2636 = vmatpush1.bf16.msra.mxu0 %v2236
        %2637 = vmatprep.subr.bf16.mxu0 %v2241
        %2638 = vmatpush1.bf16.msra.mxu0 %v2240
        %2639 = vmatprep.subr.bf16.mxu0 %v2245
        %2640 = vmatpush1.bf16.msra.mxu0 %v2244
        %2641 = vmatprep.subr.bf16.mxu0 %v2249
        %2642 = vmatpush1.bf16.msra.mxu0 %v2248
        %2643 = vmatprep.subr.bf16.mxu0 %v2253
        %2644 = vmatpush1.bf16.msra.mxu0 %v2252
        %2645 = vmatprep.subr.bf16.mxu0 %v2257
        %2646 = vmatpush1.bf16.msra.mxu0 %v2256
        %2647 = vmatprep.mubr.bf16.mxu0 %v1721
        %2648 = vmatmul.mubr.bf16.gmra.mrb[0].mxu0 %v1709
        %v2649 = vpop.f32.mrb[0].mxu0
        %v2650 = vadd.f32 0.0, %v2649
        %v2651 = vpop.f32.mrb[0].mxu0
        %v2652 = vadd.f32 0.0, %v2651
        %v2653 = vpop.f32.mrb[0].mxu0
        %v2654 = vadd.f32 0.0, %v2653
        %v2655 = vpop.f32.mrb[0].mxu0
        %v2656 = vadd.f32 0.0, %v2655
        %2657 = vdwg.mxu0
        %2658 = vmatprep.subr.bf16.mxu0 %v2261
        %2659 = vmatpush1.bf16.msra.mxu0 %v2260
        %2660 = vmatprep.subr.bf16.mxu0 %v2265
        %2661 = vmatpush1.bf16.msra.mxu0 %v2264
        %2662 = vmatprep.subr.bf16.mxu0 %v2269
        %2663 = vmatpush1.bf16.msra.mxu0 %v2268
        %2664 = vmatprep.subr.bf16.mxu0 %v2273
        %2665 = vmatpush1.bf16.msra.mxu0 %v2272
        %2666 = vmatprep.subr.bf16.mxu0 %v2277
        %2667 = vmatpush1.bf16.msra.mxu0 %v2276
        %2668 = vmatprep.subr.bf16.mxu0 %v2281
        %2669 = vmatpush1.bf16.msra.mxu0 %v2280
        %2670 = vmatprep.subr.bf16.mxu0 %v2285
        %2671 = vmatpush1.bf16.msra.mxu0 %v2284
        %2672 = vmatprep.subr.bf16.mxu0 %v2289
        %2673 = vmatpush1.bf16.msra.mxu0 %v2288
        %2674 = vmatprep.subr.bf16.mxu0 %v2293
        %2675 = vmatpush1.bf16.msra.mxu0 %v2292
        %2676 = vmatprep.subr.bf16.mxu0 %v2297
        %2677 = vmatpush1.bf16.msra.mxu0 %v2296
        %2678 = vmatprep.subr.bf16.mxu0 %v2301
        %2679 = vmatpush1.bf16.msra.mxu0 %v2300
        %2680 = vmatprep.subr.bf16.mxu0 %v2305
        %2681 = vmatpush1.bf16.msra.mxu0 %v2304
        %2682 = vmatprep.subr.bf16.mxu0 %v2309
        %2683 = vmatpush1.bf16.msra.mxu0 %v2308
        %2684 = vmatprep.subr.bf16.mxu0 %v2313
        %2685 = vmatpush1.bf16.msra.mxu0 %v2312
        %2686 = vmatprep.subr.bf16.mxu0 %v2317
        %2687 = vmatpush1.bf16.msra.mxu0 %v2316
        %2688 = vmatprep.subr.bf16.mxu0 %v2321
        %2689 = vmatpush1.bf16.msra.mxu0 %v2320
        %2690 = vmatprep.mubr.bf16.mxu0 %v1745
        %2691 = vmatmul.mubr.bf16.gmra.mrb[0].mxu0 %v1733
        %v2692 = vpop.f32.mrb[0].mxu0
        %v2693 = vadd.f32 %v2650, %v2692
        %v2694 = vpop.f32.mrb[0].mxu0
        %v2695 = vadd.f32 %v2652, %v2694
        %v2696 = vpop.f32.mrb[0].mxu0
        %v2697 = vadd.f32 %v2654, %v2696
        %v2698 = vpop.f32.mrb[0].mxu0
        %v2699 = vadd.f32 %v2656, %v2698
        %2700 = vdwg.mxu0
        %2701 = vmatprep.subr.bf16.mxu0 %v2325
        %2702 = vmatpush1.bf16.msra.mxu0 %v2324
        %2703 = vmatprep.subr.bf16.mxu0 %v2329
        %2704 = vmatpush1.bf16.msra.mxu0 %v2328
        %2705 = vmatprep.subr.bf16.mxu0 %v2333
        %2706 = vmatpush1.bf16.msra.mxu0 %v2332
        %2707 = vmatprep.subr.bf16.mxu0 %v2337
        %2708 = vmatpush1.bf16.msra.mxu0 %v2336
        %2709 = vmatprep.subr.bf16.mxu0 0
        %2710 = vmatpush1.bf16.msra.mxu0 0
        %2711 = vmatprep.subr.bf16.mxu0 0
        %2712 = vmatpush1.bf16.msra.mxu0 0
        %2713 = vmatprep.subr.bf16.mxu0 0
        %2714 = vmatpush1.bf16.msra.mxu0 0
        %2715 = vmatprep.subr.bf16.mxu0 0
        %2716 = vmatpush1.bf16.msra.mxu0 0
        %2717 = vmatprep.subr.bf16.mxu0 0
        %2718 = vmatpush1.bf16.msra.mxu0 0
        %2719 = vmatprep.subr.bf16.mxu0 0
        %2720 = vmatpush1.bf16.msra.mxu0 0
        %2721 = vmatprep.subr.bf16.mxu0 0
        %2722 = vmatpush1.bf16.msra.mxu0 0
        %2723 = vmatprep.subr.bf16.mxu0 0
        %2724 = vmatpush1.bf16.msra.mxu0 0
        %2725 = vmatprep.subr.bf16.mxu0 0
        %2726 = vmatpush1.bf16.msra.mxu0 0
        %2727 = vmatprep.subr.bf16.mxu0 0
        %2728 = vmatpush1.bf16.msra.mxu0 0
        %2729 = vmatprep.subr.bf16.mxu0 0
        %2730 = vmatpush1.bf16.msra.mxu0 0
        %2731 = vmatprep.subr.bf16.mxu0 0
        %2732 = vmatpush1.bf16.msra.mxu0 0
        %2733 = vmatprep.mubr.bf16.mxu0 0
        %2734 = vmatmul.mubr.bf16.gmra.mrb[0].mxu0 %v2484
        %v2735 = vpop.f32.mrb[0].mxu0
        %v2736 = vadd.f32 %v2693, %v2735
        %v2737 = vpop.f32.mrb[0].mxu0
        %v2738 = vadd.f32 %v2695, %v2737
        %v2739 = vpop.f32.mrb[0].mxu0
        %v2740 = vadd.f32 %v2697, %v2739
        %v2741 = vpop.f32.mrb[0].mxu0
        %v2742 = vadd.f32 %v2699, %v2741
        %2743 = vdwg.mxu0
        %v2888 = vunpack.c.l.b16 %v1404
        %v2889 = vunpack.c.h.b16 %v1404
        %v2890 = vunpack.c.l.b16 %v1405
        %v2891 = vunpack.c.h.b16 %v1405
        %v2892 = vunpack.c.l.b16 %v1406
        %v2893 = vunpack.c.h.b16 %v1406
        %v2894 = vunpack.c.l.b16 %v1407
        %v2895 = vunpack.c.h.b16 %v1407
        %v2896 = vunpack.c.l.b16 %v1408
        %v2897 = vunpack.c.h.b16 %v1408
        %v2898 = vunpack.c.l.b16 %v1409
        %v2899 = vunpack.c.h.b16 %v1409
        %v2900 = vunpack.c.l.b16 %v1410
        %v2901 = vunpack.c.h.b16 %v1410
        %v2902 = vunpack.c.l.b16 %v1411
        %v2903 = vunpack.c.h.b16 %v1411
        %v2904 = vunpack.c.l.b16 %v1412
        %v2905 = vunpack.c.h.b16 %v1412
        %v2906 = vunpack.c.l.b16 %v1413
        %v2907 = vunpack.c.h.b16 %v1413
        %v2908 = vunpack.c.l.b16 %v1414
        %v2909 = vunpack.c.h.b16 %v1414
        %v2910 = vunpack.c.l.b16 %v1415
        %v2911 = vunpack.c.h.b16 %v1415
        %v2912 = vunpack.c.l.b16 %v1416
        %v2913 = vunpack.c.h.b16 %v1416
        %v2914 = vunpack.c.l.b16 %v1417
        %v2915 = vunpack.c.h.b16 %v1417
        %v2916 = vunpack.c.l.b16 %v1418
        %v2917 = vunpack.c.h.b16 %v1418
        %v2918 = vunpack.c.l.b16 %v1419
        %v2919 = vunpack.c.h.b16 %v1419
        %v2920 = vunpack.c.l.b16 %v1420
        %v2921 = vunpack.c.h.b16 %v1420
        %v2922 = vunpack.c.l.b16 %v1421
        %v2923 = vunpack.c.h.b16 %v1421
        %v2924 = vunpack.c.l.b16 %v1422
        %v2925 = vunpack.c.h.b16 %v1422
        %v2926 = vunpack.c.l.b16 %v1423
        %v2927 = vunpack.c.h.b16 %v1423
        %v2928 = vunpack.c.l.b16 %v1424
        %v2929 = vunpack.c.h.b16 %v1424
        %v2930 = vunpack.c.l.b16 %v1425
        %v2931 = vunpack.c.h.b16 %v1425
        %v2932 = vunpack.c.l.b16 %v1426
        %v2933 = vunpack.c.h.b16 %v1426
        %v2934 = vunpack.c.l.b16 %v1427
        %v2935 = vunpack.c.h.b16 %v1427
        %v2936 = vunpack.c.l.b16 %v1428
        %v2937 = vunpack.c.h.b16 %v1428
        %v2938 = vunpack.c.l.b16 %v1429
        %v2939 = vunpack.c.h.b16 %v1429
        %v2940 = vunpack.c.l.b16 %v1430
        %v2941 = vunpack.c.h.b16 %v1430
        %v2942 = vunpack.c.l.b16 %v1431
        %v2943 = vunpack.c.h.b16 %v1431
        %v2944 = vunpack.c.l.b16 %v1432
        %v2945 = vunpack.c.h.b16 %v1432
        %v2946 = vunpack.c.l.b16 %v1433
        %v2947 = vunpack.c.h.b16 %v1433
        %v2948 = vunpack.c.l.b16 %v1434
        %v2949 = vunpack.c.h.b16 %v1434
        %v2950 = vunpack.c.l.b16 %v1435
        %v2951 = vunpack.c.h.b16 %v1435
        %v2952 = vunpack.c.l.b16 %v1436
        %v2953 = vunpack.c.h.b16 %v1436
        %v2954 = vunpack.c.l.b16 %v1437
        %v2955 = vunpack.c.h.b16 %v1437
        %v2956 = vunpack.c.l.b16 %v1438
        %v2957 = vunpack.c.h.b16 %v1438
        %v2958 = vunpack.c.l.b16 %v1439
        %v2959 = vunpack.c.h.b16 %v1439
        %v2960 = vunpack.c.l.b16 %v1440
        %v2961 = vunpack.c.h.b16 %v1440
        %v2962 = vunpack.c.l.b16 %v1441
        %v2963 = vunpack.c.h.b16 %v1441
        %v2964 = vunpack.c.l.b16 %v1442
        %v2965 = vunpack.c.h.b16 %v1442
        %v2966 = vunpack.c.l.b16 %v1443
        %v2967 = vunpack.c.h.b16 %v1443
        %v2968 = vunpack.c.l.b16 %v1444
        %v2969 = vunpack.c.h.b16 %v1444
        %v2970 = vunpack.c.l.b16 %v1445
        %v2971 = vunpack.c.h.b16 %v1445
        %v2972 = vunpack.c.l.b16 %v1446
        %v2973 = vunpack.c.h.b16 %v1446
        %v2974 = vunpack.c.l.b16 %v1447
        %v2975 = vunpack.c.h.b16 %v1447
        %v2976 = vunpack.c.l.b16 %v1448
        %v2977 = vunpack.c.h.b16 %v1448
        %v2978 = vunpack.c.l.b16 %v1449
        %v2979 = vunpack.c.h.b16 %v1449
        %v2980 = vunpack.c.l.b16 %v1450
        %v2981 = vunpack.c.h.b16 %v1450
        %v2982 = vunpack.c.l.b16 %v1451
        %v2983 = vunpack.c.h.b16 %v1451
        %v2984 = vunpack.c.l.b16 %v1452
        %v2985 = vunpack.c.h.b16 %v1452
        %v2986 = vunpack.c.l.b16 %v1453
        %v2987 = vunpack.c.h.b16 %v1453
        %v2988 = vunpack.c.l.b16 %v1454
        %v2989 = vunpack.c.h.b16 %v1454
        %v2990 = vunpack.c.l.b16 %v1455
        %v2991 = vunpack.c.h.b16 %v1455
        %v2992 = vunpack.c.l.b16 %v1456
        %v2993 = vunpack.c.h.b16 %v1456
        %v2994 = vunpack.c.l.b16 %v1457
        %v2995 = vunpack.c.h.b16 %v1457
        %v2996 = vunpack.c.l.b16 %v1458
        %v2997 = vunpack.c.h.b16 %v1458
        %v2998 = vunpack.c.l.b16 %v1459
        %v2999 = vunpack.c.h.b16 %v1459
        %v3000 = vunpack.c.l.b16 %v1460
        %v3001 = vunpack.c.h.b16 %v1460
        %v3002 = vunpack.c.l.b16 %v1461
        %v3003 = vunpack.c.h.b16 %v1461
        %v3004 = vunpack.c.l.b16 %v1462
        %v3005 = vunpack.c.h.b16 %v1462
        %v3006 = vunpack.c.l.b16 %v1463
        %v3007 = vunpack.c.h.b16 %v1463
        %v3008 = vunpack.c.l.b16 %v1464
        %v3009 = vunpack.c.h.b16 %v1464
        %v3010 = vunpack.c.l.b16 %v1465
        %v3011 = vunpack.c.h.b16 %v1465
        %v3012 = vunpack.c.l.b16 %v1466
        %v3013 = vunpack.c.h.b16 %v1466
        %v3014 = vunpack.c.l.b16 %v1467
        %v3015 = vunpack.c.h.b16 %v1467
        %v3016 = vunpack.c.l.b16 %v1468
        %v3017 = vunpack.c.h.b16 %v1468
        %v3018 = vunpack.c.l.b16 %v1469
        %v3019 = vunpack.c.h.b16 %v1469
        %v3020 = vunpack.c.l.b16 %v1470
        %v3021 = vunpack.c.h.b16 %v1470
        %v3022 = vunpack.c.l.b16 %v1471
        %v3023 = vunpack.c.h.b16 %v1471
        %v3024 = vunpack.c.l.b16 %v1472
        %v3025 = vunpack.c.h.b16 %v1472
        %v3026 = vunpack.c.l.b16 %v1473
        %v3027 = vunpack.c.h.b16 %v1473
        %v3028 = vunpack.c.l.b16 %v1474
        %v3029 = vunpack.c.h.b16 %v1474
        %v3030 = vunpack.c.l.b16 %v1475
        %v3031 = vunpack.c.h.b16 %v1475
        %v3032 = vunpack.c.l.b16 %v1476
        %v3033 = vunpack.c.h.b16 %v1476
        %v3034 = vunpack.c.l.b16 %v1477
        %v3035 = vunpack.c.h.b16 %v1477
        %v3036 = vunpack.c.l.b16 %v1478
        %v3037 = vunpack.c.h.b16 %v1478
        %v3038 = vunpack.c.l.b16 %v1479
        %v3039 = vunpack.c.h.b16 %v1479
        %v3040 = vunpack.c.l.b16 %v1480
        %v3041 = vunpack.c.h.b16 %v1480
        %v3042 = vunpack.c.l.b16 %v1481
        %v3043 = vunpack.c.h.b16 %v1481
        %v3044 = vunpack.c.l.b16 %v1482
        %v3045 = vunpack.c.h.b16 %v1482
        %v3046 = vunpack.c.l.b16 %v1483
        %v3047 = vunpack.c.h.b16 %v1483
        %v3048 = vunpack.c.l.b16 %v1484
        %v3049 = vunpack.c.h.b16 %v1484
        %v3050 = vunpack.c.l.b16 %v1485
        %v3051 = vunpack.c.h.b16 %v1485
        %v3052 = vunpack.c.l.b16 %v1486
        %v3053 = vunpack.c.h.b16 %v1486
        %v3054 = vunpack.c.l.b16 %v1487
        %v3055 = vunpack.c.h.b16 %v1487
        %v3056 = vunpack.c.l.b16 %v1488
        %v3057 = vunpack.c.h.b16 %v1488
        %v3058 = vunpack.c.l.b16 %v1489
        %v3059 = vunpack.c.h.b16 %v1489
        %v3060 = vunpack.c.l.b16 %v1490
        %v3061 = vunpack.c.h.b16 %v1490
        %v3062 = vunpack.c.l.b16 %v1491
        %v3063 = vunpack.c.h.b16 %v1491
        %v3064 = vunpack.c.l.b16 %v1492
        %v3065 = vunpack.c.h.b16 %v1492
        %v3066 = vunpack.c.l.b16 %v1493
        %v3067 = vunpack.c.h.b16 %v1493
        %v3068 = vunpack.c.l.b16 %v1494
        %v3069 = vunpack.c.h.b16 %v1494
        %v3070 = vunpack.c.l.b16 %v1495
        %v3071 = vunpack.c.h.b16 %v1495
        %v3072 = vunpack.c.l.b16 %v1496
        %v3073 = vunpack.c.h.b16 %v1496
        %v3074 = vunpack.c.l.b16 %v1497
        %v3075 = vunpack.c.h.b16 %v1497
        %v3076 = vunpack.c.l.b16 %v1498
        %v3077 = vunpack.c.h.b16 %v1498
        %v3078 = vunpack.c.l.b16 %v1499
        %v3079 = vunpack.c.h.b16 %v1499
        %v3080 = vunpack.c.l.b16 %v1500
        %v3081 = vunpack.c.h.b16 %v1500
        %v3082 = vunpack.c.l.b16 %v1501
        %v3083 = vunpack.c.h.b16 %v1501
        %v3084 = vunpack.c.l.b16 %v1502
        %v3085 = vunpack.c.h.b16 %v1502
        %v3086 = vunpack.c.l.b16 %v1503
        %v3087 = vunpack.c.h.b16 %v1503
        %v3088 = vunpack.c.l.b16 %v1504
        %v3089 = vunpack.c.h.b16 %v1504
        %v3090 = vunpack.c.l.b16 %v1505
        %v3091 = vunpack.c.h.b16 %v1505
        %v3092 = vunpack.c.l.b16 %v1506
        %v3093 = vunpack.c.h.b16 %v1506
        %v3094 = vunpack.c.l.b16 %v1507
        %v3095 = vunpack.c.h.b16 %v1507
        %v3096 = vunpack.c.l.b16 %v1508
        %v3097 = vunpack.c.h.b16 %v1508
        %v3098 = vunpack.c.l.b16 %v1509
        %v3099 = vunpack.c.h.b16 %v1509
        %v3100 = vunpack.c.l.b16 %v1510
        %v3101 = vunpack.c.h.b16 %v1510
        %v3102 = vunpack.c.l.b16 %v1511
        %v3103 = vunpack.c.h.b16 %v1511
        %v3104 = vunpack.c.l.b16 %v1512
        %v3105 = vunpack.c.h.b16 %v1512
        %v3106 = vunpack.c.l.b16 %v1513
        %v3107 = vunpack.c.h.b16 %v1513
        %v3108 = vunpack.c.l.b16 %v1514
        %v3109 = vunpack.c.h.b16 %v1514
        %v3110 = vunpack.c.l.b16 %v1515
        %v3111 = vunpack.c.h.b16 %v1515
        %v3112 = vunpack.c.l.b16 %v1516
        %v3113 = vunpack.c.h.b16 %v1516
        %v3114 = vunpack.c.l.b16 %v1517
        %v3115 = vunpack.c.h.b16 %v1517
        %v3116 = vunpack.c.l.b16 %v1518
        %v3117 = vunpack.c.h.b16 %v1518
        %v3118 = vunpack.c.l.b16 %v1519
        %v3119 = vunpack.c.h.b16 %v1519
        %v3120 = vunpack.c.l.b16 %v1520
        %v3121 = vunpack.c.h.b16 %v1520
        %v3122 = vunpack.c.l.b16 %v1521
        %v3123 = vunpack.c.h.b16 %v1521
        %v3124 = vunpack.c.l.b16 %v1522
        %v3125 = vunpack.c.h.b16 %v1522
        %v3126 = vunpack.c.l.b16 %v1523
        %v3127 = vunpack.c.h.b16 %v1523
        %v3128 = vunpack.c.l.b16 %v1524
        %v3129 = vunpack.c.h.b16 %v1524
        %v3130 = vunpack.c.l.b16 %v1525
        %v3131 = vunpack.c.h.b16 %v1525
        %v3132 = vunpack.c.l.b16 %v1526
        %v3133 = vunpack.c.h.b16 %v1526
        %v3134 = vunpack.c.l.b16 %v1527
        %v3135 = vunpack.c.h.b16 %v1527
        %v3136 = vunpack.c.l.b16 %v1528
        %v3137 = vunpack.c.h.b16 %v1528
        %v3138 = vunpack.c.l.b16 %v1529
        %v3139 = vunpack.c.h.b16 %v1529
        %v3140 = vunpack.c.l.b16 %v1530
        %v3141 = vunpack.c.h.b16 %v1530
        %v3142 = vunpack.c.l.b16 %v1531
        %v3143 = vunpack.c.h.b16 %v1531
        %v3144 = vunpack.c.l.b16 %v1532
        %v3145 = vunpack.c.h.b16 %v1532
        %v3146 = vunpack.c.l.b16 %v1533
        %v3147 = vunpack.c.h.b16 %v1533
        %v3148 = vunpack.c.l.b16 %v1534
        %v3149 = vunpack.c.h.b16 %v1534
        %v3150 = vunpack.c.l.b16 %v1535
        %v3151 = vunpack.c.h.b16 %v1535
        %v3152 = vunpack.c.l.b16 %v1536
        %v3153 = vunpack.c.h.b16 %v1536
        %v3154 = vunpack.c.l.b16 %v1537
        %v3155 = vunpack.c.h.b16 %v1537
        %v3156 = vunpack.c.l.b16 %v1538
        %v3157 = vunpack.c.h.b16 %v1538
        %v3158 = vunpack.c.l.b16 %v1539
        %v3159 = vunpack.c.h.b16 %v1539
        %v3160 = vunpack.c.l.b16 %v1540
        %v3161 = vunpack.c.h.b16 %v1540
        %v3162 = vunpack.c.l.b16 %v1541
        %v3163 = vunpack.c.h.b16 %v1541
        %v3164 = vunpack.c.l.b16 %v1542
        %v3165 = vunpack.c.h.b16 %v1542
        %v3166 = vunpack.c.l.b16 %v1543
        %v3167 = vunpack.c.h.b16 %v1543
        %v3168 = vunpack.c.l.b16 %v1544
        %v3169 = vunpack.c.h.b16 %v1544
        %v3170 = vunpack.c.l.b16 %v1545
        %v3171 = vunpack.c.h.b16 %v1545
        %v3172 = vunpack.c.l.b16 %v1546
        %v3173 = vunpack.c.h.b16 %v1546
        %v3174 = vunpack.c.l.b16 %v1547
        %v3175 = vunpack.c.h.b16 %v1547
        %v3176 = vpack.c.b16 %v2892, %v2888
        %v3177 = vpack.c.b16 %v2893, %v2889
        %v3178 = vpack.c.b16 %v2894, %v2890
        %v3179 = vpack.c.b16 %v2895, %v2891
        %v3180 = vpack.c.b16 %v2900, %v2896
        %v3181 = vpack.c.b16 %v2901, %v2897
        %v3182 = vpack.c.b16 %v2902, %v2898
        %v3183 = vpack.c.b16 %v2903, %v2899
        %v3184 = vpack.c.b16 %v2908, %v2904
        %v3185 = vpack.c.b16 %v2909, %v2905
        %v3186 = vpack.c.b16 %v2910, %v2906
        %v3187 = vpack.c.b16 %v2911, %v2907
        %v3188 = vpack.c.b16 %v2916, %v2912
        %v3189 = vpack.c.b16 %v2917, %v2913
        %v3190 = vpack.c.b16 %v2918, %v2914
        %v3191 = vpack.c.b16 %v2919, %v2915
        %v3192 = vpack.c.b16 %v2924, %v2920
        %v3193 = vpack.c.b16 %v2925, %v2921
        %v3194 = vpack.c.b16 %v2926, %v2922
        %v3195 = vpack.c.b16 %v2927, %v2923
        %v3196 = vpack.c.b16 %v2932, %v2928
        %v3197 = vpack.c.b16 %v2933, %v2929
        %v3198 = vpack.c.b16 %v2934, %v2930
        %v3199 = vpack.c.b16 %v2935, %v2931
        %v3200 = vpack.c.b16 %v2940, %v2936
        %v3201 = vpack.c.b16 %v2941, %v2937
        %v3202 = vpack.c.b16 %v2942, %v2938
        %v3203 = vpack.c.b16 %v2943, %v2939
        %v3204 = vpack.c.b16 %v2948, %v2944
        %v3205 = vpack.c.b16 %v2949, %v2945
        %v3206 = vpack.c.b16 %v2950, %v2946
        %v3207 = vpack.c.b16 %v2951, %v2947
        %v3208 = vpack.c.b16 %v2956, %v2952
        %v3209 = vpack.c.b16 %v2957, %v2953
        %v3210 = vpack.c.b16 %v2958, %v2954
        %v3211 = vpack.c.b16 %v2959, %v2955
        %v3212 = vpack.c.b16 %v2964, %v2960
        %v3213 = vpack.c.b16 %v2965, %v2961
        %v3214 = vpack.c.b16 %v2966, %v2962
        %v3215 = vpack.c.b16 %v2967, %v2963
        %v3216 = vpack.c.b16 %v2972, %v2968
        %v3217 = vpack.c.b16 %v2973, %v2969
        %v3218 = vpack.c.b16 %v2974, %v2970
        %v3219 = vpack.c.b16 %v2975, %v2971
        %v3220 = vpack.c.b16 %v2980, %v2976
        %v3221 = vpack.c.b16 %v2981, %v2977
        %v3222 = vpack.c.b16 %v2982, %v2978
        %v3223 = vpack.c.b16 %v2983, %v2979
        %v3224 = vpack.c.b16 %v2988, %v2984
        %v3225 = vpack.c.b16 %v2989, %v2985
        %v3226 = vpack.c.b16 %v2990, %v2986
        %v3227 = vpack.c.b16 %v2991, %v2987
        %v3228 = vpack.c.b16 %v2996, %v2992
        %v3229 = vpack.c.b16 %v2997, %v2993
        %v3230 = vpack.c.b16 %v2998, %v2994
        %v3231 = vpack.c.b16 %v2999, %v2995
        %v3232 = vpack.c.b16 %v3004, %v3000
        %v3233 = vpack.c.b16 %v3005, %v3001
        %v3234 = vpack.c.b16 %v3006, %v3002
        %v3235 = vpack.c.b16 %v3007, %v3003
        %v3236 = vpack.c.b16 %v3012, %v3008
        %v3237 = vpack.c.b16 %v3013, %v3009
        %v3238 = vpack.c.b16 %v3014, %v3010
        %v3239 = vpack.c.b16 %v3015, %v3011
        %v3240 = vpack.c.b16 %v3020, %v3016
        %v3241 = vpack.c.b16 %v3021, %v3017
        %v3242 = vpack.c.b16 %v3022, %v3018
        %v3243 = vpack.c.b16 %v3023, %v3019
        %v3244 = vpack.c.b16 %v3028, %v3024
        %v3245 = vpack.c.b16 %v3029, %v3025
        %v3246 = vpack.c.b16 %v3030, %v3026
        %v3247 = vpack.c.b16 %v3031, %v3027
        %v3248 = vpack.c.b16 %v3036, %v3032
        %v3249 = vpack.c.b16 %v3037, %v3033
        %v3250 = vpack.c.b16 %v3038, %v3034
        %v3251 = vpack.c.b16 %v3039, %v3035
        %v3252 = vpack.c.b16 %v3044, %v3040
        %v3253 = vpack.c.b16 %v3045, %v3041
        %v3254 = vpack.c.b16 %v3046, %v3042
        %v3255 = vpack.c.b16 %v3047, %v3043
        %v3256 = vpack.c.b16 %v3052, %v3048
        %v3257 = vpack.c.b16 %v3053, %v3049
        %v3258 = vpack.c.b16 %v3054, %v3050
        %v3259 = vpack.c.b16 %v3055, %v3051
        %v3260 = vpack.c.b16 %v3060, %v3056
        %v3261 = vpack.c.b16 %v3061, %v3057
        %v3262 = vpack.c.b16 %v3062, %v3058
        %v3263 = vpack.c.b16 %v3063, %v3059
        %v3264 = vpack.c.b16 %v3068, %v3064
        %v3265 = vpack.c.b16 %v3069, %v3065
        %v3266 = vpack.c.b16 %v3070, %v3066
        %v3267 = vpack.c.b16 %v3071, %v3067
        %v3268 = vpack.c.b16 %v3076, %v3072
        %v3269 = vpack.c.b16 %v3077, %v3073
        %v3270 = vpack.c.b16 %v3078, %v3074
        %v3271 = vpack.c.b16 %v3079, %v3075
        %v3272 = vpack.c.b16 %v3084, %v3080
        %v3273 = vpack.c.b16 %v3085, %v3081
        %v3274 = vpack.c.b16 %v3086, %v3082
        %v3275 = vpack.c.b16 %v3087, %v3083
        %v3276 = vpack.c.b16 %v3092, %v3088
        %v3277 = vpack.c.b16 %v3093, %v3089
        %v3278 = vpack.c.b16 %v3094, %v3090
        %v3279 = vpack.c.b16 %v3095, %v3091
        %v3280 = vpack.c.b16 %v3100, %v3096
        %v3281 = vpack.c.b16 %v3101, %v3097
        %v3282 = vpack.c.b16 %v3102, %v3098
        %v3283 = vpack.c.b16 %v3103, %v3099
        %v3284 = vpack.c.b16 %v3108, %v3104
        %v3285 = vpack.c.b16 %v3109, %v3105
        %v3286 = vpack.c.b16 %v3110, %v3106
        %v3287 = vpack.c.b16 %v3111, %v3107
        %v3288 = vpack.c.b16 %v3116, %v3112
        %v3289 = vpack.c.b16 %v3117, %v3113
        %v3290 = vpack.c.b16 %v3118, %v3114
        %v3291 = vpack.c.b16 %v3119, %v3115
        %v3292 = vpack.c.b16 %v3124, %v3120
        %v3293 = vpack.c.b16 %v3125, %v3121
        %v3294 = vpack.c.b16 %v3126, %v3122
        %v3295 = vpack.c.b16 %v3127, %v3123
        %v3296 = vpack.c.b16 %v3132, %v3128
        %v3297 = vpack.c.b16 %v3133, %v3129
        %v3298 = vpack.c.b16 %v3134, %v3130
        %v3299 = vpack.c.b16 %v3135, %v3131
        %v3300 = vpack.c.b16 %v3140, %v3136
        %v3301 = vpack.c.b16 %v3141, %v3137
        %v3302 = vpack.c.b16 %v3142, %v3138
        %v3303 = vpack.c.b16 %v3143, %v3139
        %v3304 = vpack.c.b16 %v3148, %v3144
        %v3305 = vpack.c.b16 %v3149, %v3145
        %v3306 = vpack.c.b16 %v3150, %v3146
        %v3307 = vpack.c.b16 %v3151, %v3147
        %v3308 = vpack.c.b16 %v3156, %v3152
        %v3309 = vpack.c.b16 %v3157, %v3153
        %v3310 = vpack.c.b16 %v3158, %v3154
        %v3311 = vpack.c.b16 %v3159, %v3155
        %v3312 = vpack.c.b16 %v3164, %v3160
        %v3313 = vpack.c.b16 %v3165, %v3161
        %v3314 = vpack.c.b16 %v3166, %v3162
        %v3315 = vpack.c.b16 %v3167, %v3163
        %v3316 = vpack.c.b16 %v3172, %v3168
        %v3317 = vpack.c.b16 %v3173, %v3169
        %v3318 = vpack.c.b16 %v3174, %v3170
        %v3319 = vpack.c.b16 %v3175, %v3171
        %v3464 = vsel %vm2482, %v1403, 0
        %3466 = vmatprep.subr.bf16.mxu0 %v3177
        %3467 = vmatpush1.bf16.msra.mxu0 %v3176
        %3468 = vmatprep.subr.bf16.mxu0 %v3181
        %3469 = vmatpush1.bf16.msra.mxu0 %v3180
        %3470 = vmatprep.subr.bf16.mxu0 %v3185
        %3471 = vmatpush1.bf16.msra.mxu0 %v3184
        %3472 = vmatprep.subr.bf16.mxu0 %v3189
        %3473 = vmatpush1.bf16.msra.mxu0 %v3188
        %3474 = vmatprep.subr.bf16.mxu0 %v3193
        %3475 = vmatpush1.bf16.msra.mxu0 %v3192
        %3476 = vmatprep.subr.bf16.mxu0 %v3197
        %3477 = vmatpush1.bf16.msra.mxu0 %v3196
        %3478 = vmatprep.subr.bf16.mxu0 %v3201
        %3479 = vmatpush1.bf16.msra.mxu0 %v3200
        %3480 = vmatprep.subr.bf16.mxu0 %v3205
        %3481 = vmatpush1.bf16.msra.mxu0 %v3204
        %3482 = vmatprep.subr.bf16.mxu0 %v3209
        %3483 = vmatpush1.bf16.msra.mxu0 %v3208
        %3484 = vmatprep.subr.bf16.mxu0 %v3213
        %3485 = vmatpush1.bf16.msra.mxu0 %v3212
        %3486 = vmatprep.subr.bf16.mxu0 %v3217
        %3487 = vmatpush1.bf16.msra.mxu0 %v3216
        %3488 = vmatprep.subr.bf16.mxu0 %v3221
        %3489 = vmatpush1.bf16.msra.mxu0 %v3220
        %3490 = vmatprep.subr.bf16.mxu0 %v3225
        %3491 = vmatpush1.bf16.msra.mxu0 %v3224
        %3492 = vmatprep.subr.bf16.mxu0 %v3229
        %3493 = vmatpush1.bf16.msra.mxu0 %v3228
        %3494 = vmatprep.subr.bf16.mxu0 %v3233
        %3495 = vmatpush1.bf16.msra.mxu0 %v3232
        %3496 = vmatprep.subr.bf16.mxu0 %v3237
        %3497 = vmatpush1.bf16.msra.mxu0 %v3236
        %3498 = vmatprep.mubr.bf16.mxu0 %v1400
        %3499 = vmatmul.mubr.bf16.gmra.mrb[0].mxu0 %v1399
        %v3500 = vpop.f32.mrb[0].mxu0
        %v3501 = vadd.f32 %v2607, %v3500
        %v3502 = vpop.f32.mrb[0].mxu0
        %v3503 = vadd.f32 %v2609, %v3502
        %v3504 = vpop.f32.mrb[0].mxu0
        %v3505 = vadd.f32 %v2611, %v3504
        %v3506 = vpop.f32.mrb[0].mxu0
        %v3507 = vadd.f32 %v2613, %v3506
        %3508 = vdwg.mxu0
        %3509 = vmatprep.subr.bf16.mxu0 %v3241
        %3510 = vmatpush1.bf16.msra.mxu0 %v3240
        %3511 = vmatprep.subr.bf16.mxu0 %v3245
        %3512 = vmatpush1.bf16.msra.mxu0 %v3244
        %3513 = vmatprep.subr.bf16.mxu0 %v3249
        %3514 = vmatpush1.bf16.msra.mxu0 %v3248
        %3515 = vmatprep.subr.bf16.mxu0 %v3253
        %3516 = vmatpush1.bf16.msra.mxu0 %v3252
        %3517 = vmatprep.subr.bf16.mxu0 %v3257
        %3518 = vmatpush1.bf16.msra.mxu0 %v3256
        %3519 = vmatprep.subr.bf16.mxu0 %v3261
        %3520 = vmatpush1.bf16.msra.mxu0 %v3260
        %3521 = vmatprep.subr.bf16.mxu0 %v3265
        %3522 = vmatpush1.bf16.msra.mxu0 %v3264
        %3523 = vmatprep.subr.bf16.mxu0 %v3269
        %3524 = vmatpush1.bf16.msra.mxu0 %v3268
        %3525 = vmatprep.subr.bf16.mxu0 %v3273
        %3526 = vmatpush1.bf16.msra.mxu0 %v3272
        %3527 = vmatprep.subr.bf16.mxu0 %v3277
        %3528 = vmatpush1.bf16.msra.mxu0 %v3276
        %3529 = vmatprep.subr.bf16.mxu0 %v3281
        %3530 = vmatpush1.bf16.msra.mxu0 %v3280
        %3531 = vmatprep.subr.bf16.mxu0 %v3285
        %3532 = vmatpush1.bf16.msra.mxu0 %v3284
        %3533 = vmatprep.subr.bf16.mxu0 %v3289
        %3534 = vmatpush1.bf16.msra.mxu0 %v3288
        %3535 = vmatprep.subr.bf16.mxu0 %v3293
        %3536 = vmatpush1.bf16.msra.mxu0 %v3292
        %3537 = vmatprep.subr.bf16.mxu0 %v3297
        %3538 = vmatpush1.bf16.msra.mxu0 %v3296
        %3539 = vmatprep.subr.bf16.mxu0 %v3301
        %3540 = vmatpush1.bf16.msra.mxu0 %v3300
        %3541 = vmatprep.mubr.bf16.mxu0 %v1402
        %3542 = vmatmul.mubr.bf16.gmra.mrb[0].mxu0 %v1401
        %v3543 = vpop.f32.mrb[0].mxu0
        %v3544 = vadd.f32 %v3501, %v3543
        %v3545 = vpop.f32.mrb[0].mxu0
        %v3546 = vadd.f32 %v3503, %v3545
        %v3547 = vpop.f32.mrb[0].mxu0
        %v3548 = vadd.f32 %v3505, %v3547
        %v3549 = vpop.f32.mrb[0].mxu0
        %v3550 = vadd.f32 %v3507, %v3549
        %3551 = vdwg.mxu0
        %3552 = vmatprep.subr.bf16.mxu0 %v3305
        %3553 = vmatpush1.bf16.msra.mxu0 %v3304
        %3554 = vmatprep.subr.bf16.mxu0 %v3309
        %3555 = vmatpush1.bf16.msra.mxu0 %v3308
        %3556 = vmatprep.subr.bf16.mxu0 %v3313
        %3557 = vmatpush1.bf16.msra.mxu0 %v3312
        %3558 = vmatprep.subr.bf16.mxu0 %v3317
        %3559 = vmatpush1.bf16.msra.mxu0 %v3316
        %3560 = vmatprep.subr.bf16.mxu0 0
        %3561 = vmatpush1.bf16.msra.mxu0 0
        %3562 = vmatprep.subr.bf16.mxu0 0
        %3563 = vmatpush1.bf16.msra.mxu0 0
        %3564 = vmatprep.subr.bf16.mxu0 0
        %3565 = vmatpush1.bf16.msra.mxu0 0
        %3566 = vmatprep.subr.bf16.mxu0 0
        %3567 = vmatpush1.bf16.msra.mxu0 0
        %3568 = vmatprep.subr.bf16.mxu0 0
        %3569 = vmatpush1.bf16.msra.mxu0 0
        %3570 = vmatprep.subr.bf16.mxu0 0
        %3571 = vmatpush1.bf16.msra.mxu0 0
        %3572 = vmatprep.subr.bf16.mxu0 0
        %3573 = vmatpush1.bf16.msra.mxu0 0
        %3574 = vmatprep.subr.bf16.mxu0 0
        %3575 = vmatpush1.bf16.msra.mxu0 0
        %3576 = vmatprep.subr.bf16.mxu0 0
        %3577 = vmatpush1.bf16.msra.mxu0 0
        %3578 = vmatprep.subr.bf16.mxu0 0
        %3579 = vmatpush1.bf16.msra.mxu0 0
        %3580 = vmatprep.subr.bf16.mxu0 0
        %3581 = vmatpush1.bf16.msra.mxu0 0
        %3582 = vmatprep.subr.bf16.mxu0 0
        %3583 = vmatpush1.bf16.msra.mxu0 0
        %3584 = vmatprep.mubr.bf16.mxu0 0
        %3585 = vmatmul.mubr.bf16.gmra.mrb[0].mxu0 %v3464
        %v3586 = vpop.f32.mrb[0].mxu0
        %v3587 = vadd.f32 %v3544, %v3586
        %v3588 = vpop.f32.mrb[0].mxu0
        %v3589 = vadd.f32 %v3546, %v3588
        %v3590 = vpop.f32.mrb[0].mxu0
        %v3591 = vadd.f32 %v3548, %v3590
        %v3592 = vpop.f32.mrb[0].mxu0
        %v3593 = vadd.f32 %v3550, %v3592
        %3594 = vdwg.mxu0
        %3595 = vmatprep.subr.bf16.mxu0 %v3179
        %3596 = vmatpush1.bf16.msra.mxu0 %v3178
        %3597 = vmatprep.subr.bf16.mxu0 %v3183
        %3598 = vmatpush1.bf16.msra.mxu0 %v3182
        %3599 = vmatprep.subr.bf16.mxu0 %v3187
        %3600 = vmatpush1.bf16.msra.mxu0 %v3186
        %3601 = vmatprep.subr.bf16.mxu0 %v3191
        %3602 = vmatpush1.bf16.msra.mxu0 %v3190
        %3603 = vmatprep.subr.bf16.mxu0 %v3195
        %3604 = vmatpush1.bf16.msra.mxu0 %v3194
        %3605 = vmatprep.subr.bf16.mxu0 %v3199
        %3606 = vmatpush1.bf16.msra.mxu0 %v3198
        %3607 = vmatprep.subr.bf16.mxu0 %v3203
        %3608 = vmatpush1.bf16.msra.mxu0 %v3202
        %3609 = vmatprep.subr.bf16.mxu0 %v3207
        %3610 = vmatpush1.bf16.msra.mxu0 %v3206
        %3611 = vmatprep.subr.bf16.mxu0 %v3211
        %3612 = vmatpush1.bf16.msra.mxu0 %v3210
        %3613 = vmatprep.subr.bf16.mxu0 %v3215
        %3614 = vmatpush1.bf16.msra.mxu0 %v3214
        %3615 = vmatprep.subr.bf16.mxu0 %v3219
        %3616 = vmatpush1.bf16.msra.mxu0 %v3218
        %3617 = vmatprep.subr.bf16.mxu0 %v3223
        %3618 = vmatpush1.bf16.msra.mxu0 %v3222
        %3619 = vmatprep.subr.bf16.mxu0 %v3227
        %3620 = vmatpush1.bf16.msra.mxu0 %v3226
        %3621 = vmatprep.subr.bf16.mxu0 %v3231
        %3622 = vmatpush1.bf16.msra.mxu0 %v3230
        %3623 = vmatprep.subr.bf16.mxu0 %v3235
        %3624 = vmatpush1.bf16.msra.mxu0 %v3234
        %3625 = vmatprep.subr.bf16.mxu0 %v3239
        %3626 = vmatpush1.bf16.msra.mxu0 %v3238
        %3627 = vmatprep.mubr.bf16.mxu0 %v1400
        %3628 = vmatmul.mubr.bf16.gmra.mrb[0].mxu0 %v1399
        %v3629 = vpop.f32.mrb[0].mxu0
        %v3630 = vadd.f32 %v2736, %v3629
        %v3631 = vpop.f32.mrb[0].mxu0
        %v3632 = vadd.f32 %v2738, %v3631
        %v3633 = vpop.f32.mrb[0].mxu0
        %v3634 = vadd.f32 %v2740, %v3633
        %v3635 = vpop.f32.mrb[0].mxu0
        %v3636 = vadd.f32 %v2742, %v3635
        %3637 = vdwg.mxu0
        %3638 = vmatprep.subr.bf16.mxu0 %v3243
        %3639 = vmatpush1.bf16.msra.mxu0 %v3242
        %3640 = vmatprep.subr.bf16.mxu0 %v3247
        %3641 = vmatpush1.bf16.msra.mxu0 %v3246
        %3642 = vmatprep.subr.bf16.mxu0 %v3251
        %3643 = vmatpush1.bf16.msra.mxu0 %v3250
        %3644 = vmatprep.subr.bf16.mxu0 %v3255
        %3645 = vmatpush1.bf16.msra.mxu0 %v3254
        %3646 = vmatprep.subr.bf16.mxu0 %v3259
        %3647 = vmatpush1.bf16.msra.mxu0 %v3258
        %3648 = vmatprep.subr.bf16.mxu0 %v3263
        %3649 = vmatpush1.bf16.msra.mxu0 %v3262
        %3650 = vmatprep.subr.bf16.mxu0 %v3267
        %3651 = vmatpush1.bf16.msra.mxu0 %v3266
        %3652 = vmatprep.subr.bf16.mxu0 %v3271
        %3653 = vmatpush1.bf16.msra.mxu0 %v3270
        %3654 = vmatprep.subr.bf16.mxu0 %v3275
        %3655 = vmatpush1.bf16.msra.mxu0 %v3274
        %3656 = vmatprep.subr.bf16.mxu0 %v3279
        %3657 = vmatpush1.bf16.msra.mxu0 %v3278
        %3658 = vmatprep.subr.bf16.mxu0 %v3283
        %3659 = vmatpush1.bf16.msra.mxu0 %v3282
        %3660 = vmatprep.subr.bf16.mxu0 %v3287
        %3661 = vmatpush1.bf16.msra.mxu0 %v3286
        %3662 = vmatprep.subr.bf16.mxu0 %v3291
        %3663 = vmatpush1.bf16.msra.mxu0 %v3290
        %3664 = vmatprep.subr.bf16.mxu0 %v3295
        %3665 = vmatpush1.bf16.msra.mxu0 %v3294
        %3666 = vmatprep.subr.bf16.mxu0 %v3299
        %3667 = vmatpush1.bf16.msra.mxu0 %v3298
        %3668 = vmatprep.subr.bf16.mxu0 %v3303
        %3669 = vmatpush1.bf16.msra.mxu0 %v3302
        %3670 = vmatprep.mubr.bf16.mxu0 %v1402
        %3671 = vmatmul.mubr.bf16.gmra.mrb[0].mxu0 %v1401
        %v3672 = vpop.f32.mrb[0].mxu0
        %v3673 = vadd.f32 %v3630, %v3672
        %v3674 = vpop.f32.mrb[0].mxu0
        %v3675 = vadd.f32 %v3632, %v3674
        %v3676 = vpop.f32.mrb[0].mxu0
        %v3677 = vadd.f32 %v3634, %v3676
        %v3678 = vpop.f32.mrb[0].mxu0
        %v3679 = vadd.f32 %v3636, %v3678
        %3680 = vdwg.mxu0
        %3681 = vmatprep.subr.bf16.mxu0 %v3307
        %3682 = vmatpush1.bf16.msra.mxu0 %v3306
        %3683 = vmatprep.subr.bf16.mxu0 %v3311
        %3684 = vmatpush1.bf16.msra.mxu0 %v3310
        %3685 = vmatprep.subr.bf16.mxu0 %v3315
        %3686 = vmatpush1.bf16.msra.mxu0 %v3314
        %3687 = vmatprep.subr.bf16.mxu0 %v3319
        %3688 = vmatpush1.bf16.msra.mxu0 %v3318
        %3689 = vmatprep.subr.bf16.mxu0 0
        %3690 = vmatpush1.bf16.msra.mxu0 0
        %3691 = vmatprep.subr.bf16.mxu0 0
        %3692 = vmatpush1.bf16.msra.mxu0 0
        %3693 = vmatprep.subr.bf16.mxu0 0
        %3694 = vmatpush1.bf16.msra.mxu0 0
        %3695 = vmatprep.subr.bf16.mxu0 0
        %3696 = vmatpush1.bf16.msra.mxu0 0
        %3697 = vmatprep.subr.bf16.mxu0 0
        %3698 = vmatpush1.bf16.msra.mxu0 0
        %3699 = vmatprep.subr.bf16.mxu0 0
        %3700 = vmatpush1.bf16.msra.mxu0 0
        %3701 = vmatprep.subr.bf16.mxu0 0
        %3702 = vmatpush1.bf16.msra.mxu0 0
        %3703 = vmatprep.subr.bf16.mxu0 0
        %3704 = vmatpush1.bf16.msra.mxu0 0
        %3705 = vmatprep.subr.bf16.mxu0 0
        %3706 = vmatpush1.bf16.msra.mxu0 0
        %3707 = vmatprep.subr.bf16.mxu0 0
        %3708 = vmatpush1.bf16.msra.mxu0 0
        %3709 = vmatprep.subr.bf16.mxu0 0
        %3710 = vmatpush1.bf16.msra.mxu0 0
        %3711 = vmatprep.subr.bf16.mxu0 0
        %3712 = vmatpush1.bf16.msra.mxu0 0
        %3713 = vmatprep.mubr.bf16.mxu0 0
        %3714 = vmatmul.mubr.bf16.gmra.mrb[0].mxu0 %v3464
        %v3715 = vpop.f32.mrb[0].mxu0
        %v3716 = vadd.f32 %v3673, %v3715
        %v3717 = vpop.f32.mrb[0].mxu0
        %v3718 = vadd.f32 %v3675, %v3717
        %v3719 = vpop.f32.mrb[0].mxu0
        %v3720 = vadd.f32 %v3677, %v3719
        %v3721 = vpop.f32.mrb[0].mxu0
        %v3722 = vadd.f32 %v3679, %v3721
        %3723 = vdwg.mxu0
        %s3724 = scalar_lea.vmem [#allocation7], 2304
        %v3725 = vld [vmem:[%s3724] sm:$0xff]
        %v3726 = vld [vmem:[%s3724 + $0x8] sm:$0xff]
        %v3727 = vld [vmem:[%s3724 + $0x10] sm:$0xff]
        %v3728 = vld [vmem:[%s3724 + $0x18] sm:$0xff]
        %v3729 = vld [vmem:[%s3724 + $0x20] sm:$0xff]
        %v3730 = vld [vmem:[%s3724 + $0x28] sm:$0xff]
        %v3731 = vld [vmem:[%s3724 + $0x30] sm:$0xff]
        %v3732 = vld [vmem:[%s3724 + $0x38] sm:$0xff]
        %v3733 = vld [vmem:[%s3724 + $0x40] sm:$0xff]
        %v3734 = vld [vmem:[%s3724 + $0x48] sm:$0xff]
        %v3735 = vld [vmem:[%s3724 + $0x50] sm:$0xff]
        %v3736 = vld [vmem:[%s3724 + $0x58] sm:$0xff]
        %v3737 = vld [vmem:[%s3724 + $0x60] sm:$0xff]
        %v3738 = vld [vmem:[%s3724 + $0x68] sm:$0xff]
        %v3739 = vld [vmem:[%s3724 + $0x70] sm:$0xff]
        %v3740 = vld [vmem:[%s3724 + $0x78] sm:$0xff]
        %v3741 = vld [vmem:[%s3724 + $0x80] sm:$0xff]
        %v3742 = vld [vmem:[%s3724 + $0x88] sm:$0xff]
        %v3743 = vld [vmem:[%s3724 + $0x90] sm:$0xff]
        %v3744 = vld [vmem:[%s3724 + $0x98] sm:$0xff]
        %v3745 = vld [vmem:[%s3724 + $0xa0] sm:$0xff]
        %v3746 = vld [vmem:[%s3724 + $0xa8] sm:$0xff]
        %v3747 = vld [vmem:[%s3724 + $0xb0] sm:$0xff]
        %v3748 = vld [vmem:[%s3724 + $0xb8] sm:$0xff]
        %v3749 = vld [vmem:[%s3724 + $0xc0] sm:$0xff]
        %v3750 = vld [vmem:[%s3724 + $0xc8] sm:$0xff]
        %v3751 = vld [vmem:[%s3724 + $0xd0] sm:$0xff]
        %v3752 = vld [vmem:[%s3724 + $0xd8] sm:$0xff]
        %v3753 = vld [vmem:[%s3724 + $0xe0] sm:$0xff]
        %v3754 = vld [vmem:[%s3724 + $0xe8] sm:$0xff]
        %v3755 = vld [vmem:[%s3724 + $0xf0] sm:$0xff]
        %v3756 = vld [vmem:[%s3724 + $0xf8] sm:$0xff]
        %v3757 = vld [vmem:[%s3724 + $0x100] sm:$0xff]
        %v3758 = vld [vmem:[%s3724 + $0x108] sm:$0xff]
        %v3759 = vld [vmem:[%s3724 + $0x110] sm:$0xff]
        %v3760 = vld [vmem:[%s3724 + $0x118] sm:$0xff]
        %v3761 = vld [vmem:[%s3724 + $0x120] sm:$0xff]
        %v3762 = vld [vmem:[%s3724 + $0x128] sm:$0xff]
        %v3763 = vld [vmem:[%s3724 + $0x130] sm:$0xff]
        %v3764 = vld [vmem:[%s3724 + $0x138] sm:$0xff]
        %v3765 = vld [vmem:[%s3724 + $0x140] sm:$0xff]
        %v3766 = vld [vmem:[%s3724 + $0x148] sm:$0xff]
        %v3767 = vld [vmem:[%s3724 + $0x150] sm:$0xff]
        %v3768 = vld [vmem:[%s3724 + $0x158] sm:$0xff]
        %v3769 = vld [vmem:[%s3724 + $0x160] sm:$0xff]
        %v3770 = vld [vmem:[%s3724 + $0x168] sm:$0xff]
        %v3771 = vld [vmem:[%s3724 + $0x170] sm:$0xff]
        %v3772 = vld [vmem:[%s3724 + $0x178] sm:$0xff]
        %v3773 = vld [vmem:[%s3724 + $0x180] sm:$0xff]
        %v3774 = vld [vmem:[%s3724 + $0x188] sm:$0xff]
        %v3775 = vld [vmem:[%s3724 + $0x190] sm:$0xff]
        %v3776 = vld [vmem:[%s3724 + $0x198] sm:$0xff]
        %v3777 = vld [vmem:[%s3724 + $0x1a0] sm:$0xff]
        %v3778 = vld [vmem:[%s3724 + $0x1a8] sm:$0xff]
        %v3779 = vld [vmem:[%s3724 + $0x1b0] sm:$0xff]
        %v3780 = vld [vmem:[%s3724 + $0x1b8] sm:$0xff]
        %v3781 = vld [vmem:[%s3724 + $0x1c0] sm:$0xff]
        %v3782 = vld [vmem:[%s3724 + $0x1c8] sm:$0xff]
        %v3783 = vld [vmem:[%s3724 + $0x1d0] sm:$0xff]
        %v3784 = vld [vmem:[%s3724 + $0x1d8] sm:$0xff]
        %v3785 = vld [vmem:[%s3724 + $0x1e0] sm:$0xff]
        %v3786 = vld [vmem:[%s3724 + $0x1e8] sm:$0xff]
        %v3787 = vld [vmem:[%s3724 + $0x1f0] sm:$0xff]
        %v3788 = vld [vmem:[%s3724 + $0x1f8] sm:$0xff]
        %v3789 = vld [vmem:[%s3724 + $0x200] sm:$0xff]
        %v3790 = vld [vmem:[%s3724 + $0x208] sm:$0xff]
        %v3791 = vld [vmem:[%s3724 + $0x210] sm:$0xff]
        %v3792 = vld [vmem:[%s3724 + $0x218] sm:$0xff]
        %v3793 = vld [vmem:[%s3724 + $0x220] sm:$0xff]
        %v3794 = vld [vmem:[%s3724 + $0x228] sm:$0xff]
        %v3795 = vld [vmem:[%s3724 + $0x230] sm:$0xff]
        %v3796 = vld [vmem:[%s3724 + $0x238] sm:$0xff]
        %v3797 = vld [vmem:[%s3724 + $0x240] sm:$0xff]
        %v3798 = vld [vmem:[%s3724 + $0x248] sm:$0xff]
        %v3799 = vld [vmem:[%s3724 + $0x250] sm:$0xff]
        %v3800 = vld [vmem:[%s3724 + $0x258] sm:$0xff]
        %v3801 = vld [vmem:[%s3724 + $0x260] sm:$0xff]
        %v3802 = vld [vmem:[%s3724 + $0x268] sm:$0xff]
        %v3803 = vld [vmem:[%s3724 + $0x270] sm:$0xff]
        %v3804 = vld [vmem:[%s3724 + $0x278] sm:$0xff]
        %v3805 = vld [vmem:[%s3724 + $0x280] sm:$0xff]
        %v3806 = vld [vmem:[%s3724 + $0x288] sm:$0xff]
        %v3807 = vld [vmem:[%s3724 + $0x290] sm:$0xff]
        %v3808 = vld [vmem:[%s3724 + $0x298] sm:$0xff]
        %v3809 = vld [vmem:[%s3724 + $0x2a0] sm:$0xff]
        %v3810 = vld [vmem:[%s3724 + $0x2a8] sm:$0xff]
        %v3811 = vld [vmem:[%s3724 + $0x2b0] sm:$0xff]
        %v3812 = vld [vmem:[%s3724 + $0x2b8] sm:$0xff]
        %v3813 = vld [vmem:[%s3724 + $0x2c0] sm:$0xff]
        %v3814 = vld [vmem:[%s3724 + $0x2c8] sm:$0xff]
        %v3815 = vld [vmem:[%s3724 + $0x2d0] sm:$0xff]
        %v3816 = vld [vmem:[%s3724 + $0x2d8] sm:$0xff]
        %v3817 = vld [vmem:[%s3724 + $0x2e0] sm:$0xff]
        %v3818 = vld [vmem:[%s3724 + $0x2e8] sm:$0xff]
        %v3819 = vld [vmem:[%s3724 + $0x2f0] sm:$0xff]
        %v3820 = vld [vmem:[%s3724 + $0x2f8] sm:$0xff]
        %v3821 = vld [vmem:[%s3724 + $0x300] sm:$0xff]
        %v3822 = vld [vmem:[%s3724 + $0x308] sm:$0xff]
        %v3823 = vld [vmem:[%s3724 + $0x310] sm:$0xff]
        %v3824 = vld [vmem:[%s3724 + $0x318] sm:$0xff]
        %v3825 = vld [vmem:[%s3724 + $0x320] sm:$0xff]
        %v3826 = vld [vmem:[%s3724 + $0x328] sm:$0xff]
        %v3827 = vld [vmem:[%s3724 + $0x330] sm:$0xff]
        %v3828 = vld [vmem:[%s3724 + $0x338] sm:$0xff]
        %v3829 = vld [vmem:[%s3724 + $0x340] sm:$0xff]
        %v3830 = vld [vmem:[%s3724 + $0x348] sm:$0xff]
        %v3831 = vld [vmem:[%s3724 + $0x350] sm:$0xff]
        %v3832 = vld [vmem:[%s3724 + $0x358] sm:$0xff]
        %v3833 = vld [vmem:[%s3724 + $0x360] sm:$0xff]
        %v3834 = vld [vmem:[%s3724 + $0x368] sm:$0xff]
        %v3835 = vld [vmem:[%s3724 + $0x370] sm:$0xff]
        %v3836 = vld [vmem:[%s3724 + $0x378] sm:$0xff]
        %v3837 = vld [vmem:[%s3724 + $0x380] sm:$0xff]
        %v3838 = vld [vmem:[%s3724 + $0x388] sm:$0xff]
        %v3839 = vld [vmem:[%s3724 + $0x390] sm:$0xff]
        %v3840 = vld [vmem:[%s3724 + $0x398] sm:$0xff]
        %v3841 = vld [vmem:[%s3724 + $0x3a0] sm:$0xff]
        %v3842 = vld [vmem:[%s3724 + $0x3a8] sm:$0xff]
        %v3843 = vld [vmem:[%s3724 + $0x3b0] sm:$0xff]
        %v3844 = vld [vmem:[%s3724 + $0x3b8] sm:$0xff]
        %v3845 = vld [vmem:[%s3724 + $0x3c0] sm:$0xff]
        %v3846 = vld [vmem:[%s3724 + $0x3c8] sm:$0xff]
        %v3847 = vld [vmem:[%s3724 + $0x3d0] sm:$0xff]
        %v3848 = vld [vmem:[%s3724 + $0x3d8] sm:$0xff]
        %v3849 = vld [vmem:[%s3724 + $0x3e0] sm:$0xff]
        %v3850 = vld [vmem:[%s3724 + $0x3e8] sm:$0xff]
        %v3851 = vld [vmem:[%s3724 + $0x3f0] sm:$0xff]
        %v3852 = vld [vmem:[%s3724 + $0x3f8] sm:$0xff]
        %v3853 = vld [vmem:[%s3724 + $0x400] sm:$0xff]
        %v3854 = vld [vmem:[%s3724 + $0x408] sm:$0xff]
        %v3855 = vld [vmem:[%s3724 + $0x410] sm:$0xff]
        %v3856 = vld [vmem:[%s3724 + $0x418] sm:$0xff]
        %v3857 = vld [vmem:[%s3724 + $0x420] sm:$0xff]
        %v3858 = vld [vmem:[%s3724 + $0x428] sm:$0xff]
        %v3859 = vld [vmem:[%s3724 + $0x430] sm:$0xff]
        %v3860 = vld [vmem:[%s3724 + $0x438] sm:$0xff]
        %v3861 = vld [vmem:[%s3724 + $0x440] sm:$0xff]
        %v3862 = vld [vmem:[%s3724 + $0x448] sm:$0xff]
        %v3863 = vld [vmem:[%s3724 + $0x450] sm:$0xff]
        %v3864 = vld [vmem:[%s3724 + $0x458] sm:$0xff]
        %v3865 = vld [vmem:[%s3724 + $0x460] sm:$0xff]
        %v3866 = vld [vmem:[%s3724 + $0x468] sm:$0xff]
        %v3867 = vld [vmem:[%s3724 + $0x470] sm:$0xff]
        %v3868 = vld [vmem:[%s3724 + $0x478] sm:$0xff]
        %v3879 = vrot.slane %v1399, 1
        %v3880 = vrot.slane %v1548, 1
        %v3881 = vsel %vm988, %v3879, %v3880
        %v3882 = vrot.slane %v1400, 1
        %v3883 = vrot.slane %v1549, 1
        %v3884 = vsel %vm988, %v3882, %v3883
        %v3885 = vrot.slane %v1401, 1
        %v3886 = vrot.slane %v1550, 1
        %v3887 = vsel %vm988, %v3885, %v3886
        %v3888 = vrot.slane %v1402, 1
        %v3889 = vrot.slane %v1551, 1
        %v3890 = vsel %vm988, %v3888, %v3889
        %v3891 = vrot.slane %v1403, 1
        %v3892 = vrot.slane %v1552, 1
        %v3893 = vsel %vm988, %v3891, %v3892
        %v4042 = vunpack.c.l.b16 %v3725
        %v4043 = vunpack.c.h.b16 %v3725
        %v4044 = vunpack.c.l.b16 %v3726
        %v4045 = vunpack.c.h.b16 %v3726
        %v4046 = vunpack.c.l.b16 %v3727
        %v4047 = vunpack.c.h.b16 %v3727
        %v4048 = vunpack.c.l.b16 %v3728
        %v4049 = vunpack.c.h.b16 %v3728
        %v4050 = vunpack.c.l.b16 %v3729
        %v4051 = vunpack.c.h.b16 %v3729
        %v4052 = vunpack.c.l.b16 %v3730
        %v4053 = vunpack.c.h.b16 %v3730
        %v4054 = vunpack.c.l.b16 %v3731
        %v4055 = vunpack.c.h.b16 %v3731
        %v4056 = vunpack.c.l.b16 %v3732
        %v4057 = vunpack.c.h.b16 %v3732
        %v4058 = vunpack.c.l.b16 %v3733
        %v4059 = vunpack.c.h.b16 %v3733
        %v4060 = vunpack.c.l.b16 %v3734
        %v4061 = vunpack.c.h.b16 %v3734
        %v4062 = vunpack.c.l.b16 %v3735
        %v4063 = vunpack.c.h.b16 %v3735
        %v4064 = vunpack.c.l.b16 %v3736
        %v4065 = vunpack.c.h.b16 %v3736
        %v4066 = vunpack.c.l.b16 %v3737
        %v4067 = vunpack.c.h.b16 %v3737
        %v4068 = vunpack.c.l.b16 %v3738
        %v4069 = vunpack.c.h.b16 %v3738
        %v4070 = vunpack.c.l.b16 %v3739
        %v4071 = vunpack.c.h.b16 %v3739
        %v4072 = vunpack.c.l.b16 %v3740
        %v4073 = vunpack.c.h.b16 %v3740
        %v4074 = vunpack.c.l.b16 %v3741
        %v4075 = vunpack.c.h.b16 %v3741
        %v4076 = vunpack.c.l.b16 %v3742
        %v4077 = vunpack.c.h.b16 %v3742
        %v4078 = vunpack.c.l.b16 %v3743
        %v4079 = vunpack.c.h.b16 %v3743
        %v4080 = vunpack.c.l.b16 %v3744
        %v4081 = vunpack.c.h.b16 %v3744
        %v4082 = vunpack.c.l.b16 %v3745
        %v4083 = vunpack.c.h.b16 %v3745
        %v4084 = vunpack.c.l.b16 %v3746
        %v4085 = vunpack.c.h.b16 %v3746
        %v4086 = vunpack.c.l.b16 %v3747
        %v4087 = vunpack.c.h.b16 %v3747
        %v4088 = vunpack.c.l.b16 %v3748
        %v4089 = vunpack.c.h.b16 %v3748
        %v4090 = vunpack.c.l.b16 %v3749
        %v4091 = vunpack.c.h.b16 %v3749
        %v4092 = vunpack.c.l.b16 %v3750
        %v4093 = vunpack.c.h.b16 %v3750
        %v4094 = vunpack.c.l.b16 %v3751
        %v4095 = vunpack.c.h.b16 %v3751
        %v4096 = vunpack.c.l.b16 %v3752
        %v4097 = vunpack.c.h.b16 %v3752
        %v4098 = vunpack.c.l.b16 %v3753
        %v4099 = vunpack.c.h.b16 %v3753
        %v4100 = vunpack.c.l.b16 %v3754
        %v4101 = vunpack.c.h.b16 %v3754
        %v4102 = vunpack.c.l.b16 %v3755
        %v4103 = vunpack.c.h.b16 %v3755
        %v4104 = vunpack.c.l.b16 %v3756
        %v4105 = vunpack.c.h.b16 %v3756
        %v4106 = vunpack.c.l.b16 %v3757
        %v4107 = vunpack.c.h.b16 %v3757
        %v4108 = vunpack.c.l.b16 %v3758
        %v4109 = vunpack.c.h.b16 %v3758
        %v4110 = vunpack.c.l.b16 %v3759
        %v4111 = vunpack.c.h.b16 %v3759
        %v4112 = vunpack.c.l.b16 %v3760
        %v4113 = vunpack.c.h.b16 %v3760
        %v4114 = vunpack.c.l.b16 %v3761
        %v4115 = vunpack.c.h.b16 %v3761
        %v4116 = vunpack.c.l.b16 %v3762
        %v4117 = vunpack.c.h.b16 %v3762
        %v4118 = vunpack.c.l.b16 %v3763
        %v4119 = vunpack.c.h.b16 %v3763
        %v4120 = vunpack.c.l.b16 %v3764
        %v4121 = vunpack.c.h.b16 %v3764
        %v4122 = vunpack.c.l.b16 %v3765
        %v4123 = vunpack.c.h.b16 %v3765
        %v4124 = vunpack.c.l.b16 %v3766
        %v4125 = vunpack.c.h.b16 %v3766
        %v4126 = vunpack.c.l.b16 %v3767
        %v4127 = vunpack.c.h.b16 %v3767
        %v4128 = vunpack.c.l.b16 %v3768
        %v4129 = vunpack.c.h.b16 %v3768
        %v4130 = vunpack.c.l.b16 %v3769
        %v4131 = vunpack.c.h.b16 %v3769
        %v4132 = vunpack.c.l.b16 %v3770
        %v4133 = vunpack.c.h.b16 %v3770
        %v4134 = vunpack.c.l.b16 %v3771
        %v4135 = vunpack.c.h.b16 %v3771
        %v4136 = vunpack.c.l.b16 %v3772
        %v4137 = vunpack.c.h.b16 %v3772
        %v4138 = vunpack.c.l.b16 %v3773
        %v4139 = vunpack.c.h.b16 %v3773
        %v4140 = vunpack.c.l.b16 %v3774
        %v4141 = vunpack.c.h.b16 %v3774
        %v4142 = vunpack.c.l.b16 %v3775
        %v4143 = vunpack.c.h.b16 %v3775
        %v4144 = vunpack.c.l.b16 %v3776
        %v4145 = vunpack.c.h.b16 %v3776
        %v4146 = vunpack.c.l.b16 %v3777
        %v4147 = vunpack.c.h.b16 %v3777
        %v4148 = vunpack.c.l.b16 %v3778
        %v4149 = vunpack.c.h.b16 %v3778
        %v4150 = vunpack.c.l.b16 %v3779
        %v4151 = vunpack.c.h.b16 %v3779
        %v4152 = vunpack.c.l.b16 %v3780
        %v4153 = vunpack.c.h.b16 %v3780
        %v4154 = vunpack.c.l.b16 %v3781
        %v4155 = vunpack.c.h.b16 %v3781
        %v4156 = vunpack.c.l.b16 %v3782
        %v4157 = vunpack.c.h.b16 %v3782
        %v4158 = vunpack.c.l.b16 %v3783
        %v4159 = vunpack.c.h.b16 %v3783
        %v4160 = vunpack.c.l.b16 %v3784
        %v4161 = vunpack.c.h.b16 %v3784
        %v4162 = vunpack.c.l.b16 %v3785
        %v4163 = vunpack.c.h.b16 %v3785
        %v4164 = vunpack.c.l.b16 %v3786
        %v4165 = vunpack.c.h.b16 %v3786
        %v4166 = vunpack.c.l.b16 %v3787
        %v4167 = vunpack.c.h.b16 %v3787
        %v4168 = vunpack.c.l.b16 %v3788
        %v4169 = vunpack.c.h.b16 %v3788
        %v4170 = vunpack.c.l.b16 %v3789
        %v4171 = vunpack.c.h.b16 %v3789
        %v4172 = vunpack.c.l.b16 %v3790
        %v4173 = vunpack.c.h.b16 %v3790
        %v4174 = vunpack.c.l.b16 %v3791
        %v4175 = vunpack.c.h.b16 %v3791
        %v4176 = vunpack.c.l.b16 %v3792
        %v4177 = vunpack.c.h.b16 %v3792
        %v4178 = vunpack.c.l.b16 %v3793
        %v4179 = vunpack.c.h.b16 %v3793
        %v4180 = vunpack.c.l.b16 %v3794
        %v4181 = vunpack.c.h.b16 %v3794
        %v4182 = vunpack.c.l.b16 %v3795
        %v4183 = vunpack.c.h.b16 %v3795
        %v4184 = vunpack.c.l.b16 %v3796
        %v4185 = vunpack.c.h.b16 %v3796
        %v4186 = vunpack.c.l.b16 %v3797
        %v4187 = vunpack.c.h.b16 %v3797
        %v4188 = vunpack.c.l.b16 %v3798
        %v4189 = vunpack.c.h.b16 %v3798
        %v4190 = vunpack.c.l.b16 %v3799
        %v4191 = vunpack.c.h.b16 %v3799
        %v4192 = vunpack.c.l.b16 %v3800
        %v4193 = vunpack.c.h.b16 %v3800
        %v4194 = vunpack.c.l.b16 %v3801
        %v4195 = vunpack.c.h.b16 %v3801
        %v4196 = vunpack.c.l.b16 %v3802
        %v4197 = vunpack.c.h.b16 %v3802
        %v4198 = vunpack.c.l.b16 %v3803
        %v4199 = vunpack.c.h.b16 %v3803
        %v4200 = vunpack.c.l.b16 %v3804
        %v4201 = vunpack.c.h.b16 %v3804
        %v4202 = vunpack.c.l.b16 %v3805
        %v4203 = vunpack.c.h.b16 %v3805
        %v4204 = vunpack.c.l.b16 %v3806
        %v4205 = vunpack.c.h.b16 %v3806
        %v4206 = vunpack.c.l.b16 %v3807
        %v4207 = vunpack.c.h.b16 %v3807
        %v4208 = vunpack.c.l.b16 %v3808
        %v4209 = vunpack.c.h.b16 %v3808
        %v4210 = vunpack.c.l.b16 %v3809
        %v4211 = vunpack.c.h.b16 %v3809
        %v4212 = vunpack.c.l.b16 %v3810
        %v4213 = vunpack.c.h.b16 %v3810
        %v4214 = vunpack.c.l.b16 %v3811
        %v4215 = vunpack.c.h.b16 %v3811
        %v4216 = vunpack.c.l.b16 %v3812
        %v4217 = vunpack.c.h.b16 %v3812
        %v4218 = vunpack.c.l.b16 %v3813
        %v4219 = vunpack.c.h.b16 %v3813
        %v4220 = vunpack.c.l.b16 %v3814
        %v4221 = vunpack.c.h.b16 %v3814
        %v4222 = vunpack.c.l.b16 %v3815
        %v4223 = vunpack.c.h.b16 %v3815
        %v4224 = vunpack.c.l.b16 %v3816
        %v4225 = vunpack.c.h.b16 %v3816
        %v4226 = vunpack.c.l.b16 %v3817
        %v4227 = vunpack.c.h.b16 %v3817
        %v4228 = vunpack.c.l.b16 %v3818
        %v4229 = vunpack.c.h.b16 %v3818
        %v4230 = vunpack.c.l.b16 %v3819
        %v4231 = vunpack.c.h.b16 %v3819
        %v4232 = vunpack.c.l.b16 %v3820
        %v4233 = vunpack.c.h.b16 %v3820
        %v4234 = vunpack.c.l.b16 %v3821
        %v4235 = vunpack.c.h.b16 %v3821
        %v4236 = vunpack.c.l.b16 %v3822
        %v4237 = vunpack.c.h.b16 %v3822
        %v4238 = vunpack.c.l.b16 %v3823
        %v4239 = vunpack.c.h.b16 %v3823
        %v4240 = vunpack.c.l.b16 %v3824
        %v4241 = vunpack.c.h.b16 %v3824
        %v4242 = vunpack.c.l.b16 %v3825
        %v4243 = vunpack.c.h.b16 %v3825
        %v4244 = vunpack.c.l.b16 %v3826
        %v4245 = vunpack.c.h.b16 %v3826
        %v4246 = vunpack.c.l.b16 %v3827
        %v4247 = vunpack.c.h.b16 %v3827
        %v4248 = vunpack.c.l.b16 %v3828
        %v4249 = vunpack.c.h.b16 %v3828
        %v4250 = vunpack.c.l.b16 %v3829
        %v4251 = vunpack.c.h.b16 %v3829
        %v4252 = vunpack.c.l.b16 %v3830
        %v4253 = vunpack.c.h.b16 %v3830
        %v4254 = vunpack.c.l.b16 %v3831
        %v4255 = vunpack.c.h.b16 %v3831
        %v4256 = vunpack.c.l.b16 %v3832
        %v4257 = vunpack.c.h.b16 %v3832
        %v4258 = vunpack.c.l.b16 %v3833
        %v4259 = vunpack.c.h.b16 %v3833
        %v4260 = vunpack.c.l.b16 %v3834
        %v4261 = vunpack.c.h.b16 %v3834
        %v4262 = vunpack.c.l.b16 %v3835
        %v4263 = vunpack.c.h.b16 %v3835
        %v4264 = vunpack.c.l.b16 %v3836
        %v4265 = vunpack.c.h.b16 %v3836
        %v4266 = vunpack.c.l.b16 %v3837
        %v4267 = vunpack.c.h.b16 %v3837
        %v4268 = vunpack.c.l.b16 %v3838
        %v4269 = vunpack.c.h.b16 %v3838
        %v4270 = vunpack.c.l.b16 %v3839
        %v4271 = vunpack.c.h.b16 %v3839
        %v4272 = vunpack.c.l.b16 %v3840
        %v4273 = vunpack.c.h.b16 %v3840
        %v4274 = vunpack.c.l.b16 %v3841
        %v4275 = vunpack.c.h.b16 %v3841
        %v4276 = vunpack.c.l.b16 %v3842
        %v4277 = vunpack.c.h.b16 %v3842
        %v4278 = vunpack.c.l.b16 %v3843
        %v4279 = vunpack.c.h.b16 %v3843
        %v4280 = vunpack.c.l.b16 %v3844
        %v4281 = vunpack.c.h.b16 %v3844
        %v4282 = vunpack.c.l.b16 %v3845
        %v4283 = vunpack.c.h.b16 %v3845
        %v4284 = vunpack.c.l.b16 %v3846
        %v4285 = vunpack.c.h.b16 %v3846
        %v4286 = vunpack.c.l.b16 %v3847
        %v4287 = vunpack.c.h.b16 %v3847
        %v4288 = vunpack.c.l.b16 %v3848
        %v4289 = vunpack.c.h.b16 %v3848
        %v4290 = vunpack.c.l.b16 %v3849
        %v4291 = vunpack.c.h.b16 %v3849
        %v4292 = vunpack.c.l.b16 %v3850
        %v4293 = vunpack.c.h.b16 %v3850
        %v4294 = vunpack.c.l.b16 %v3851
        %v4295 = vunpack.c.h.b16 %v3851
        %v4296 = vunpack.c.l.b16 %v3852
        %v4297 = vunpack.c.h.b16 %v3852
        %v4298 = vunpack.c.l.b16 %v3853
        %v4299 = vunpack.c.h.b16 %v3853
        %v4300 = vunpack.c.l.b16 %v3854
        %v4301 = vunpack.c.h.b16 %v3854
        %v4302 = vunpack.c.l.b16 %v3855
        %v4303 = vunpack.c.h.b16 %v3855
        %v4304 = vunpack.c.l.b16 %v3856
        %v4305 = vunpack.c.h.b16 %v3856
        %v4306 = vunpack.c.l.b16 %v3857
        %v4307 = vunpack.c.h.b16 %v3857
        %v4308 = vunpack.c.l.b16 %v3858
        %v4309 = vunpack.c.h.b16 %v3858
        %v4310 = vunpack.c.l.b16 %v3859
        %v4311 = vunpack.c.h.b16 %v3859
        %v4312 = vunpack.c.l.b16 %v3860
        %v4313 = vunpack.c.h.b16 %v3860
        %v4314 = vunpack.c.l.b16 %v3861
        %v4315 = vunpack.c.h.b16 %v3861
        %v4316 = vunpack.c.l.b16 %v3862
        %v4317 = vunpack.c.h.b16 %v3862
        %v4318 = vunpack.c.l.b16 %v3863
        %v4319 = vunpack.c.h.b16 %v3863
        %v4320 = vunpack.c.l.b16 %v3864
        %v4321 = vunpack.c.h.b16 %v3864
        %v4322 = vunpack.c.l.b16 %v3865
        %v4323 = vunpack.c.h.b16 %v3865
        %v4324 = vunpack.c.l.b16 %v3866
        %v4325 = vunpack.c.h.b16 %v3866
        %v4326 = vunpack.c.l.b16 %v3867
        %v4327 = vunpack.c.h.b16 %v3867
        %v4328 = vunpack.c.l.b16 %v3868
        %v4329 = vunpack.c.h.b16 %v3868
        %v4330 = vpack.c.b16 %v4046, %v4042
        %v4331 = vpack.c.b16 %v4047, %v4043
        %v4332 = vpack.c.b16 %v4048, %v4044
        %v4333 = vpack.c.b16 %v4049, %v4045
        %v4334 = vpack.c.b16 %v4054, %v4050
        %v4335 = vpack.c.b16 %v4055, %v4051
        %v4336 = vpack.c.b16 %v4056, %v4052
        %v4337 = vpack.c.b16 %v4057, %v4053
        %v4338 = vpack.c.b16 %v4062, %v4058
        %v4339 = vpack.c.b16 %v4063, %v4059
        %v4340 = vpack.c.b16 %v4064, %v4060
        %v4341 = vpack.c.b16 %v4065, %v4061
        %v4342 = vpack.c.b16 %v4070, %v4066
        %v4343 = vpack.c.b16 %v4071, %v4067
        %v4344 = vpack.c.b16 %v4072, %v4068
        %v4345 = vpack.c.b16 %v4073, %v4069
        %v4346 = vpack.c.b16 %v4078, %v4074
        %v4347 = vpack.c.b16 %v4079, %v4075
        %v4348 = vpack.c.b16 %v4080, %v4076
        %v4349 = vpack.c.b16 %v4081, %v4077
        %v4350 = vpack.c.b16 %v4086, %v4082
        %v4351 = vpack.c.b16 %v4087, %v4083
        %v4352 = vpack.c.b16 %v4088, %v4084
        %v4353 = vpack.c.b16 %v4089, %v4085
        %v4354 = vpack.c.b16 %v4094, %v4090
        %v4355 = vpack.c.b16 %v4095, %v4091
        %v4356 = vpack.c.b16 %v4096, %v4092
        %v4357 = vpack.c.b16 %v4097, %v4093
        %v4358 = vpack.c.b16 %v4102, %v4098
        %v4359 = vpack.c.b16 %v4103, %v4099
        %v4360 = vpack.c.b16 %v4104, %v4100
        %v4361 = vpack.c.b16 %v4105, %v4101
        %v4362 = vpack.c.b16 %v4110, %v4106
        %v4363 = vpack.c.b16 %v4111, %v4107
        %v4364 = vpack.c.b16 %v4112, %v4108
        %v4365 = vpack.c.b16 %v4113, %v4109
        %v4366 = vpack.c.b16 %v4118, %v4114
        %v4367 = vpack.c.b16 %v4119, %v4115
        %v4368 = vpack.c.b16 %v4120, %v4116
        %v4369 = vpack.c.b16 %v4121, %v4117
        %v4370 = vpack.c.b16 %v4126, %v4122
        %v4371 = vpack.c.b16 %v4127, %v4123
        %v4372 = vpack.c.b16 %v4128, %v4124
        %v4373 = vpack.c.b16 %v4129, %v4125
        %v4374 = vpack.c.b16 %v4134, %v4130
        %v4375 = vpack.c.b16 %v4135, %v4131
        %v4376 = vpack.c.b16 %v4136, %v4132
        %v4377 = vpack.c.b16 %v4137, %v4133
        %v4378 = vpack.c.b16 %v4142, %v4138
        %v4379 = vpack.c.b16 %v4143, %v4139
        %v4380 = vpack.c.b16 %v4144, %v4140
        %v4381 = vpack.c.b16 %v4145, %v4141
        %v4382 = vpack.c.b16 %v4150, %v4146
        %v4383 = vpack.c.b16 %v4151, %v4147
        %v4384 = vpack.c.b16 %v4152, %v4148
        %v4385 = vpack.c.b16 %v4153, %v4149
        %v4386 = vpack.c.b16 %v4158, %v4154
        %v4387 = vpack.c.b16 %v4159, %v4155
        %v4388 = vpack.c.b16 %v4160, %v4156
        %v4389 = vpack.c.b16 %v4161, %v4157
        %v4390 = vpack.c.b16 %v4166, %v4162
        %v4391 = vpack.c.b16 %v4167, %v4163
        %v4392 = vpack.c.b16 %v4168, %v4164
        %v4393 = vpack.c.b16 %v4169, %v4165
        %v4394 = vpack.c.b16 %v4174, %v4170
        %v4395 = vpack.c.b16 %v4175, %v4171
        %v4396 = vpack.c.b16 %v4176, %v4172
        %v4397 = vpack.c.b16 %v4177, %v4173
        %v4398 = vpack.c.b16 %v4182, %v4178
        %v4399 = vpack.c.b16 %v4183, %v4179
        %v4400 = vpack.c.b16 %v4184, %v4180
        %v4401 = vpack.c.b16 %v4185, %v4181
        %v4402 = vpack.c.b16 %v4190, %v4186
        %v4403 = vpack.c.b16 %v4191, %v4187
        %v4404 = vpack.c.b16 %v4192, %v4188
        %v4405 = vpack.c.b16 %v4193, %v4189
        %v4406 = vpack.c.b16 %v4198, %v4194
        %v4407 = vpack.c.b16 %v4199, %v4195
        %v4408 = vpack.c.b16 %v4200, %v4196
        %v4409 = vpack.c.b16 %v4201, %v4197
        %v4410 = vpack.c.b16 %v4206, %v4202
        %v4411 = vpack.c.b16 %v4207, %v4203
        %v4412 = vpack.c.b16 %v4208, %v4204
        %v4413 = vpack.c.b16 %v4209, %v4205
        %v4414 = vpack.c.b16 %v4214, %v4210
        %v4415 = vpack.c.b16 %v4215, %v4211
        %v4416 = vpack.c.b16 %v4216, %v4212
        %v4417 = vpack.c.b16 %v4217, %v4213
        %v4418 = vpack.c.b16 %v4222, %v4218
        %v4419 = vpack.c.b16 %v4223, %v4219
        %v4420 = vpack.c.b16 %v4224, %v4220
        %v4421 = vpack.c.b16 %v4225, %v4221
        %v4422 = vpack.c.b16 %v4230, %v4226
        %v4423 = vpack.c.b16 %v4231, %v4227
        %v4424 = vpack.c.b16 %v4232, %v4228
        %v4425 = vpack.c.b16 %v4233, %v4229
        %v4426 = vpack.c.b16 %v4238, %v4234
        %v4427 = vpack.c.b16 %v4239, %v4235
        %v4428 = vpack.c.b16 %v4240, %v4236
        %v4429 = vpack.c.b16 %v4241, %v4237
        %v4430 = vpack.c.b16 %v4246, %v4242
        %v4431 = vpack.c.b16 %v4247, %v4243
        %v4432 = vpack.c.b16 %v4248, %v4244
        %v4433 = vpack.c.b16 %v4249, %v4245
        %v4434 = vpack.c.b16 %v4254, %v4250
        %v4435 = vpack.c.b16 %v4255, %v4251
        %v4436 = vpack.c.b16 %v4256, %v4252
        %v4437 = vpack.c.b16 %v4257, %v4253
        %v4438 = vpack.c.b16 %v4262, %v4258
        %v4439 = vpack.c.b16 %v4263, %v4259
        %v4440 = vpack.c.b16 %v4264, %v4260
        %v4441 = vpack.c.b16 %v4265, %v4261
        %v4442 = vpack.c.b16 %v4270, %v4266
        %v4443 = vpack.c.b16 %v4271, %v4267
        %v4444 = vpack.c.b16 %v4272, %v4268
        %v4445 = vpack.c.b16 %v4273, %v4269
        %v4446 = vpack.c.b16 %v4278, %v4274
        %v4447 = vpack.c.b16 %v4279, %v4275
        %v4448 = vpack.c.b16 %v4280, %v4276
        %v4449 = vpack.c.b16 %v4281, %v4277
        %v4450 = vpack.c.b16 %v4286, %v4282
        %v4451 = vpack.c.b16 %v4287, %v4283
        %v4452 = vpack.c.b16 %v4288, %v4284
        %v4453 = vpack.c.b16 %v4289, %v4285
        %v4454 = vpack.c.b16 %v4294, %v4290
        %v4455 = vpack.c.b16 %v4295, %v4291
        %v4456 = vpack.c.b16 %v4296, %v4292
        %v4457 = vpack.c.b16 %v4297, %v4293
        %v4458 = vpack.c.b16 %v4302, %v4298
        %v4459 = vpack.c.b16 %v4303, %v4299
        %v4460 = vpack.c.b16 %v4304, %v4300
        %v4461 = vpack.c.b16 %v4305, %v4301
        %v4462 = vpack.c.b16 %v4310, %v4306
        %v4463 = vpack.c.b16 %v4311, %v4307
        %v4464 = vpack.c.b16 %v4312, %v4308
        %v4465 = vpack.c.b16 %v4313, %v4309
        %v4466 = vpack.c.b16 %v4318, %v4314
        %v4467 = vpack.c.b16 %v4319, %v4315
        %v4468 = vpack.c.b16 %v4320, %v4316
        %v4469 = vpack.c.b16 %v4321, %v4317
        %v4470 = vpack.c.b16 %v4326, %v4322
        %v4471 = vpack.c.b16 %v4327, %v4323
        %v4472 = vpack.c.b16 %v4328, %v4324
        %v4473 = vpack.c.b16 %v4329, %v4325
        %v4619 = vsel %vm2482, %v3893, 0
        %4621 = vmatprep.subr.bf16.mxu0 %v4331
        %4622 = vmatpush1.bf16.msra.mxu0 %v4330
        %4623 = vmatprep.subr.bf16.mxu0 %v4335
        %4624 = vmatpush1.bf16.msra.mxu0 %v4334
        %4625 = vmatprep.subr.bf16.mxu0 %v4339
        %4626 = vmatpush1.bf16.msra.mxu0 %v4338
        %4627 = vmatprep.subr.bf16.mxu0 %v4343
        %4628 = vmatpush1.bf16.msra.mxu0 %v4342
        %4629 = vmatprep.subr.bf16.mxu0 %v4347
        %4630 = vmatpush1.bf16.msra.mxu0 %v4346
        %4631 = vmatprep.subr.bf16.mxu0 %v4351
        %4632 = vmatpush1.bf16.msra.mxu0 %v4350
        %4633 = vmatprep.subr.bf16.mxu0 %v4355
        %4634 = vmatpush1.bf16.msra.mxu0 %v4354
        %4635 = vmatprep.subr.bf16.mxu0 %v4359
        %4636 = vmatpush1.bf16.msra.mxu0 %v4358
        %4637 = vmatprep.subr.bf16.mxu0 %v4363
        %4638 = vmatpush1.bf16.msra.mxu0 %v4362
        %4639 = vmatprep.subr.bf16.mxu0 %v4367
        %4640 = vmatpush1.bf16.msra.mxu0 %v4366
        %4641 = vmatprep.subr.bf16.mxu0 %v4371
        %4642 = vmatpush1.bf16.msra.mxu0 %v4370
        %4643 = vmatprep.subr.bf16.mxu0 %v4375
        %4644 = vmatpush1.bf16.msra.mxu0 %v4374
        %4645 = vmatprep.subr.bf16.mxu0 %v4379
        %4646 = vmatpush1.bf16.msra.mxu0 %v4378
        %4647 = vmatprep.subr.bf16.mxu0 %v4383
        %4648 = vmatpush1.bf16.msra.mxu0 %v4382
        %4649 = vmatprep.subr.bf16.mxu0 %v4387
        %4650 = vmatpush1.bf16.msra.mxu0 %v4386
        %4651 = vmatprep.subr.bf16.mxu0 %v4391
        %4652 = vmatpush1.bf16.msra.mxu0 %v4390
        %4653 = vmatprep.mubr.bf16.mxu0 %v3884
        %4654 = vmatmul.mubr.bf16.gmra.mrb[0].mxu0 %v3881
        %v4655 = vpop.f32.mrb[0].mxu0
        %v4656 = vadd.f32 0.0, %v4655
        %v4657 = vpop.f32.mrb[0].mxu0
        %v4658 = vadd.f32 0.0, %v4657
        %v4659 = vpop.f32.mrb[0].mxu0
        %v4660 = vadd.f32 0.0, %v4659
        %v4661 = vpop.f32.mrb[0].mxu0
        %v4662 = vadd.f32 0.0, %v4661
        %4663 = vdwg.mxu0
        %4664 = vmatprep.subr.bf16.mxu0 %v4395
        %4665 = vmatpush1.bf16.msra.mxu0 %v4394
        %4666 = vmatprep.subr.bf16.mxu0 %v4399
        %4667 = vmatpush1.bf16.msra.mxu0 %v4398
        %4668 = vmatprep.subr.bf16.mxu0 %v4403
        %4669 = vmatpush1.bf16.msra.mxu0 %v4402
        %4670 = vmatprep.subr.bf16.mxu0 %v4407
        %4671 = vmatpush1.bf16.msra.mxu0 %v4406
        %4672 = vmatprep.subr.bf16.mxu0 %v4411
        %4673 = vmatpush1.bf16.msra.mxu0 %v4410
        %4674 = vmatprep.subr.bf16.mxu0 %v4415
        %4675 = vmatpush1.bf16.msra.mxu0 %v4414
        %4676 = vmatprep.subr.bf16.mxu0 %v4419
        %4677 = vmatpush1.bf16.msra.mxu0 %v4418
        %4678 = vmatprep.subr.bf16.mxu0 %v4423
        %4679 = vmatpush1.bf16.msra.mxu0 %v4422
        %4680 = vmatprep.subr.bf16.mxu0 %v4427
        %4681 = vmatpush1.bf16.msra.mxu0 %v4426
        %4682 = vmatprep.subr.bf16.mxu0 %v4431
        %4683 = vmatpush1.bf16.msra.mxu0 %v4430
        %4684 = vmatprep.subr.bf16.mxu0 %v4435
        %4685 = vmatpush1.bf16.msra.mxu0 %v4434
        %4686 = vmatprep.subr.bf16.mxu0 %v4439
        %4687 = vmatpush1.bf16.msra.mxu0 %v4438
        %4688 = vmatprep.subr.bf16.mxu0 %v4443
        %4689 = vmatpush1.bf16.msra.mxu0 %v4442
        %4690 = vmatprep.subr.bf16.mxu0 %v4447
        %4691 = vmatpush1.bf16.msra.mxu0 %v4446
        %4692 = vmatprep.subr.bf16.mxu0 %v4451
        %4693 = vmatpush1.bf16.msra.mxu0 %v4450
        %4694 = vmatprep.subr.bf16.mxu0 %v4455
        %4695 = vmatpush1.bf16.msra.mxu0 %v4454
        %4696 = vmatprep.mubr.bf16.mxu0 %v3890
        %4697 = vmatmul.mubr.bf16.gmra.mrb[0].mxu0 %v3887
        %v4698 = vpop.f32.mrb[0].mxu0
        %v4699 = vadd.f32 %v4656, %v4698
        %v4700 = vpop.f32.mrb[0].mxu0
        %v4701 = vadd.f32 %v4658, %v4700
        %v4702 = vpop.f32.mrb[0].mxu0
        %v4703 = vadd.f32 %v4660, %v4702
        %v4704 = vpop.f32.mrb[0].mxu0
        %v4705 = vadd.f32 %v4662, %v4704
        %4706 = vdwg.mxu0
        %4707 = vmatprep.subr.bf16.mxu0 %v4459
        %4708 = vmatpush1.bf16.msra.mxu0 %v4458
        %4709 = vmatprep.subr.bf16.mxu0 %v4463
        %4710 = vmatpush1.bf16.msra.mxu0 %v4462
        %4711 = vmatprep.subr.bf16.mxu0 %v4467
        %4712 = vmatpush1.bf16.msra.mxu0 %v4466
        %4713 = vmatprep.subr.bf16.mxu0 %v4471
        %4714 = vmatpush1.bf16.msra.mxu0 %v4470
        %4715 = vmatprep.subr.bf16.mxu0 0
        %4716 = vmatpush1.bf16.msra.mxu0 0
        %4717 = vmatprep.subr.bf16.mxu0 0
        %4718 = vmatpush1.bf16.msra.mxu0 0
        %4719 = vmatprep.subr.bf16.mxu0 0
        %4720 = vmatpush1.bf16.msra.mxu0 0
        %4721 = vmatprep.subr.bf16.mxu0 0
        %4722 = vmatpush1.bf16.msra.mxu0 0
        %4723 = vmatprep.subr.bf16.mxu0 0
        %4724 = vmatpush1.bf16.msra.mxu0 0
        %4725 = vmatprep.subr.bf16.mxu0 0
        %4726 = vmatpush1.bf16.msra.mxu0 0
        %4727 = vmatprep.subr.bf16.mxu0 0
        %4728 = vmatpush1.bf16.msra.mxu0 0
        %4729 = vmatprep.subr.bf16.mxu0 0
        %4730 = vmatpush1.bf16.msra.mxu0 0
        %4731 = vmatprep.subr.bf16.mxu0 0
        %4732 = vmatpush1.bf16.msra.mxu0 0
        %4733 = vmatprep.subr.bf16.mxu0 0
        %4734 = vmatpush1.bf16.msra.mxu0 0
        %4735 = vmatprep.subr.bf16.mxu0 0
        %4736 = vmatpush1.bf16.msra.mxu0 0
        %4737 = vmatprep.subr.bf16.mxu0 0
        %4738 = vmatpush1.bf16.msra.mxu0 0
        %4739 = vmatprep.mubr.bf16.mxu0 0
        %4740 = vmatmul.mubr.bf16.gmra.mrb[0].mxu0 %v4619
        %v4741 = vpop.f32.mrb[0].mxu0
        %v4742 = vadd.f32 %v4699, %v4741
        %v4743 = vpop.f32.mrb[0].mxu0
        %v4744 = vadd.f32 %v4701, %v4743
        %v4745 = vpop.f32.mrb[0].mxu0
        %v4746 = vadd.f32 %v4703, %v4745
        %v4747 = vpop.f32.mrb[0].mxu0
        %v4748 = vadd.f32 %v4705, %v4747
        %4749 = vdwg.mxu0
        %4750 = vmatprep.subr.bf16.mxu0 %v4333
        %4751 = vmatpush1.bf16.msra.mxu0 %v4332
        %4752 = vmatprep.subr.bf16.mxu0 %v4337
        %4753 = vmatpush1.bf16.msra.mxu0 %v4336
        %4754 = vmatprep.subr.bf16.mxu0 %v4341
        %4755 = vmatpush1.bf16.msra.mxu0 %v4340
        %4756 = vmatprep.subr.bf16.mxu0 %v4345
        %4757 = vmatpush1.bf16.msra.mxu0 %v4344
        %4758 = vmatprep.subr.bf16.mxu0 %v4349
        %4759 = vmatpush1.bf16.msra.mxu0 %v4348
        %4760 = vmatprep.subr.bf16.mxu0 %v4353
        %4761 = vmatpush1.bf16.msra.mxu0 %v4352
        %4762 = vmatprep.subr.bf16.mxu0 %v4357
        %4763 = vmatpush1.bf16.msra.mxu0 %v4356
        %4764 = vmatprep.subr.bf16.mxu0 %v4361
        %4765 = vmatpush1.bf16.msra.mxu0 %v4360
        %4766 = vmatprep.subr.bf16.mxu0 %v4365
        %4767 = vmatpush1.bf16.msra.mxu0 %v4364
        %4768 = vmatprep.subr.bf16.mxu0 %v4369
        %4769 = vmatpush1.bf16.msra.mxu0 %v4368
        %4770 = vmatprep.subr.bf16.mxu0 %v4373
        %4771 = vmatpush1.bf16.msra.mxu0 %v4372
        %4772 = vmatprep.subr.bf16.mxu0 %v4377
        %4773 = vmatpush1.bf16.msra.mxu0 %v4376
        %4774 = vmatprep.subr.bf16.mxu0 %v4381
        %4775 = vmatpush1.bf16.msra.mxu0 %v4380
        %4776 = vmatprep.subr.bf16.mxu0 %v4385
        %4777 = vmatpush1.bf16.msra.mxu0 %v4384
        %4778 = vmatprep.subr.bf16.mxu0 %v4389
        %4779 = vmatpush1.bf16.msra.mxu0 %v4388
        %4780 = vmatprep.subr.bf16.mxu0 %v4393
        %4781 = vmatpush1.bf16.msra.mxu0 %v4392
        %4782 = vmatprep.mubr.bf16.mxu0 %v3884
        %4783 = vmatmul.mubr.bf16.gmra.mrb[0].mxu0 %v3881
        %v4784 = vpop.f32.mrb[0].mxu0
        %v4785 = vadd.f32 0.0, %v4784
        %v4786 = vpop.f32.mrb[0].mxu0
        %v4787 = vadd.f32 0.0, %v4786
        %v4788 = vpop.f32.mrb[0].mxu0
        %v4789 = vadd.f32 0.0, %v4788
        %v4790 = vpop.f32.mrb[0].mxu0
        %v4791 = vadd.f32 0.0, %v4790
        %4792 = vdwg.mxu0
        %4793 = vmatprep.subr.bf16.mxu0 %v4397
        %4794 = vmatpush1.bf16.msra.mxu0 %v4396
        %4795 = vmatprep.subr.bf16.mxu0 %v4401
        %4796 = vmatpush1.bf16.msra.mxu0 %v4400
        %4797 = vmatprep.subr.bf16.mxu0 %v4405
        %4798 = vmatpush1.bf16.msra.mxu0 %v4404
        %4799 = vmatprep.subr.bf16.mxu0 %v4409
        %4800 = vmatpush1.bf16.msra.mxu0 %v4408
        %4801 = vmatprep.subr.bf16.mxu0 %v4413
        %4802 = vmatpush1.bf16.msra.mxu0 %v4412
        %4803 = vmatprep.subr.bf16.mxu0 %v4417
        %4804 = vmatpush1.bf16.msra.mxu0 %v4416
        %4805 = vmatprep.subr.bf16.mxu0 %v4421
        %4806 = vmatpush1.bf16.msra.mxu0 %v4420
        %4807 = vmatprep.subr.bf16.mxu0 %v4425
        %4808 = vmatpush1.bf16.msra.mxu0 %v4424
        %4809 = vmatprep.subr.bf16.mxu0 %v4429
        %4810 = vmatpush1.bf16.msra.mxu0 %v4428
        %4811 = vmatprep.subr.bf16.mxu0 %v4433
        %4812 = vmatpush1.bf16.msra.mxu0 %v4432
        %4813 = vmatprep.subr.bf16.mxu0 %v4437
        %4814 = vmatpush1.bf16.msra.mxu0 %v4436
        %4815 = vmatprep.subr.bf16.mxu0 %v4441
        %4816 = vmatpush1.bf16.msra.mxu0 %v4440
        %4817 = vmatprep.subr.bf16.mxu0 %v4445
        %4818 = vmatpush1.bf16.msra.mxu0 %v4444
        %4819 = vmatprep.subr.bf16.mxu0 %v4449
        %4820 = vmatpush1.bf16.msra.mxu0 %v4448
        %4821 = vmatprep.subr.bf16.mxu0 %v4453
        %4822 = vmatpush1.bf16.msra.mxu0 %v4452
        %4823 = vmatprep.subr.bf16.mxu0 %v4457
        %4824 = vmatpush1.bf16.msra.mxu0 %v4456
        %4825 = vmatprep.mubr.bf16.mxu0 %v3890
        %4826 = vmatmul.mubr.bf16.gmra.mrb[0].mxu0 %v3887
        %v4827 = vpop.f32.mrb[0].mxu0
        %v4828 = vadd.f32 %v4785, %v4827
        %v4829 = vpop.f32.mrb[0].mxu0
        %v4830 = vadd.f32 %v4787, %v4829
        %v4831 = vpop.f32.mrb[0].mxu0
        %v4832 = vadd.f32 %v4789, %v4831
        %v4833 = vpop.f32.mrb[0].mxu0
        %v4834 = vadd.f32 %v4791, %v4833
        %4835 = vdwg.mxu0
        %4836 = vmatprep.subr.bf16.mxu0 %v4461
        %4837 = vmatpush1.bf16.msra.mxu0 %v4460
        %4838 = vmatprep.subr.bf16.mxu0 %v4465
        %4839 = vmatpush1.bf16.msra.mxu0 %v4464
        %4840 = vmatprep.subr.bf16.mxu0 %v4469
        %4841 = vmatpush1.bf16.msra.mxu0 %v4468
        %4842 = vmatprep.subr.bf16.mxu0 %v4473
        %4843 = vmatpush1.bf16.msra.mxu0 %v4472
        %4844 = vmatprep.subr.bf16.mxu0 0
        %4845 = vmatpush1.bf16.msra.mxu0 0
        %4846 = vmatprep.subr.bf16.mxu0 0
        %4847 = vmatpush1.bf16.msra.mxu0 0
        %4848 = vmatprep.subr.bf16.mxu0 0
        %4849 = vmatpush1.bf16.msra.mxu0 0
        %4850 = vmatprep.subr.bf16.mxu0 0
        %4851 = vmatpush1.bf16.msra.mxu0 0
        %4852 = vmatprep.subr.bf16.mxu0 0
        %4853 = vmatpush1.bf16.msra.mxu0 0
        %4854 = vmatprep.subr.bf16.mxu0 0
        %4855 = vmatpush1.bf16.msra.mxu0 0
        %4856 = vmatprep.subr.bf16.mxu0 0
        %4857 = vmatpush1.bf16.msra.mxu0 0
        %4858 = vmatprep.subr.bf16.mxu0 0
        %4859 = vmatpush1.bf16.msra.mxu0 0
        %4860 = vmatprep.subr.bf16.mxu0 0
        %4861 = vmatpush1.bf16.msra.mxu0 0
        %4862 = vmatprep.subr.bf16.mxu0 0
        %4863 = vmatpush1.bf16.msra.mxu0 0
        %4864 = vmatprep.subr.bf16.mxu0 0
        %4865 = vmatpush1.bf16.msra.mxu0 0
        %4866 = vmatprep.subr.bf16.mxu0 0
        %4867 = vmatpush1.bf16.msra.mxu0 0
        %4868 = vmatprep.mubr.bf16.mxu0 0
        %4869 = vmatmul.mubr.bf16.gmra.mrb[0].mxu0 %v4619
        %v4870 = vpop.f32.mrb[0].mxu0
        %v4871 = vadd.f32 %v4828, %v4870
        %v4872 = vpop.f32.mrb[0].mxu0
        %v4873 = vadd.f32 %v4830, %v4872
        %v4874 = vpop.f32.mrb[0].mxu0
        %v4875 = vadd.f32 %v4832, %v4874
        %v4876 = vpop.f32.mrb[0].mxu0
        %v4877 = vadd.f32 %v4834, %v4876
        %4878 = vdwg.mxu0
        %v4879 = vadd.f32 %v3587, %v4742
        %v4880 = vadd.f32 %v3589, %v4744
        %v4881 = vadd.f32 %v3716, %v4871
        %v4882 = vadd.f32 %v3718, %v4873
        %v4883 = vadd.f32 %v3591, %v4746
        %v4884 = vadd.f32 %v3593, %v4748
        %v4885 = vadd.f32 %v3720, %v4875
        %v4886 = vadd.f32 %v3722, %v4877
        %v4887 = vld [vmem:[#allocation9] sm:$0xf]
        %v4889 = vlaneseq
        %v4890 = vshrl.u32 %v4889, 7
        %v4891 = vsub.s32 0, %v4890
        %v4892 = vrot.slane %v4887, %v4891
        %v4893 = vlaneseq
        %v4894 = vshrl.u32 %v4893, 7
        %v4895 = vsub.s32 1, %v4894
        %v4896 = vrot.slane %v4887, %v4895
        %v4897 = vlaneseq
        %v4898 = vshrl.u32 %v4897, 7
        %v4899 = vsub.s32 2, %v4898
        %v4900 = vrot.slane %v4887, %v4899
        %v4901 = vlaneseq
        %v4902 = vshrl.u32 %v4901, 7
        %v4903 = vsub.s32 3, %v4902
        %v4904 = vrot.slane %v4887, %v4903
        %v4909 = vmul.f32 %v4879, %v4892
        %v4910 = vmul.f32 %v4880, %v4896
        %v4911 = vmul.f32 %v4881, %v4900
        %v4912 = vmul.f32 %v4882, %v4904
        %v4913 = vmul.f32 %v4883, %v4892
        %v4914 = vmul.f32 %v4884, %v4896
        %v4915 = vmul.f32 %v4885, %v4900
        %v4916 = vmul.f32 %v4886, %v4904
        %v4917 = vld [vmem:[#allocation10] sm:$0xf]
        %v4919 = vlaneseq
        %v4920 = vshrl.u32 %v4919, 7
        %v4921 = vsub.s32 0, %v4920
        %v4922 = vrot.slane %v4917, %v4921
        %v4923 = vlaneseq
        %v4924 = vshrl.u32 %v4923, 7
        %v4925 = vsub.s32 1, %v4924
        %v4926 = vrot.slane %v4917, %v4925
        %v4927 = vlaneseq
        %v4928 = vshrl.u32 %v4927, 7
        %v4929 = vsub.s32 2, %v4928
        %v4930 = vrot.slane %v4917, %v4929
        %v4931 = vlaneseq
        %v4932 = vshrl.u32 %v4931, 7
        %v4933 = vsub.s32 3, %v4932
        %v4934 = vrot.slane %v4917, %v4933
        %v4939 = vadd.f32 %v4909, %v4922
        %v4940 = vadd.f32 %v4910, %v4926
        %v4941 = vadd.f32 %v4911, %v4930
        %v4942 = vadd.f32 %v4912, %v4934
        %v4943 = vadd.f32 %v4913, %v4922
        %v4944 = vadd.f32 %v4914, %v4926
        %v4945 = vadd.f32 %v4915, %v4930
        %v4946 = vadd.f32 %v4916, %v4934
        %v4947 = vmax.f32 %v4939, 0.0
        %v4948 = vmax.f32 %v4940, 0.0
        %v4949 = vmax.f32 %v4941, 0.0
        %v4950 = vmax.f32 %v4942, 0.0
        %v4951 = vmax.f32 %v4943, 0.0
        %v4952 = vmax.f32 %v4944, 0.0
        %v4953 = vmax.f32 %v4945, 0.0
        %v4954 = vmax.f32 %v4946, 0.0
        %4955 = vst [vmem:[%s358] sm:$0xff] %v4947
        %4956 = vst [vmem:[%s358 + $0x8] sm:$0xff] %v4948
        %4957 = vst [vmem:[%s358 + $0x10] sm:$0xff] %v4949
        %4958 = vst [vmem:[%s358 + $0x18] sm:$0xff] %v4950
        %4959 = vst [vmem:[%s358 + $0x20] sm:$0xff] %v4951
        %4960 = vst [vmem:[%s358 + $0x28] sm:$0xff] %v4952
        %4961 = vst [vmem:[%s358 + $0x30] sm:$0xff] %v4953
        %4962 = vst [vmem:[%s358 + $0x38] sm:$0xff] %v4954
        %p4963 = scmp.lt.s32.totalorder %s22, 1
        %s4964 = scalar_select %p4963, %s22, 1
        %s4965 = smul.addr %s4964, 8
        %s4966 = smul.addr %s4965, 8
        %s4967 = scalar_lea.vmem %s7, %s4966
        // Predicated region
        $region73: #{conv_block_nested_forward.1} parent=47 // pred_check
          %p4968 = pneg %p192
        $region74: #{conv_block_nested_forward.1} parent=47 // pred_check_branch
          %4970 = sbr.rel (%p4968) target = $region76
        $region75: #{conv_block_nested_forward.1} parent=47 // pred_region
          _
        $region76: #{conv_block_nested_forward.1} parent=47 // pred_fallthru
          _
      $region48: #{conv_block_nested_forward.1} parent=5 // pred_fallthru
        _
      %p4971 = scmp.le.s32.totalorder 2, %s17
      // Predicated region
      $region77: #{conv_block_nested_forward.1} parent=5 // pred_check
        %p4972 = pneg %p4971
      $region78: #{conv_block_nested_forward.1} parent=5 // pred_check_branch
        %4974 = sbr.rel (%p4972) target = $region80
      $region79: #{conv_block_nested_forward.1} parent=5 // pred_region
        %s4975 = ssub.s32 %s17, 2
        // Predicated region
        $region81: #{conv_block_nested_forward.1} parent=79 // pred_check
          %p4976 = pneg %p198
        $region82: #{conv_block_nested_forward.1} parent=79 // pred_check_branch
          %4978 = sbr.rel (%p4976) target = $region84
        $region83: #{conv_block_nested_forward.1} parent=79 // pred_region
          %p4979 = scmp.lt.s32.totalorder %s23, 1
          %s4980 = scalar_select %p4979, %s23, 1
          %s4981 = smul.addr %s4980, 8
          %s4982 = smul.addr %s4981, 8
          %s4983 = scalar_lea.vmem %s7, %s4982
        $region84: #{conv_block_nested_forward.1} parent=79 // pred_fallthru
          _
      $region80: #{conv_block_nested_forward.1} parent=5 // pred_fallthru
        _
    $region6: #{conv_block_nested_forward.1} parent=1 // loop_footer
      %s21 = sadd.s32 1, %s17
    $region7: #{conv_block_nested_forward.1} parent=1 // loop_footer_branch
      %16 = sbr.rel target = $region3
    $region8: #{conv_block_nested_forward.1} parent=1 // loop_exit
      _
    %4984 = vsyncpa [#allocation3], 1
    %s4985 = scalar_lea.sflag [#allocation3], 1
    %4986 = vsyncpa %s4985, 1
    %4987 = vsyncpa [#allocation5], 1
    %4988 = vsyncpa [#allocation8], 1
    %4989 = vsyncpa [#allocation11], 1

</llo_original>
